<compile_context>
chip_gen: v6e
topology: v6e:2x2x1
jax: 0.10.0
libtpu: 0.0.40
codegen_flags: <defaults>
</compile_context>

<pallas_src>
import jax
import jax.numpy as jnp
from jax.experimental import pallas as pl
from jax.experimental.pallas import tpu as pltpu

# ----------------------------------------------------------------------------
# Pallas kernels
# ----------------------------------------------------------------------------


def _matmul_bias_kernel(w_ref, a_ref, b_ref, o_ref):
    # (Cout, K) @ (K, Mb) + (Cout, 1)  -> lane-dense (Cout, Mb) output.
    o_ref[...] = (jnp.dot(w_ref[...], a_ref[...],
                          preferred_element_type=jnp.float32) + b_ref[...])


def pallas_matmul_bias(wmat, amat, bias):
    """out = wmat @ amat + bias[:, None], output (Cout, M) with M lane-dense."""
    Cout, K = wmat.shape
    K2, M = amat.shape
    assert K == K2
    nm = 2 if (M % 256 == 0) else 1          # split pixels across TCs on v7x
    Mb = M // nm
    return pl.pallas_call(
        _matmul_bias_kernel,
        grid=(nm,),
        in_specs=[pl.BlockSpec((Cout, K), lambda i: (0, 0)),
                  pl.BlockSpec((K, Mb), lambda i: (0, i)),
                  pl.BlockSpec((Cout, 1), lambda i: (0, 0))],
        out_specs=pl.BlockSpec((Cout, Mb), lambda i: (0, i)),
        out_shape=jax.ShapeDtypeStruct((Cout, M), jnp.float32),
        compiler_params=pltpu.CompilerParams(
            dimension_semantics=("parallel",)),
    )(wmat.astype(jnp.bfloat16), amat.astype(jnp.bfloat16),
      bias.reshape(Cout, 1).astype(jnp.float32))


def _output_head_kernel(w1_ref, a_ref, b1_ref, w2_ref, b2_ref, o_ref):
    # 3x3 conv (as matmul over im2col patches) followed by 1x1 conv, fused.
    y = jnp.dot(w1_ref[...], a_ref[...],
                preferred_element_type=jnp.float32) + b1_ref[...]
    o_ref[...] = jnp.dot(w2_ref[...], y,
                         preferred_element_type=jnp.float32) + b2_ref[...]


def _make_cell_kernel(hidden_dim, n_links, B, Hh, Wh):
    """Fused TrajGRU cell: convs + flow norm + warp + proj + gates."""
    P_sp = Hh * Wh
    P = B * P_sp
    Hd = hidden_dim

    def kernel(w1_ref, a1_ref, b1_ref, w2_ref, a2_ref, b2_ref,
               wp_ref, bp_ref, base_ref, hprev_ref, out_ref):
        h_prev = hprev_ref[...]                                  # (Hd, P) f32

        # conv_input (kxk conv as matmul over pre-built patches) -> (3Hd, P)
        ic = jnp.dot(w1_ref[...], a1_ref[...],
                     preferred_element_type=jnp.float32) + b1_ref[...]

        # sub_net 5x5 conv -> flow field (2*connection, P)
        flow = jnp.dot(w2_ref[...], a2_ref[...],
                       preferred_element_type=jnp.float32) + b2_ref[...]
        fmin = jnp.min(flow)
        fmax = jnp.max(flow)
        flow = (flow - fmin) / (fmax - fmin)                     # as in reference
        flow = 2.0 * flow - 1.0

        base = base_ref[...]                                     # (1, P) int32
        s_iota = jax.lax.broadcasted_iota(jnp.int32, (P, P), 0)  # source index

        # Bilinear warp (grid_sample, align_corners=False, zeros padding).
        # Built as a block-diagonal (P, P) one-hot weight so the whole batch
        # is warped with ONE MXU matmul.
        warped_list = []
        for link in range(n_links):
            l = 2 * link
            gx = flow[l:l + 1, :]                                # (1, P)
            gy = flow[l + 1:l + 2, :]
            ix = ((gx + 1.0) * Wh - 1.0) * 0.5
            iy = ((gy + 1.0) * Hh - 1.0) * 0.5
            x0 = jnp.floor(ix)
            y0 = jnp.floor(iy)
            wsrc = jnp.zeros((P, P), jnp.float32)
            corners = (
                (x0,       y0,       (x0 + 1.0 - ix) * (y0 + 1.0 - iy)),
                (x0 + 1.0, y0,       (ix - x0) * (y0 + 1.0 - iy)),
                (x0,       y0 + 1.0, (x0 + 1.0 - ix) * (iy - y0)),
                (x0 + 1.0, y0 + 1.0, (ix - x0) * (iy - y0)),
            )
            for xc, yc, wgt in corners:
                inb = ((xc >= 0.0) & (xc <= Wh - 1.0) &
                       (yc >= 0.0) & (yc <= Hh - 1.0))           # (1, P) bool
                xi = jnp.clip(xc, 0.0, Wh - 1.0).astype(jnp.int32)
                yi = jnp.clip(yc, 0.0, Hh - 1.0).astype(jnp.int32)
                src = base + yi * Wh + xi                        # (1, P) int32
                hit = (s_iota == src) & inb                      # (P, P) bool
                wsrc = wsrc + jnp.where(hit, wgt, 0.0)
            warped_list.append(jnp.dot(h_prev, wsrc,
                                       preferred_element_type=jnp.float32))
        if n_links == 1:
            warped_all = warped_list[0]
        else:
            warped_all = jnp.concatenate(warped_list, axis=0)    # (Hd*L, P)

        # Stacked 1x1 trajectory projections (sum over links folded into K).
        traj = jnp.dot(wp_ref[...], warped_all,
                       preferred_element_type=jnp.float32) + bp_ref[...]

        # GRU gate math (f32 on VPU, sigmoid reciprocal on EUP).
        x_z = ic[0:Hd, :]
        x_r = ic[Hd:2 * Hd, :]
        x_h = ic[2 * Hd:3 * Hd, :]
        h_z = traj[0:Hd, :]
        h_r = traj[Hd:2 * Hd, :]
        h_h = traj[2 * Hd:3 * Hd, :]
        z = pl.reciprocal(1.0 + jnp.exp(-(x_z + h_z)), approx=True)
        r = pl.reciprocal(1.0 + jnp.exp(-(x_r + h_r)), approx=True)
        cand = x_h + r * h_h
        h = jnp.where(cand >= 0.0, cand, 0.2 * cand)             # leaky_relu 0.2
        out_ref[...] = (1.0 - z) * h + z * h_prev

    return kernel


# ----------------------------------------------------------------------------
# Wrapper glue: im2col / padding / pooling / deconv dilation (plain JAX)
# ----------------------------------------------------------------------------

def _im2col(x, kh, kw, padding):
    """x: (B, C, H, W) -> patches (C*kh*kw, B*Ho*Wo); columns ordered (b,ho,wo)."""
    # TODO(synk): patch extraction / zero-padding stays as XLA glue; only the
    # matmuls and gate math run inside Pallas kernels.
    B, C, H, W = x.shape
    (pt, pb), (p_l, p_r) = padding
    xp = jnp.pad(x, ((0, 0), (0, 0), (pt, pb), (p_l, p_r)))
    Ho = H + pt + pb - kh + 1
    Wo = W + p_l + p_r - kw + 1
    cols = []
    for i in range(kh):
        for j in range(kw):
            cols.append(xp[:, :, i:i + Ho, j:j + Wo])            # (B, C, Ho, Wo)
    patches = jnp.stack(cols, axis=2)                            # (B, C, k*k, Ho, Wo)
    patches = patches.reshape(B, C * kh * kw, Ho * Wo)
    patches = jnp.transpose(patches, (1, 0, 2)).reshape(C * kh * kw, B * Ho * Wo)
    return patches, Ho, Wo


def conv2d(x, w, b, padding):
    """Stride-1 NCHW correlation via lane-dense Pallas matmul (bias fused)."""
    B, Cin, H, W = x.shape
    Cout, _, kh, kw = w.shape
    patches, Ho, Wo = _im2col(x, kh, kw, padding)
    out = pallas_matmul_bias(w.reshape(Cout, Cin * kh * kw), patches, b)
    return jnp.transpose(out.reshape(Cout, B, Ho, Wo), (1, 0, 2, 3))


def conv_transpose2d(x, w, b, stride, padding, output_padding):
    """PyTorch ConvTranspose2d. w is (Cin, Cout, kh, kw)."""
    Cin, Cout, kh, kw = w.shape
    B, _, H, W = x.shape
    s, p = stride, padding
    oph, opw = output_padding
    xd = jnp.zeros((B, Cin, (H - 1) * s + 1, (W - 1) * s + 1), x.dtype)
    xd = xd.at[:, :, ::s, ::s].set(x)
    w_eq = jnp.transpose(w[:, :, ::-1, ::-1], (1, 0, 2, 3))      # flipped, OIHW
    pad = ((kh - 1 - p, kh - 1 - p + oph), (kw - 1 - p, kw - 1 - p + opw))
    return conv2d(xd, w_eq, b, pad)


def maxpool2x2(x):
    # TODO(synk): MaxPool2d(2,2) kept as plain-JAX reshape-max glue (not hot path).
    B, C, H, W = x.shape
    return jnp.max(x.reshape(B, C, H // 2, 2, W // 2, 2), axis=(3, 5))


def output_head(x, p1, p2):
    """Decoder output convs (3x3 same-pad conv + 1x1 conv) fused into one kernel."""
    B, Cin, H, W = x.shape
    C1 = p1['w'].shape[0]
    k = p1['w'].shape[2]
    pad = k // 2
    Cout = p2['w'].shape[0]
    patches, Ho, Wo = _im2col(x, k, k, ((pad, pad), (pad, pad)))
    K1, M = patches.shape
    nm = 2 if (M % 256 == 0) else 1
    Mb = M // nm
    out = pl.pallas_call(
        _output_head_kernel,
        grid=(nm,),
        in_specs=[pl.BlockSpec((C1, K1), lambda i: (0, 0)),
                  pl.BlockSpec((K1, Mb), lambda i: (0, i)),
                  pl.BlockSpec((C1, 1), lambda i: (0, 0)),
                  pl.BlockSpec((Cout, C1), lambda i: (0, 0)),
                  pl.BlockSpec((Cout, 1), lambda i: (0, 0))],
        out_specs=pl.BlockSpec((Cout, Mb), lambda i: (0, i)),
        out_shape=jax.ShapeDtypeStruct((Cout, M), jnp.float32),
        compiler_params=pltpu.CompilerParams(
            dimension_semantics=("parallel",)),
    )(p1['w'].reshape(C1, K1).astype(jnp.bfloat16),
      patches.astype(jnp.bfloat16),
      p1['b'].reshape(C1, 1).astype(jnp.float32),
      p2['w'].reshape(Cout, C1).astype(jnp.float32),
      p2['b'].reshape(Cout, 1).astype(jnp.float32))
    return jnp.transpose(out.reshape(Cout, B, Ho, Wo), (1, 0, 2, 3))


# ----------------------------------------------------------------------------
# Fused TrajGRU cell
# ----------------------------------------------------------------------------

def traj_gru_cell(cell, x, h_prev):
    B, Cin, Hh, Wh = x.shape
    Hd = cell['hidden_dim']
    k = cell['kernel_size']
    conn = cell['connection']
    n_links = len(range(0, conn, 2))
    pad = k // 2
    P_sp = Hh * Wh
    P = B * P_sp

    # im2col patch matrices (wrapper glue) feeding the fused cell kernel.
    a1, _, _ = _im2col(x, k, k, ((pad, pad), (pad, pad)))        # (Cin*k*k, P)
    combined = jnp.concatenate([x, h_prev], axis=1)
    a2, _, _ = _im2col(combined, 5, 5, ((2, 2), (2, 2)))         # ((Cin+Hd)*25, P)

    w1 = cell['conv_input']['w'].reshape(3 * Hd, Cin * k * k)
    b1 = cell['conv_input']['b'].reshape(3 * Hd, 1)
    w2 = cell['sub_net']['w'].reshape(2 * conn, (Cin + Hd) * 25)
    b2 = cell['sub_net']['b'].reshape(2 * conn, 1)
    wp = jnp.concatenate([cell['proj'][l]['w'].reshape(3 * Hd, Hd)
                          for l in range(n_links)], axis=1)      # (3Hd, Hd*L)
    bp = sum(cell['proj'][l]['b'] for l in range(n_links)).reshape(3 * Hd, 1)
    hp2d = jnp.transpose(h_prev, (1, 0, 2, 3)).reshape(Hd, P)
    base = ((jnp.arange(P, dtype=jnp.int32) // P_sp) * P_sp).reshape(1, P)

    args = (w1.astype(jnp.bfloat16), a1.astype(jnp.bfloat16), b1,
            w2.astype(jnp.bfloat16), a2.astype(jnp.bfloat16), b2,
            wp, bp, base, hp2d)
    in_specs = [pl.BlockSpec(a.shape, lambda i: (0, 0)) for a in args]

    kernel = _make_cell_kernel(Hd, n_links, B, Hh, Wh)
    out = pl.pallas_call(
        kernel,
        grid=(1,),
        in_specs=in_specs,
        out_specs=pl.BlockSpec((Hd, P), lambda i: (0, 0)),
        out_shape=jax.ShapeDtypeStruct((Hd, P), jnp.float32),
    )(*args)
    return jnp.transpose(out.reshape(Hd, B, Hh, Wh), (1, 0, 2, 3))


# ---------------------- configuration (small, synthetic) ---------------------

ENCODER_COUNT = 2     # forward indexes encoder[t]; must equal seq_len T
DECODER_COUNT = 2

ENCODER_CONF = dict(
    input_size=(16, 16), input_dim=1, num_layers=2,
    conv_dims=[8, 16], conv_kernel=3, conv_stride=1,
    pool_kernel=2, pool_stride=2, pool_padding=0,
    gru_dims=[8, 16], gru_kernels=[3, 3],
    connection=2, bias=True)

DECODER_CONF = dict(
    input_dim=16, num_layers=2,
    conv_dims=[8, 8], conv_kernel=3, conv_stride=2, conv_padding=1,
    gru_dims=[16, 8], gru_kernels=[3, 3],
    connection=2, bias=True, output_dim=1)


def enc_gru_sizes(conf):
    sizes, cur = [], conf['input_size']
    f, s, p = conf['pool_kernel'], conf['pool_stride'], conf['pool_padding']
    for _ in range(conf['num_layers']):
        cur = ((cur[0] - f + 2 * p) // s + 1, (cur[1] - f + 2 * p) // s + 1)
        sizes.append(cur)
    return sizes


ENC_GRU_SIZES = enc_gru_sizes(ENCODER_CONF)                      # [(8,8), (4,4)]
ENCODER_LAYER_SIZES = [ENCODER_CONF['input_size']] + ENC_GRU_SIZES


def cal_output_pad(encoder_layer_sizes):
    pads = [(int(not s[0] % 2), int(not s[1] % 2)) for s in encoder_layer_sizes]
    pads = pads[:-1]
    return pads[::-1]


DEC_OUTPUT_PADS = cal_output_pad(ENCODER_LAYER_SIZES)            # [(1,1), (1,1)]


# ------------------------- deterministic parameter init ----------------------

def init_conv(key, cout, cin, k):
    k1, k2 = jax.random.split(key)
    w = jax.random.normal(k1, (cout, cin, k, k), jnp.float32) * (
        (cin * k * k) ** -0.5)
    b = jax.random.normal(k2, (cout,), jnp.float32) * 0.01
    return dict(w=w, b=b)


def init_cell(key, input_dim, hidden_dim, kernel_size, connection):
    ks = jax.random.split(key, 2 + connection)
    return dict(
        conv_input=init_conv(ks[0], 3 * hidden_dim, input_dim, kernel_size),
        sub_net=init_conv(ks[1], 2 * connection, input_dim + hidden_dim, 5),
        proj=[init_conv(ks[2 + l], 3 * hidden_dim, hidden_dim, 1)
              for l in range(connection)],
        hidden_dim=hidden_dim, kernel_size=kernel_size, connection=connection)


def build_params(key):
    keys = iter(jax.random.split(key, 128))
    nk = lambda: next(keys)
    ec, dc = ENCODER_CONF, DECODER_CONF
    encoders = []
    for _ in range(ENCODER_COUNT):
        layers = []
        for i in range(ec['num_layers']):
            cin = ec['input_dim'] if i == 0 else ec['gru_dims'][i - 1]
            conv = init_conv(nk(), ec['conv_dims'][i], cin, ec['conv_kernel'])
            cell = init_cell(nk(), ec['conv_dims'][i], ec['gru_dims'][i],
                             ec['gru_kernels'][i], ec['connection'])
            layers.append(dict(conv=conv, cell=cell))
        encoders.append(dict(layers=layers))
    decoders = []
    for _ in range(DECODER_COUNT):
        layers = []
        for i in range(dc['num_layers']):
            cin = dc['input_dim'] if i == 0 else dc['conv_dims'][i - 1]
            cell = init_cell(nk(), cin, dc['gru_dims'][i],
                             dc['gru_kernels'][i], dc['connection'])
            k1, k2 = jax.random.split(nk())
            wdt = jax.random.normal(
                k1, (dc['gru_dims'][i], dc['conv_dims'][i],
                     dc['conv_kernel'], dc['conv_kernel']), jnp.float32) * 0.1
            bdt = jax.random.normal(k2, (dc['conv_dims'][i],), jnp.float32) * 0.01
            layers.append(dict(cell=cell, deconv=dict(w=wdt, b=bdt)))
        out1 = init_conv(nk(), dc['conv_dims'][-1], dc['conv_dims'][-1],
                         dc['conv_kernel'])
        out2 = init_conv(nk(), dc['output_dim'], dc['conv_dims'][-1], 1)
        decoders.append(dict(layers=layers, out1=out1, out2=out2))
    return dict(encoders=encoders, decoders=decoders)


def init_hidden(batch_size):
    return [jnp.zeros((batch_size, ENCODER_CONF['gru_dims'][i],
                       ENC_GRU_SIZES[i][0], ENC_GRU_SIZES[i][1]), jnp.float32)
            for i in range(ENCODER_CONF['num_layers'])]


# ------------------------------ block forwards --------------------------------

def encoder_forward(enc_params, x, hidden_states):
    ec = ENCODER_CONF
    assert ec['conv_stride'] == 1   # stride-1 conv only (padding = k//2)
    pad = ec['conv_kernel'] // 2
    layer_state_list = []
    cur = x
    for i, layer in enumerate(enc_params['layers']):
        conv_out = conv2d(cur, layer['conv']['w'], layer['conv']['b'],
                          ((pad, pad), (pad, pad)))
        pooled = maxpool2x2(conv_out)
        cur = traj_gru_cell(layer['cell'], pooled, hidden_states[i])
        layer_state_list.append(cur)
    return layer_state_list


def decoder_forward(dec_params, x, hidden_states):
    dc = DECODER_CONF
    layer_state_list = []
    len_states = len(hidden_states) - 1
    cur = x
    for i, layer in enumerate(dec_params['layers']):
        state = traj_gru_cell(layer['cell'], cur, hidden_states[len_states - i])
        cur = conv_transpose2d(state, layer['deconv']['w'], layer['deconv']['b'],
                               stride=dc['conv_stride'],
                               padding=dc['conv_padding'],
                               output_padding=DEC_OUTPUT_PADS[i])
        layer_state_list.insert(0, state)
    y = output_head(cur, dec_params['out1'], dec_params['out2'])
    return y, layer_state_list


def traj_gru_forward(params, input_tensor, hidden_states):
    """input_tensor: (B, T, D, M, N); hidden_states: list of (B, Ci, Hi, Wi)."""
    T = input_tensor.shape[1]
    cur_states = hidden_states
    for t in range(T):
        # NOTE: matches the reference: one encoder block per timestep (T == encoder_count).
        cur_states = encoder_forward(params['encoders'][t],
                                     input_tensor[:, t], cur_states)
    decoder_input = jnp.zeros_like(hidden_states[-1])
    block_outputs = []
    for dec in params['decoders']:
        out, cur_states = decoder_forward(dec, decoder_input, cur_states)
        block_outputs.append(out)
    final_output = jnp.stack(block_outputs, axis=1)              # (B, T', D', M, N)
    return final_output, cur_states
    # TODO(synk): training utilities (fit / Adam / grad clipping / losses) are
    # not part of the forward pass and are intentionally not implemented.


# ----------------------------------------------------------------------------

if __name__ == "__main__":
    key = jax.random.PRNGKey(0)
    pkey, xkey = jax.random.split(key)
    params = build_params(pkey)

    B = 2
    T = ENCODER_COUNT
    D = ENCODER_CONF['input_dim']
    M, N = ENCODER_CONF['input_size']
    x = jax.random.normal(xkey, (B, T, D, M, N), jnp.float32)
    hidden = init_hidden(B)

    fwd = jax.jit(lambda xx, hh: traj_gru_forward(params, xx, hh))
    final_output, states = fwd(x, hidden)
    jax.block_until_ready(final_output)
    jax.block_until_ready(states)

    assert final_output.shape == (B, DECODER_COUNT, DECODER_CONF['output_dim'], M, N)
    assert states[0].shape == (B, ENCODER_CONF['gru_dims'][0], *ENC_GRU_SIZES[0])
    assert states[1].shape == (B, ENCODER_CONF['gru_dims'][1], *ENC_GRU_SIZES[1])
    assert bool(jnp.all(jnp.isfinite(final_output)))
    print("KERNEL_OK")
</pallas_src>

<mosaic_0001>
module attributes {stable_mosaic.version = 11 : i64} {
  func.func @_matmul_bias_kernel(%arg0: i32, %arg1: memref<8x9xbf16, #tpu.memory_space<vmem>>, %arg2: memref<9x256xbf16, #tpu.memory_space<vmem>>, %arg3: memref<8x1xf32, #tpu.memory_space<vmem>>, %arg4: memref<8x256xf32, #tpu.memory_space<vmem>>) attributes {dimension_semantics = [#tpu.dimension_semantics<parallel>], iteration_bounds = array<i64: 2>, scalar_prefetch = 0 : i64, scratch_operands = 0 : i64, tpu.core_type = #tpu.core_type<tc>, window_params = [{pipeline_mode = #tpu.pipeline_mode<synchronous>, transform_indices = @transform_0, window_bounds = array<i64: 8, 9>}, {transform_indices = @transform_1, window_bounds = array<i64: 9, 256>}, {pipeline_mode = #tpu.pipeline_mode<synchronous>, transform_indices = @transform_2, window_bounds = array<i64: 8, 1>}, {transform_indices = @transform_3, window_bounds = array<i64: 8, 256>}]} {
    %c0 = arith.constant 0 : index
    %c0_0 = arith.constant 0 : index
    %0 = vector.load %arg1[%c0, %c0_0] : memref<8x9xbf16, #tpu.memory_space<vmem>>, vector<8x9xbf16>
    %c0_1 = arith.constant 0 : index
    %c0_2 = arith.constant 0 : index
    %1 = vector.load %arg2[%c0_1, %c0_2] : memref<9x256xbf16, #tpu.memory_space<vmem>>, vector<9x256xbf16>
    %cst = arith.constant dense<0.000000e+00> : vector<8x256xf32>
    %2 = tpu.matmul %0, %1, %cst {dimension_numbers = #tpu.dot_dimension_numbers<[1], [0], [0], [1], [0, 0, 1, 1], [], []>} : vector<8x9xbf16>, vector<9x256xbf16>, vector<8x256xf32> -> vector<8x256xf32>
    %c0_3 = arith.constant 0 : index
    %c0_4 = arith.constant 0 : index
    %3 = vector.load %arg3[%c0_3, %c0_4] : memref<8x1xf32, #tpu.memory_space<vmem>>, vector<8x1xf32>
    %4 = vector.broadcast %3 : vector<8x1xf32> to vector<8x256xf32>
    %5 = arith.addf %2, %4 : vector<8x256xf32>
    %c0_5 = arith.constant 0 : index
    %c0_6 = arith.constant 0 : index
    %6 = vector.load %arg4[%c0_5, %c0_6] : memref<8x256xf32, #tpu.memory_space<vmem>>, vector<8x256xf32>
    tpu.vector_store %arg4[%c0_5, %c0_6], %5 {strides = array<i32>} : memref<8x256xf32, #tpu.memory_space<vmem>>, vector<8x256xf32>,
    return
  }
  func.func @transform_0(%arg0: i32) -> (i32, i32) {
    %c0_i32 = arith.constant 0 : i32
    %c0_i32_0 = arith.constant 0 : i32
    %c0_i32_1 = arith.constant 0 : i32
    return %c0_i32, %c0_i32_0 : i32, i32
  }
  func.func @transform_1(%arg0: i32) -> (i32, i32) {
    %c0_i32 = arith.constant 0 : i32
    %c0_i32_0 = arith.constant 0 : i32
    return %c0_i32, %arg0 : i32, i32
  }
  func.func @transform_2(%arg0: i32) -> (i32, i32) {
    %c0_i32 = arith.constant 0 : i32
    %c0_i32_0 = arith.constant 0 : i32
    %c0_i32_1 = arith.constant 0 : i32
    return %c0_i32, %c0_i32_0 : i32, i32
  }
  func.func @transform_3(%arg0: i32) -> (i32, i32) {
    %c0_i32 = arith.constant 0 : i32
    %c0_i32_0 = arith.constant 0 : i32
    return %c0_i32, %arg0 : i32, i32
  }
}

module attributes {stable_mosaic.version = 11 : i64} {
  func.func @kernel(%arg0: i32, %arg1: memref<24x72xbf16, #tpu.memory_space<vmem>>, %arg2: memref<72x128xbf16, #tpu.memory_space<vmem>>, %arg3: memref<24x1xf32, #tpu.memory_space<vmem>>, %arg4: memref<4x400xbf16, #tpu.memory_space<vmem>>, %arg5: memref<400x128xbf16, #tpu.memory_space<vmem>>, %arg6: memref<4x1xf32, #tpu.memory_space<vmem>>, %arg7: memref<24x8xf32, #tpu.memory_space<vmem>>, %arg8: memref<24x1xf32, #tpu.memory_space<vmem>>, %arg9: memref<1x128xi32, #tpu.memory_space<vmem>>, %arg10: memref<8x128xf32, #tpu.memory_space<vmem>>, %arg11: memref<8x128xf32, #tpu.memory_space<vmem>>) attributes {dimension_semantics = [#tpu.dimension_semantics<arbitrary>], iteration_bounds = array<i64: 1>, scalar_prefetch = 0 : i64, scratch_operands = 0 : i64, tpu.core_type = #tpu.core_type<tc>, window_params = [{pipeline_mode = #tpu.pipeline_mode<synchronous>, transform_indices = @transform_0, window_bounds = array<i64: 24, 72>}, {pipeline_mode = #tpu.pipeline_mode<synchronous>, transform_indices = @transform_1, window_bounds = array<i64: 72, 128>}, {pipeline_mode = #tpu.pipeline_mode<synchronous>, transform_indices = @transform_2, window_bounds = array<i64: 24, 1>}, {pipeline_mode = #tpu.pipeline_mode<synchronous>, transform_indices = @transform_3, window_bounds = array<i64: 4, 400>}, {pipeline_mode = #tpu.pipeline_mode<synchronous>, transform_indices = @transform_4, window_bounds = array<i64: 400, 128>}, {pipeline_mode = #tpu.pipeline_mode<synchronous>, transform_indices = @transform_5, window_bounds = array<i64: 4, 1>}, {pipeline_mode = #tpu.pipeline_mode<synchronous>, transform_indices = @transform_6, window_bounds = array<i64: 24, 8>}, {pipeline_mode = #tpu.pipeline_mode<synchronous>, transform_indices = @transform_7, window_bounds = array<i64: 24, 1>}, {pipeline_mode = #tpu.pipeline_mode<synchronous>, transform_indices = @transform_8, window_bounds = array<i64: 1, 128>}, {pipeline_mode = #tpu.pipeline_mode<synchronous>, transform_indices = @transform_9, window_bounds = array<i64: 8, 128>}, {pipeline_mode = #tpu.pipeline_mode<synchronous>, transform_indices = @transform_10, window_bounds = array<i64: 8, 128>}]} {
    %c0 = arith.constant 0 : index
    %c0_0 = arith.constant 0 : index
    %0 = vector.load %arg10[%c0, %c0_0] : memref<8x128xf32, #tpu.memory_space<vmem>>, vector<8x128xf32>
    %c0_1 = arith.constant 0 : index
    %c0_2 = arith.constant 0 : index
    %1 = vector.load %arg1[%c0_1, %c0_2] : memref<24x72xbf16, #tpu.memory_space<vmem>>, vector<24x72xbf16>
    %c0_3 = arith.constant 0 : index
    %c0_4 = arith.constant 0 : index
    %2 = vector.load %arg2[%c0_3, %c0_4] : memref<72x128xbf16, #tpu.memory_space<vmem>>, vector<72x128xbf16>
    %cst = arith.constant dense<0.000000e+00> : vector<24x128xf32>
    %3 = tpu.matmul %1, %2, %cst {dimension_numbers = #tpu.dot_dimension_numbers<[1], [0], [0], [1], [0, 0, 1, 1], [], []>} : vector<24x72xbf16>, vector<72x128xbf16>, vector<24x128xf32> -> vector<24x128xf32>
    %c0_5 = arith.constant 0 : index
    %c0_6 = arith.constant 0 : index
    %4 = vector.load %arg3[%c0_5, %c0_6] : memref<24x1xf32, #tpu.memory_space<vmem>>, vector<24x1xf32>
    %5 = vector.broadcast %4 : vector<24x1xf32> to vector<24x128xf32>
    %6 = arith.addf %3, %5 : vector<24x128xf32>
    %c0_7 = arith.constant 0 : index
    %c0_8 = arith.constant 0 : index
    %7 = vector.load %arg4[%c0_7, %c0_8] : memref<4x400xbf16, #tpu.memory_space<vmem>>, vector<4x400xbf16>
    %c0_9 = arith.constant 0 : index
    %c0_10 = arith.constant 0 : index
    %8 = vector.load %arg5[%c0_9, %c0_10] : memref<400x128xbf16, #tpu.memory_space<vmem>>, vector<400x128xbf16>
    %cst_11 = arith.constant dense<0.000000e+00> : vector<4x128xf32>
    %9 = tpu.matmul %7, %8, %cst_11 {dimension_numbers = #tpu.dot_dimension_numbers<[1], [0], [0], [1], [0, 0, 1, 1], [], []>} : vector<4x400xbf16>, vector<400x128xbf16>, vector<4x128xf32> -> vector<4x128xf32>
    %c0_12 = arith.constant 0 : index
    %c0_13 = arith.constant 0 : index
    %10 = vector.load %arg6[%c0_12, %c0_13] : memref<4x1xf32, #tpu.memory_space<vmem>>, vector<4x1xf32>
    %11 = vector.broadcast %10 : vector<4x1xf32> to vector<4x128xf32>
    %12 = arith.addf %9, %11 : vector<4x128xf32>
    %13 = vector.shape_cast %12 : vector<4x128xf32> to vector<1x4x128xf32>
    %cst_14 = arith.constant dense<0x7F800000> : vector<1xf32>
    %14 = vector.multi_reduction <minimumf>, %13, %cst_14 [1, 2] : vector<1x4x128xf32> to vector<1xf32>
    %15 = vector.shape_cast %14 : vector<1xf32> to vector<1x1x1xf32>
    %16 = vector.extract %15[0, 0, 0] : f32 from vector<1x1x1xf32>
    %17 = vector.shape_cast %12 : vector<4x128xf32> to vector<1x4x128xf32>
    %cst_15 = arith.constant dense<0xFF800000> : vector<1xf32>
    %18 = vector.multi_reduction <maximumf>, %17, %cst_15 [1, 2] : vector<1x4x128xf32> to vector<1xf32>
    %19 = vector.shape_cast %18 : vector<1xf32> to vector<1x1x1xf32>
    %20 = vector.extract %19[0, 0, 0] : f32 from vector<1x1x1xf32>
    %21 = vector.broadcast %16 : f32 to vector<4x128xf32>
    %22 = arith.subf %12, %21 : vector<4x128xf32>
    %23 = arith.subf %20, %16 : f32
    %24 = vector.broadcast %23 : f32 to vector<4x128xf32>
    %25 = arith.divf %22, %24 : vector<4x128xf32>
    %cst_16 = arith.constant 2.000000e+00 : f32
    %26 = vector.broadcast %cst_16 : f32 to vector<4x128xf32>
    %27 = arith.mulf %26, %25 : vector<4x128xf32>
    %cst_17 = arith.constant 1.000000e+00 : f32
    %28 = vector.broadcast %cst_17 : f32 to vector<4x128xf32>
    %29 = arith.subf %27, %28 : vector<4x128xf32>
    %c0_18 = arith.constant 0 : index
    %c0_19 = arith.constant 0 : index
    %30 = vector.load %arg9[%c0_18, %c0_19] : memref<1x128xi32, #tpu.memory_space<vmem>>, vector<1x128xi32>
    %31 = tpu.iota {dimensions = array<i32: 0>} : vector<128x128xi32>
    %32 = vector.extract_strided_slice %29 {offsets = [0, 0], sizes = [1, 128], strides = [1, 1]} : vector<4x128xf32> to vector<1x128xf32>
    %33 = vector.extract_strided_slice %29 {offsets = [1, 0], sizes = [1, 128], strides = [1, 1]} : vector<4x128xf32> to vector<1x128xf32>
    %cst_20 = arith.constant 1.000000e+00 : f32
    %34 = vector.broadcast %cst_20 : f32 to vector<1x128xf32>
    %35 = arith.addf %32, %34 : vector<1x128xf32>
    %cst_21 = arith.constant 8.000000e+00 : f32
    %36 = vector.broadcast %cst_21 : f32 to vector<1x128xf32>
    %37 = arith.mulf %35, %36 : vector<1x128xf32>
    %cst_22 = arith.constant 1.000000e+00 : f32
    %38 = vector.broadcast %cst_22 : f32 to vector<1x128xf32>
    %39 = arith.subf %37, %38 : vector<1x128xf32>
    %cst_23 = arith.constant 5.000000e-01 : f32
    %40 = vector.broadcast %cst_23 : f32 to vector<1x128xf32>
    %41 = arith.mulf %39, %40 : vector<1x128xf32>
    %cst_24 = arith.constant 1.000000e+00 : f32
    %42 = vector.broadcast %cst_24 : f32 to vector<1x128xf32>
    %43 = arith.addf %33, %42 : vector<1x128xf32>
    %cst_25 = arith.constant 8.000000e+00 : f32
    %44 = vector.broadcast %cst_25 : f32 to vector<1x128xf32>
    %45 = arith.mulf %43, %44 : vector<1x128xf32>
    %cst_26 = arith.constant 1.000000e+00 : f32
    %46 = vector.broadcast %cst_26 : f32 to vector<1x128xf32>
    %47 = arith.subf %45, %46 : vector<1x128xf32>
    %cst_27 = arith.constant 5.000000e-01 : f32
    %48 = vector.broadcast %cst_27 : f32 to vector<1x128xf32>
    %49 = arith.mulf %47, %48 : vector<1x128xf32>
    %50 = math.floor %41 : vector<1x128xf32>
    %51 = math.floor %49 : vector<1x128xf32>
    %cst_28 = arith.constant 0.000000e+00 : f32
    %52 = vector.broadcast %cst_28 : f32 to vector<128x128xf32>
    %cst_29 = arith.constant 1.000000e+00 : f32
    %53 = vector.broadcast %cst_29 : f32 to vector<1x128xf32>
    %54 = arith.addf %50, %53 : vector<1x128xf32>
    %55 = arith.subf %54, %41 : vector<1x128xf32>
    %cst_30 = arith.constant 1.000000e+00 : f32
    %56 = vector.broadcast %cst_30 : f32 to vector<1x128xf32>
    %57 = arith.addf %51, %56 : vector<1x128xf32>
    %58 = arith.subf %57, %49 : vector<1x128xf32>
    %59 = arith.mulf %55, %58 : vector<1x128xf32>
    %cst_31 = arith.constant 1.000000e+00 : f32
    %60 = vector.broadcast %cst_31 : f32 to vector<1x128xf32>
    %61 = arith.addf %50, %60 : vector<1x128xf32>
    %62 = arith.subf %41, %50 : vector<1x128xf32>
    %cst_32 = arith.constant 1.000000e+00 : f32
    %63 = vector.broadcast %cst_32 : f32 to vector<1x128xf32>
    %64 = arith.addf %51, %63 : vector<1x128xf32>
    %65 = arith.subf %64, %49 : vector<1x128xf32>
    %66 = arith.mulf %62, %65 : vector<1x128xf32>
    %cst_33 = arith.constant 1.000000e+00 : f32
    %67 = vector.broadcast %cst_33 : f32 to vector<1x128xf32>
    %68 = arith.addf %51, %67 : vector<1x128xf32>
    %cst_34 = arith.constant 1.000000e+00 : f32
    %69 = vector.broadcast %cst_34 : f32 to vector<1x128xf32>
    %70 = arith.addf %50, %69 : vector<1x128xf32>
    %71 = arith.subf %70, %41 : vector<1x128xf32>
    %72 = arith.subf %49, %51 : vector<1x128xf32>
    %73 = arith.mulf %71, %72 : vector<1x128xf32>
    %cst_35 = arith.constant 1.000000e+00 : f32
    %74 = vector.broadcast %cst_35 : f32 to vector<1x128xf32>
    %75 = arith.addf %50, %74 : vector<1x128xf32>
    %cst_36 = arith.constant 1.000000e+00 : f32
    %76 = vector.broadcast %cst_36 : f32 to vector<1x128xf32>
    %77 = arith.addf %51, %76 : vector<1x128xf32>
    %78 = arith.subf %41, %50 : vector<1x128xf32>
    %79 = arith.subf %49, %51 : vector<1x128xf32>
    %80 = arith.mulf %78, %79 : vector<1x128xf32>
    %cst_37 = arith.constant 0.000000e+00 : f32
    %81 = vector.broadcast %cst_37 : f32 to vector<1x128xf32>
    %82 = arith.cmpf oge, %50, %81 : vector<1x128xf32>
    %cst_38 = arith.constant 7.000000e+00 : f32
    %83 = vector.broadcast %cst_38 : f32 to vector<1x128xf32>
    %84 = arith.cmpf ole, %50, %83 : vector<1x128xf32>
    %85 = arith.andi %82, %84 : vector<1x128xi1>
    %cst_39 = arith.constant 0.000000e+00 : f32
    %86 = vector.broadcast %cst_39 : f32 to vector<1x128xf32>
    %87 = arith.cmpf oge, %51, %86 : vector<1x128xf32>
    %88 = arith.andi %85, %87 : vector<1x128xi1>
    %cst_40 = arith.constant 7.000000e+00 : f32
    %89 = vector.broadcast %cst_40 : f32 to vector<1x128xf32>
    %90 = arith.cmpf ole, %51, %89 : vector<1x128xf32>
    %91 = arith.andi %88, %90 : vector<1x128xi1>
    %cst_41 = arith.constant 0.000000e+00 : f32
    %cst_42 = arith.constant 7.000000e+00 : f32
    %92 = vector.broadcast %cst_41 : f32 to vector<1x128xf32>
    %93 = arith.maximumf %92, %50 : vector<1x128xf32>
    %94 = vector.broadcast %cst_42 : f32 to vector<1x128xf32>
    %95 = arith.minimumf %94, %93 : vector<1x128xf32>
    %96 = arith.fptosi %95 : vector<1x128xf32> to vector<1x128xi32>
    %cst_43 = arith.constant 0.000000e+00 : f32
    %cst_44 = arith.constant 7.000000e+00 : f32
    %97 = vector.broadcast %cst_43 : f32 to vector<1x128xf32>
    %98 = arith.maximumf %97, %51 : vector<1x128xf32>
    %99 = vector.broadcast %cst_44 : f32 to vector<1x128xf32>
    %100 = arith.minimumf %99, %98 : vector<1x128xf32>
    %101 = arith.fptosi %100 : vector<1x128xf32> to vector<1x128xi32>
    %c8_i32 = arith.constant 8 : i32
    %102 = vector.broadcast %c8_i32 : i32 to vector<1x128xi32>
    %103 = arith.muli %101, %102 : vector<1x128xi32>
    %104 = arith.addi %30, %103 : vector<1x128xi32>
    %105 = arith.addi %104, %96 : vector<1x128xi32>
    %106 = vector.broadcast %105 : vector<1x128xi32> to vector<128x128xi32>
    %107 = arith.cmpi eq, %31, %106 : vector<128x128xi32>
    %108 = vector.broadcast %91 : vector<1x128xi1> to vector<128x128xi1>
    %109 = arith.andi %107, %108 : vector<128x128xi1>
    %cst_45 = arith.constant 0.000000e+00 : f32
    %110 = vector.shape_cast %59 : vector<1x128xf32> to vector<1x128xf32>
    %111 = vector.broadcast %110 : vector<1x128xf32> to vector<128x128xf32>
    %112 = vector.broadcast %cst_45 : f32 to vector<128x128xf32>
    %113 = arith.select %109, %111, %112 : vector<128x128xi1>, vector<128x128xf32>
    %114 = arith.addf %52, %113 : vector<128x128xf32>
    %cst_46 = arith.constant 0.000000e+00 : f32
    %115 = vector.broadcast %cst_46 : f32 to vector<1x128xf32>
    %116 = arith.cmpf oge, %61, %115 : vector<1x128xf32>
    %cst_47 = arith.constant 7.000000e+00 : f32
    %117 = vector.broadcast %cst_47 : f32 to vector<1x128xf32>
    %118 = arith.cmpf ole, %61, %117 : vector<1x128xf32>
    %119 = arith.andi %116, %118 : vector<1x128xi1>
    %cst_48 = arith.constant 0.000000e+00 : f32
    %120 = vector.broadcast %cst_48 : f32 to vector<1x128xf32>
    %121 = arith.cmpf oge, %51, %120 : vector<1x128xf32>
    %122 = arith.andi %119, %121 : vector<1x128xi1>
    %cst_49 = arith.constant 7.000000e+00 : f32
    %123 = vector.broadcast %cst_49 : f32 to vector<1x128xf32>
    %124 = arith.cmpf ole, %51, %123 : vector<1x128xf32>
    %125 = arith.andi %122, %124 : vector<1x128xi1>
    %cst_50 = arith.constant 0.000000e+00 : f32
    %cst_51 = arith.constant 7.000000e+00 : f32
    %126 = vector.broadcast %cst_50 : f32 to vector<1x128xf32>
    %127 = arith.maximumf %126, %61 : vector<1x128xf32>
    %128 = vector.broadcast %cst_51 : f32 to vector<1x128xf32>
    %129 = arith.minimumf %128, %127 : vector<1x128xf32>
    %130 = arith.fptosi %129 : vector<1x128xf32> to vector<1x128xi32>
    %cst_52 = arith.constant 0.000000e+00 : f32
    %cst_53 = arith.constant 7.000000e+00 : f32
    %131 = vector.broadcast %cst_52 : f32 to vector<1x128xf32>
    %132 = arith.maximumf %131, %51 : vector<1x128xf32>
    %133 = vector.broadcast %cst_53 : f32 to vector<1x128xf32>
    %134 = arith.minimumf %133, %132 : vector<1x128xf32>
    %135 = arith.fptosi %134 : vector<1x128xf32> to vector<1x128xi32>
    %c8_i32_54 = arith.constant 8 : i32
    %136 = vector.broadcast %c8_i32_54 : i32 to vector<1x128xi32>
    %137 = arith.muli %135, %136 : vector<1x128xi32>
    %138 = arith.addi %30, %137 : vector<1x128xi32>
    %139 = arith.addi %138, %130 : vector<1x128xi32>
    %140 = vector.broadcast %139 : vector<1x128xi32> to vector<128x128xi32>
    %141 = arith.cmpi eq, %31, %140 : vector<128x128xi32>
    %142 = vector.broadcast %125 : vector<1x128xi1> to vector<128x128xi1>
    %143 = arith.andi %141, %142 : vector<128x128xi1>
    %cst_55 = arith.constant 0.000000e+00 : f32
    %144 = vector.shape_cast %66 : vector<1x128xf32> to vector<1x128xf32>
    %145 = vector.broadcast %144 : vector<1x128xf32> to vector<128x128xf32>
    %146 = vector.broadcast %cst_55 : f32 to vector<128x128xf32>
    %147 = arith.select %143, %145, %146 : vector<128x128xi1>, vector<128x128xf32>
    %148 = arith.addf %114, %147 : vector<128x128xf32>
    %cst_56 = arith.constant 0.000000e+00 : f32
    %149 = vector.broadcast %cst_56 : f32 to vector<1x128xf32>
    %150 = arith.cmpf oge, %50, %149 : vector<1x128xf32>
    %cst_57 = arith.constant 7.000000e+00 : f32
    %151 = vector.broadcast %cst_57 : f32 to vector<1x128xf32>
    %152 = arith.cmpf ole, %50, %151 : vector<1x128xf32>
    %153 = arith.andi %150, %152 : vector<1x128xi1>
    %cst_58 = arith.constant 0.000000e+00 : f32
    %154 = vector.broadcast %cst_58 : f32 to vector<1x128xf32>
    %155 = arith.cmpf oge, %68, %154 : vector<1x128xf32>
    %156 = arith.andi %153, %155 : vector<1x128xi1>
    %cst_59 = arith.constant 7.000000e+00 : f32
    %157 = vector.broadcast %cst_59 : f32 to vector<1x128xf32>
    %158 = arith.cmpf ole, %68, %157 : vector<1x128xf32>
    %159 = arith.andi %156, %158 : vector<1x128xi1>
    %cst_60 = arith.constant 0.000000e+00 : f32
    %cst_61 = arith.constant 7.000000e+00 : f32
    %160 = vector.broadcast %cst_60 : f32 to vector<1x128xf32>
    %161 = arith.maximumf %160, %50 : vector<1x128xf32>
    %162 = vector.broadcast %cst_61 : f32 to vector<1x128xf32>
    %163 = arith.minimumf %162, %161 : vector<1x128xf32>
    %164 = arith.fptosi %163 : vector<1x128xf32> to vector<1x128xi32>
    %cst_62 = arith.constant 0.000000e+00 : f32
    %cst_63 = arith.constant 7.000000e+00 : f32
    %165 = vector.broadcast %cst_62 : f32 to vector<1x128xf32>
    %166 = arith.maximumf %165, %68 : vector<1x128xf32>
    %167 = vector.broadcast %cst_63 : f32 to vector<1x128xf32>
    %168 = arith.minimumf %167, %166 : vector<1x128xf32>
    %169 = arith.fptosi %168 : vector<1x128xf32> to vector<1x128xi32>
    %c8_i32_64 = arith.constant 8 : i32
    %170 = vector.broadcast %c8_i32_64 : i32 to vector<1x128xi32>
    %171 = arith.muli %169, %170 : vector<1x128xi32>
    %172 = arith.addi %30, %171 : vector<1x128xi32>
    %173 = arith.addi %172, %164 : vector<1x128xi32>
    %174 = vector.broadcast %173 : vector<1x128xi32> to vector<128x128xi32>
    %175 = arith.cmpi eq, %31, %174 : vector<128x128xi32>
    %176 = vector.broadcast %159 : vector<1x128xi1> to vector<128x128xi1>
    %177 = arith.andi %175, %176 : vector<128x128xi1>
    %cst_65 = arith.constant 0.000000e+00 : f32
    %178 = vector.shape_cast %73 : vector<1x128xf32> to vector<1x128xf32>
    %179 = vector.broadcast %178 : vector<1x128xf32> to vector<128x128xf32>
    %180 = vector.broadcast %cst_65 : f32 to vector<128x128xf32>
    %181 = arith.select %177, %179, %180 : vector<128x128xi1>, vector<128x128xf32>
    %182 = arith.addf %148, %181 : vector<128x128xf32>
    %cst_66 = arith.constant 0.000000e+00 : f32
    %183 = vector.broadcast %cst_66 : f32 to vector<1x128xf32>
    %184 = arith.cmpf oge, %75, %183 : vector<1x128xf32>
    %cst_67 = arith.constant 7.000000e+00 : f32
    %185 = vector.broadcast %cst_67 : f32 to vector<1x128xf32>
    %186 = arith.cmpf ole, %75, %185 : vector<1x128xf32>
    %187 = arith.andi %184, %186 : vector<1x128xi1>
    %cst_68 = arith.constant 0.000000e+00 : f32
    %188 = vector.broadcast %cst_68 : f32 to vector<1x128xf32>
    %189 = arith.cmpf oge, %77, %188 : vector<1x128xf32>
    %190 = arith.andi %187, %189 : vector<1x128xi1>
    %cst_69 = arith.constant 7.000000e+00 : f32
    %191 = vector.broadcast %cst_69 : f32 to vector<1x128xf32>
    %192 = arith.cmpf ole, %77, %191 : vector<1x128xf32>
    %193 = arith.andi %190, %192 : vector<1x128xi1>
    %cst_70 = arith.constant 0.000000e+00 : f32
    %cst_71 = arith.constant 7.000000e+00 : f32
    %194 = vector.broadcast %cst_70 : f32 to vector<1x128xf32>
    %195 = arith.maximumf %194, %75 : vector<1x128xf32>
    %196 = vector.broadcast %cst_71 : f32 to vector<1x128xf32>
    %197 = arith.minimumf %196, %195 : vector<1x128xf32>
    %198 = arith.fptosi %197 : vector<1x128xf32> to vector<1x128xi32>
    %cst_72 = arith.constant 0.000000e+00 : f32
    %cst_73 = arith.constant 7.000000e+00 : f32
    %199 = vector.broadcast %cst_72 : f32 to vector<1x128xf32>
    %200 = arith.maximumf %199, %77 : vector<1x128xf32>
    %201 = vector.broadcast %cst_73 : f32 to vector<1x128xf32>
    %202 = arith.minimumf %201, %200 : vector<1x128xf32>
    %203 = arith.fptosi %202 : vector<1x128xf32> to vector<1x128xi32>
    %c8_i32_74 = arith.constant 8 : i32
    %204 = vector.broadcast %c8_i32_74 : i32 to vector<1x128xi32>
    %205 = arith.muli %203, %204 : vector<1x128xi32>
    %206 = arith.addi %30, %205 : vector<1x128xi32>
    %207 = arith.addi %206, %198 : vector<1x128xi32>
    %208 = vector.broadcast %207 : vector<1x128xi32> to vector<128x128xi32>
    %209 = arith.cmpi eq, %31, %208 : vector<128x128xi32>
    %210 = vector.broadcast %193 : vector<1x128xi1> to vector<128x128xi1>
    %211 = arith.andi %209, %210 : vector<128x128xi1>
    %cst_75 = arith.constant 0.000000e+00 : f32
    %212 = vector.shape_cast %80 : vector<1x128xf32> to vector<1x128xf32>
    %213 = vector.broadcast %212 : vector<1x128xf32> to vector<128x128xf32>
    %214 = vector.broadcast %cst_75 : f32 to vector<128x128xf32>
    %215 = arith.select %211, %213, %214 : vector<128x128xi1>, vector<128x128xf32>
    %216 = arith.addf %182, %215 : vector<128x128xf32>
    %cst_76 = arith.constant dense<0.000000e+00> : vector<8x128xf32>
    %217 = tpu.matmul %0, %216, %cst_76 {dimension_numbers = #tpu.dot_dimension_numbers<[1], [0], [0], [1], [0, 0, 1, 1], [], []>} : vector<8x128xf32>, vector<128x128xf32>, vector<8x128xf32> -> vector<8x128xf32>
    %c0_77 = arith.constant 0 : index
    %c0_78 = arith.constant 0 : index
    %218 = vector.load %arg7[%c0_77, %c0_78] : memref<24x8xf32, #tpu.memory_space<vmem>>, vector<24x8xf32>
    %cst_79 = arith.constant dense<0.000000e+00> : vector<24x128xf32>
    %219 = tpu.matmul %218, %217, %cst_79 {dimension_numbers = #tpu.dot_dimension_numbers<[1], [0], [0], [1], [0, 0, 1, 1], [], []>} : vector<24x8xf32>, vector<8x128xf32>, vector<24x128xf32> -> vector<24x128xf32>
    %c0_80 = arith.constant 0 : index
    %c0_81 = arith.constant 0 : index
    %220 = vector.load %arg8[%c0_80, %c0_81] : memref<24x1xf32, #tpu.memory_space<vmem>>, vector<24x1xf32>
    %221 = vector.broadcast %220 : vector<24x1xf32> to vector<24x128xf32>
    %222 = arith.addf %219, %221 : vector<24x128xf32>
    %223 = vector.extract_strided_slice %6 {offsets = [0, 0], sizes = [8, 128], strides = [1, 1]} : vector<24x128xf32> to vector<8x128xf32>
    %224 = vector.extract_strided_slice %6 {offsets = [8, 0], sizes = [8, 128], strides = [1, 1]} : vector<24x128xf32> to vector<8x128xf32>
    %225 = vector.extract_strided_slice %6 {offsets = [16, 0], sizes = [8, 128], strides = [1, 1]} : vector<24x128xf32> to vector<8x128xf32>
    %226 = vector.extract_strided_slice %222 {offsets = [0, 0], sizes = [8, 128], strides = [1, 1]} : vector<24x128xf32> to vector<8x128xf32>
    %227 = vector.extract_strided_slice %222 {offsets = [8, 0], sizes = [8, 128], strides = [1, 1]} : vector<24x128xf32> to vector<8x128xf32>
    %228 = vector.extract_strided_slice %222 {offsets = [16, 0], sizes = [8, 128], strides = [1, 1]} : vector<24x128xf32> to vector<8x128xf32>
    %229 = arith.addf %223, %226 : vector<8x128xf32>
    %cst_82 = arith.constant 0.000000e+00 : f32
    %230 = vector.broadcast %cst_82 : f32 to vector<8x128xf32>
    %231 = arith.subf %230, %229 : vector<8x128xf32>
    %232 = math.exp %231 : vector<8x128xf32>
    %cst_83 = arith.constant 1.000000e+00 : f32
    %233 = vector.broadcast %cst_83 : f32 to vector<8x128xf32>
    %234 = arith.addf %233, %232 : vector<8x128xf32>
    %235 = tpu.reciprocal %234 {approx = true} : vector<8x128xf32> -> vector<8x128xf32>
    %236 = arith.addf %224, %227 : vector<8x128xf32>
    %cst_84 = arith.constant 0.000000e+00 : f32
    %237 = vector.broadcast %cst_84 : f32 to vector<8x128xf32>
    %238 = arith.subf %237, %236 : vector<8x128xf32>
    %239 = math.exp %238 : vector<8x128xf32>
    %cst_85 = arith.constant 1.000000e+00 : f32
    %240 = vector.broadcast %cst_85 : f32 to vector<8x128xf32>
    %241 = arith.addf %240, %239 : vector<8x128xf32>
    %242 = tpu.reciprocal %241 {approx = true} : vector<8x128xf32> -> vector<8x128xf32>
    %243 = arith.mulf %242, %228 : vector<8x128xf32>
    %244 = arith.addf %225, %243 : vector<8x128xf32>
    %cst_86 = arith.constant 0.000000e+00 : f32
    %245 = vector.broadcast %cst_86 : f32 to vector<8x128xf32>
    %246 = arith.cmpf oge, %244, %245 : vector<8x128xf32>
    %cst_87 = arith.constant 2.000000e-01 : f32
    %247 = vector.broadcast %cst_87 : f32 to vector<8x128xf32>
    %248 = arith.mulf %247, %244 : vector<8x128xf32>
    %249 = arith.select %246, %244, %248 : vector<8x128xi1>, vector<8x128xf32>
    %cst_88 = arith.constant 1.000000e+00 : f32
    %250 = vector.broadcast %cst_88 : f32 to vector<8x128xf32>
    %251 = arith.subf %250, %235 : vector<8x128xf32>
    %252 = arith.mulf %251, %249 : vector<8x128xf32>
    %253 = arith.mulf %235, %0 : vector<8x128xf32>
    %254 = arith.addf %252, %253 : vector<8x128xf32>
    %c0_89 = arith.constant 0 : index
    %c0_90 = arith.constant 0 : index
    %255 = vector.load %arg11[%c0_89, %c0_90] : memref<8x128xf32, #tpu.memory_space<vmem>>, vector<8x128xf32>
    tpu.vector_store %arg11[%c0_89, %c0_90], %254 {strides = array<i32>} : memref<8x128xf32, #tpu.memory_space<vmem>>, vector<8x128xf32>,
    return
  }
  func.func @transform_0(%arg0: i32) -> (i32, i32) {
    %c0_i32 = arith.constant 0 : i32
    %c0_i32_0 = arith.constant 0 : i32
    %c0_i32_1 = arith.constant 0 : i32
    return %c0_i32, %c0_i32_0 : i32, i32
  }
  func.func @transform_1(%arg0: i32) -> (i32, i32) {
    %c0_i32 = arith.constant 0 : i32
    %c0_i32_0 = arith.constant 0 : i32
    %c0_i32_1 = arith.constant 0 : i32
    return %c0_i32, %c0_i32_0 : i32, i32
  }
  func.func @transform_2(%arg0: i32) -> (i32, i32) {
    %c0_i32 = arith.constant 0 : i32
    %c0_i32_0 = arith.constant 0 : i32
    %c0_i32_1 = arith.constant 0 : i32
    return %c0_i32, %c0_i32_0 : i32, i32
  }
  func.func @transform_3(%arg0: i32) -> (i32, i32) {
    %c0_i32 = arith.constant 0 : i32
    %c0_i32_0 = arith.constant 0 : i32
    %c0_i32_1 = arith.constant 0 : i32
    return %c0_i32, %c0_i32_0 : i32, i32
  }
  func.func @transform_4(%arg0: i32) -> (i32, i32) {
    %c0_i32 = arith.constant 0 : i32
    %c0_i32_0 = arith.constant 0 : i32
    %c0_i32_1 = arith.constant 0 : i32
    return %c0_i32, %c0_i32_0 : i32, i32
  }
  func.func @transform_5(%arg0: i32) -> (i32, i32) {
    %c0_i32 = arith.constant 0 : i32
    %c0_i32_0 = arith.constant 0 : i32
    %c0_i32_1 = arith.constant 0 : i32
    return %c0_i32, %c0_i32_0 : i32, i32
  }
  func.func @transform_6(%arg0: i32) -> (i32, i32) {
    %c0_i32 = arith.constant 0 : i32
    %c0_i32_0 = arith.constant 0 : i32
    %c0_i32_1 = arith.constant 0 : i32
    return %c0_i32, %c0_i32_0 : i32, i32
  }
  func.func @transform_7(%arg0: i32) -> (i32, i32) {
    %c0_i32 = arith.constant 0 : i32
    %c0_i32_0 = arith.constant 0 : i32
    %c0_i32_1 = arith.constant 0 : i32
    return %c0_i32, %c0_i32_0 : i32, i32
  }
  func.func @transform_8(%arg0: i32) -> (i32, i32) {
    %c0_i32 = arith.constant 0 : i32
    %c0_i32_0 = arith.constant 0 : i32
    %c0_i32_1 = arith.constant 0 : i32
    return %c0_i32, %c0_i32_0 : i32, i32
  }
  func.func @transform_9(%arg0: i32) -> (i32, i32) {
    %c0_i32 = arith.constant 0 : i32
    %c0_i32_0 = arith.constant 0 : i32
    %c0_i32_1 = arith.constant 0 : i32
    return %c0_i32, %c0_i32_0 : i32, i32
  }
  func.func @transform_10(%arg0: i32) -> (i32, i32) {
    %c0_i32 = arith.constant 0 : i32
    %c0_i32_0 = arith.constant 0 : i32
    %c0_i32_1 = arith.constant 0 : i32
    return %c0_i32, %c0_i32_0 : i32, i32
  }
}

module attributes {stable_mosaic.version = 11 : i64} {
  func.func @_matmul_bias_kernel(%arg0: i32, %arg1: memref<16x72xbf16, #tpu.memory_space<vmem>>, %arg2: memref<72x128xbf16, #tpu.memory_space<vmem>>, %arg3: memref<16x1xf32, #tpu.memory_space<vmem>>, %arg4: memref<16x128xf32, #tpu.memory_space<vmem>>) attributes {dimension_semantics = [#tpu.dimension_semantics<parallel>], iteration_bounds = array<i64: 1>, scalar_prefetch = 0 : i64, scratch_operands = 0 : i64, tpu.core_type = #tpu.core_type<tc>, window_params = [{pipeline_mode = #tpu.pipeline_mode<synchronous>, transform_indices = @transform_0, window_bounds = array<i64: 16, 72>}, {transform_indices = @transform_1, window_bounds = array<i64: 72, 128>}, {pipeline_mode = #tpu.pipeline_mode<synchronous>, transform_indices = @transform_2, window_bounds = array<i64: 16, 1>}, {transform_indices = @transform_3, window_bounds = array<i64: 16, 128>}]} {
    %c0 = arith.constant 0 : index
    %c0_0 = arith.constant 0 : index
    %0 = vector.load %arg1[%c0, %c0_0] : memref<16x72xbf16, #tpu.memory_space<vmem>>, vector<16x72xbf16>
    %c0_1 = arith.constant 0 : index
    %c0_2 = arith.constant 0 : index
    %1 = vector.load %arg2[%c0_1, %c0_2] : memref<72x128xbf16, #tpu.memory_space<vmem>>, vector<72x128xbf16>
    %cst = arith.constant dense<0.000000e+00> : vector<16x128xf32>
    %2 = tpu.matmul %0, %1, %cst {dimension_numbers = #tpu.dot_dimension_numbers<[1], [0], [0], [1], [0, 0, 1, 1], [], []>} : vector<16x72xbf16>, vector<72x128xbf16>, vector<16x128xf32> -> vector<16x128xf32>
    %c0_3 = arith.constant 0 : index
    %c0_4 = arith.constant 0 : index
    %3 = vector.load %arg3[%c0_3, %c0_4] : memref<16x1xf32, #tpu.memory_space<vmem>>, vector<16x1xf32>
    %4 = vector.broadcast %3 : vector<16x1xf32> to vector<16x128xf32>
    %5 = arith.addf %2, %4 : vector<16x128xf32>
    %c0_5 = arith.constant 0 : index
    %c0_6 = arith.constant 0 : index
    %6 = vector.load %arg4[%c0_5, %c0_6] : memref<16x128xf32, #tpu.memory_space<vmem>>, vector<16x128xf32>
    tpu.vector_store %arg4[%c0_5, %c0_6], %5 {strides = array<i32>} : memref<16x128xf32, #tpu.memory_space<vmem>>, vector<16x128xf32>,
    return
  }
  func.func @transform_0(%arg0: i32) -> (i32, i32) {
    %c0_i32 = arith.constant 0 : i32
    %c0_i32_0 = arith.constant 0 : i32
    %c0_i32_1 = arith.constant 0 : i32
    return %c0_i32, %c0_i32_0 : i32, i32
  }
  func.func @transform_1(%arg0: i32) -> (i32, i32) {
    %c0_i32 = arith.constant 0 : i32
    %c0_i32_0 = arith.constant 0 : i32
    return %c0_i32, %arg0 : i32, i32
  }
  func.func @transform_2(%arg0: i32) -> (i32, i32) {
    %c0_i32 = arith.constant 0 : i32
    %c0_i32_0 = arith.constant 0 : i32
    %c0_i32_1 = arith.constant 0 : i32
    return %c0_i32, %c0_i32_0 : i32, i32
  }
  func.func @transform_3(%arg0: i32) -> (i32, i32) {
    %c0_i32 = arith.constant 0 : i32
    %c0_i32_0 = arith.constant 0 : i32
    return %c0_i32, %arg0 : i32, i32
  }
}

module attributes {stable_mosaic.version = 11 : i64} {
  func.func @kernel(%arg0: i32, %arg1: memref<48x144xbf16, #tpu.memory_space<vmem>>, %arg2: memref<144x32xbf16, #tpu.memory_space<vmem>>, %arg3: memref<48x1xf32, #tpu.memory_space<vmem>>, %arg4: memref<4x800xbf16, #tpu.memory_space<vmem>>, %arg5: memref<800x32xbf16, #tpu.memory_space<vmem>>, %arg6: memref<4x1xf32, #tpu.memory_space<vmem>>, %arg7: memref<48x16xf32, #tpu.memory_space<vmem>>, %arg8: memref<48x1xf32, #tpu.memory_space<vmem>>, %arg9: memref<1x32xi32, #tpu.memory_space<vmem>>, %arg10: memref<16x32xf32, #tpu.memory_space<vmem>>, %arg11: memref<16x32xf32, #tpu.memory_space<vmem>>) attributes {dimension_semantics = [#tpu.dimension_semantics<arbitrary>], iteration_bounds = array<i64: 1>, scalar_prefetch = 0 : i64, scratch_operands = 0 : i64, tpu.core_type = #tpu.core_type<tc>, window_params = [{pipeline_mode = #tpu.pipeline_mode<synchronous>, transform_indices = @transform_0, window_bounds = array<i64: 48, 144>}, {pipeline_mode = #tpu.pipeline_mode<synchronous>, transform_indices = @transform_1, window_bounds = array<i64: 144, 32>}, {pipeline_mode = #tpu.pipeline_mode<synchronous>, transform_indices = @transform_2, window_bounds = array<i64: 48, 1>}, {pipeline_mode = #tpu.pipeline_mode<synchronous>, transform_indices = @transform_3, window_bounds = array<i64: 4, 800>}, {pipeline_mode = #tpu.pipeline_mode<synchronous>, transform_indices = @transform_4, window_bounds = array<i64: 800, 32>}, {pipeline_mode = #tpu.pipeline_mode<synchronous>, transform_indices = @transform_5, window_bounds = array<i64: 4, 1>}, {pipeline_mode = #tpu.pipeline_mode<synchronous>, transform_indices = @transform_6, window_bounds = array<i64: 48, 16>}, {pipeline_mode = #tpu.pipeline_mode<synchronous>, transform_indices = @transform_7, window_bounds = array<i64: 48, 1>}, {pipeline_mode = #tpu.pipeline_mode<synchronous>, transform_indices = @transform_8, window_bounds = array<i64: 1, 32>}, {pipeline_mode = #tpu.pipeline_mode<synchronous>, transform_indices = @transform_9, window_bounds = array<i64: 16, 32>}, {pipeline_mode = #tpu.pipeline_mode<synchronous>, transform_indices = @transform_10, window_bounds = array<i64: 16, 32>}]} {
    %c0 = arith.constant 0 : index
    %c0_0 = arith.constant 0 : index
    %0 = vector.load %arg10[%c0, %c0_0] : memref<16x32xf32, #tpu.memory_space<vmem>>, vector<16x32xf32>
    %c0_1 = arith.constant 0 : index
    %c0_2 = arith.constant 0 : index
    %1 = vector.load %arg1[%c0_1, %c0_2] : memref<48x144xbf16, #tpu.memory_space<vmem>>, vector<48x144xbf16>
    %c0_3 = arith.constant 0 : index
    %c0_4 = arith.constant 0 : index
    %2 = vector.load %arg2[%c0_3, %c0_4] : memref<144x32xbf16, #tpu.memory_space<vmem>>, vector<144x32xbf16>
    %cst = arith.constant dense<0.000000e+00> : vector<48x32xf32>
    %3 = tpu.matmul %1, %2, %cst {dimension_numbers = #tpu.dot_dimension_numbers<[1], [0], [0], [1], [0, 0, 1, 1], [], []>} : vector<48x144xbf16>, vector<144x32xbf16>, vector<48x32xf32> -> vector<48x32xf32>
    %c0_5 = arith.constant 0 : index
    %c0_6 = arith.constant 0 : index
    %4 = vector.load %arg3[%c0_5, %c0_6] : memref<48x1xf32, #tpu.memory_space<vmem>>, vector<48x1xf32>
    %5 = vector.broadcast %4 : vector<48x1xf32> to vector<48x32xf32>
    %6 = arith.addf %3, %5 : vector<48x32xf32>
    %c0_7 = arith.constant 0 : index
    %c0_8 = arith.constant 0 : index
    %7 = vector.load %arg4[%c0_7, %c0_8] : memref<4x800xbf16, #tpu.memory_space<vmem>>, vector<4x800xbf16>
    %c0_9 = arith.constant 0 : index
    %c0_10 = arith.constant 0 : index
    %8 = vector.load %arg5[%c0_9, %c0_10] : memref<800x32xbf16, #tpu.memory_space<vmem>>, vector<800x32xbf16>
    %cst_11 = arith.constant dense<0.000000e+00> : vector<4x32xf32>
    %9 = tpu.matmul %7, %8, %cst_11 {dimension_numbers = #tpu.dot_dimension_numbers<[1], [0], [0], [1], [0, 0, 1, 1], [], []>} : vector<4x800xbf16>, vector<800x32xbf16>, vector<4x32xf32> -> vector<4x32xf32>
    %c0_12 = arith.constant 0 : index
    %c0_13 = arith.constant 0 : index
    %10 = vector.load %arg6[%c0_12, %c0_13] : memref<4x1xf32, #tpu.memory_space<vmem>>, vector<4x1xf32>
    %11 = vector.broadcast %10 : vector<4x1xf32> to vector<4x32xf32>
    %12 = arith.addf %9, %11 : vector<4x32xf32>
    %13 = vector.shape_cast %12 : vector<4x32xf32> to vector<1x4x32xf32>
    %cst_14 = arith.constant dense<0x7F800000> : vector<1xf32>
    %14 = vector.multi_reduction <minimumf>, %13, %cst_14 [1, 2] : vector<1x4x32xf32> to vector<1xf32>
    %15 = vector.shape_cast %14 : vector<1xf32> to vector<1x1x1xf32>
    %16 = vector.extract %15[0, 0, 0] : f32 from vector<1x1x1xf32>
    %17 = vector.shape_cast %12 : vector<4x32xf32> to vector<1x4x32xf32>
    %cst_15 = arith.constant dense<0xFF800000> : vector<1xf32>
    %18 = vector.multi_reduction <maximumf>, %17, %cst_15 [1, 2] : vector<1x4x32xf32> to vector<1xf32>
    %19 = vector.shape_cast %18 : vector<1xf32> to vector<1x1x1xf32>
    %20 = vector.extract %19[0, 0, 0] : f32 from vector<1x1x1xf32>
    %21 = vector.broadcast %16 : f32 to vector<4x32xf32>
    %22 = arith.subf %12, %21 : vector<4x32xf32>
    %23 = arith.subf %20, %16 : f32
    %24 = vector.broadcast %23 : f32 to vector<4x32xf32>
    %25 = arith.divf %22, %24 : vector<4x32xf32>
    %cst_16 = arith.constant 2.000000e+00 : f32
    %26 = vector.broadcast %cst_16 : f32 to vector<4x32xf32>
    %27 = arith.mulf %26, %25 : vector<4x32xf32>
    %cst_17 = arith.constant 1.000000e+00 : f32
    %28 = vector.broadcast %cst_17 : f32 to vector<4x32xf32>
    %29 = arith.subf %27, %28 : vector<4x32xf32>
    %c0_18 = arith.constant 0 : index
    %c0_19 = arith.constant 0 : index
    %30 = vector.load %arg9[%c0_18, %c0_19] : memref<1x32xi32, #tpu.memory_space<vmem>>, vector<1x32xi32>
    %31 = tpu.iota {dimensions = array<i32: 0>} : vector<32x32xi32>
    %32 = vector.extract_strided_slice %29 {offsets = [0, 0], sizes = [1, 32], strides = [1, 1]} : vector<4x32xf32> to vector<1x32xf32>
    %33 = vector.extract_strided_slice %29 {offsets = [1, 0], sizes = [1, 32], strides = [1, 1]} : vector<4x32xf32> to vector<1x32xf32>
    %cst_20 = arith.constant 1.000000e+00 : f32
    %34 = vector.broadcast %cst_20 : f32 to vector<1x32xf32>
    %35 = arith.addf %32, %34 : vector<1x32xf32>
    %cst_21 = arith.constant 4.000000e+00 : f32
    %36 = vector.broadcast %cst_21 : f32 to vector<1x32xf32>
    %37 = arith.mulf %35, %36 : vector<1x32xf32>
    %cst_22 = arith.constant 1.000000e+00 : f32
    %38 = vector.broadcast %cst_22 : f32 to vector<1x32xf32>
    %39 = arith.subf %37, %38 : vector<1x32xf32>
    %cst_23 = arith.constant 5.000000e-01 : f32
    %40 = vector.broadcast %cst_23 : f32 to vector<1x32xf32>
    %41 = arith.mulf %39, %40 : vector<1x32xf32>
    %cst_24 = arith.constant 1.000000e+00 : f32
    %42 = vector.broadcast %cst_24 : f32 to vector<1x32xf32>
    %43 = arith.addf %33, %42 : vector<1x32xf32>
    %cst_25 = arith.constant 4.000000e+00 : f32
    %44 = vector.broadcast %cst_25 : f32 to vector<1x32xf32>
    %45 = arith.mulf %43, %44 : vector<1x32xf32>
    %cst_26 = arith.constant 1.000000e+00 : f32
    %46 = vector.broadcast %cst_26 : f32 to vector<1x32xf32>
    %47 = arith.subf %45, %46 : vector<1x32xf32>
    %cst_27 = arith.constant 5.000000e-01 : f32
    %48 = vector.broadcast %cst_27 : f32 to vector<1x32xf32>
    %49 = arith.mulf %47, %48 : vector<1x32xf32>
    %50 = math.floor %41 : vector<1x32xf32>
    %51 = math.floor %49 : vector<1x32xf32>
    %cst_28 = arith.constant 0.000000e+00 : f32
    %52 = vector.broadcast %cst_28 : f32 to vector<32x32xf32>
    %cst_29 = arith.constant 1.000000e+00 : f32
    %53 = vector.broadcast %cst_29 : f32 to vector<1x32xf32>
    %54 = arith.addf %50, %53 : vector<1x32xf32>
    %55 = arith.subf %54, %41 : vector<1x32xf32>
    %cst_30 = arith.constant 1.000000e+00 : f32
    %56 = vector.broadcast %cst_30 : f32 to vector<1x32xf32>
    %57 = arith.addf %51, %56 : vector<1x32xf32>
    %58 = arith.subf %57, %49 : vector<1x32xf32>
    %59 = arith.mulf %55, %58 : vector<1x32xf32>
    %cst_31 = arith.constant 1.000000e+00 : f32
    %60 = vector.broadcast %cst_31 : f32 to vector<1x32xf32>
    %61 = arith.addf %50, %60 : vector<1x32xf32>
    %62 = arith.subf %41, %50 : vector<1x32xf32>
    %cst_32 = arith.constant 1.000000e+00 : f32
    %63 = vector.broadcast %cst_32 : f32 to vector<1x32xf32>
    %64 = arith.addf %51, %63 : vector<1x32xf32>
    %65 = arith.subf %64, %49 : vector<1x32xf32>
    %66 = arith.mulf %62, %65 : vector<1x32xf32>
    %cst_33 = arith.constant 1.000000e+00 : f32
    %67 = vector.broadcast %cst_33 : f32 to vector<1x32xf32>
    %68 = arith.addf %51, %67 : vector<1x32xf32>
    %cst_34 = arith.constant 1.000000e+00 : f32
    %69 = vector.broadcast %cst_34 : f32 to vector<1x32xf32>
    %70 = arith.addf %50, %69 : vector<1x32xf32>
    %71 = arith.subf %70, %41 : vector<1x32xf32>
    %72 = arith.subf %49, %51 : vector<1x32xf32>
    %73 = arith.mulf %71, %72 : vector<1x32xf32>
    %cst_35 = arith.constant 1.000000e+00 : f32
    %74 = vector.broadcast %cst_35 : f32 to vector<1x32xf32>
    %75 = arith.addf %50, %74 : vector<1x32xf32>
    %cst_36 = arith.constant 1.000000e+00 : f32
    %76 = vector.broadcast %cst_36 : f32 to vector<1x32xf32>
    %77 = arith.addf %51, %76 : vector<1x32xf32>
    %78 = arith.subf %41, %50 : vector<1x32xf32>
    %79 = arith.subf %49, %51 : vector<1x32xf32>
    %80 = arith.mulf %78, %79 : vector<1x32xf32>
    %cst_37 = arith.constant 0.000000e+00 : f32
    %81 = vector.broadcast %cst_37 : f32 to vector<1x32xf32>
    %82 = arith.cmpf oge, %50, %81 : vector<1x32xf32>
    %cst_38 = arith.constant 3.000000e+00 : f32
    %83 = vector.broadcast %cst_38 : f32 to vector<1x32xf32>
    %84 = arith.cmpf ole, %50, %83 : vector<1x32xf32>
    %85 = arith.andi %82, %84 : vector<1x32xi1>
    %cst_39 = arith.constant 0.000000e+00 : f32
    %86 = vector.broadcast %cst_39 : f32 to vector<1x32xf32>
    %87 = arith.cmpf oge, %51, %86 : vector<1x32xf32>
    %88 = arith.andi %85, %87 : vector<1x32xi1>
    %cst_40 = arith.constant 3.000000e+00 : f32
    %89 = vector.broadcast %cst_40 : f32 to vector<1x32xf32>
    %90 = arith.cmpf ole, %51, %89 : vector<1x32xf32>
    %91 = arith.andi %88, %90 : vector<1x32xi1>
    %cst_41 = arith.constant 0.000000e+00 : f32
    %cst_42 = arith.constant 3.000000e+00 : f32
    %92 = vector.broadcast %cst_41 : f32 to vector<1x32xf32>
    %93 = arith.maximumf %92, %50 : vector<1x32xf32>
    %94 = vector.broadcast %cst_42 : f32 to vector<1x32xf32>
    %95 = arith.minimumf %94, %93 : vector<1x32xf32>
    %96 = arith.fptosi %95 : vector<1x32xf32> to vector<1x32xi32>
    %cst_43 = arith.constant 0.000000e+00 : f32
    %cst_44 = arith.constant 3.000000e+00 : f32
    %97 = vector.broadcast %cst_43 : f32 to vector<1x32xf32>
    %98 = arith.maximumf %97, %51 : vector<1x32xf32>
    %99 = vector.broadcast %cst_44 : f32 to vector<1x32xf32>
    %100 = arith.minimumf %99, %98 : vector<1x32xf32>
    %101 = arith.fptosi %100 : vector<1x32xf32> to vector<1x32xi32>
    %c4_i32 = arith.constant 4 : i32
    %102 = vector.broadcast %c4_i32 : i32 to vector<1x32xi32>
    %103 = arith.muli %101, %102 : vector<1x32xi32>
    %104 = arith.addi %30, %103 : vector<1x32xi32>
    %105 = arith.addi %104, %96 : vector<1x32xi32>
    %106 = vector.broadcast %105 : vector<1x32xi32> to vector<32x32xi32>
    %107 = arith.cmpi eq, %31, %106 : vector<32x32xi32>
    %108 = vector.broadcast %91 : vector<1x32xi1> to vector<32x32xi1>
    %109 = arith.andi %107, %108 : vector<32x32xi1>
    %cst_45 = arith.constant 0.000000e+00 : f32
    %110 = vector.shape_cast %59 : vector<1x32xf32> to vector<1x32xf32>
    %111 = vector.broadcast %110 : vector<1x32xf32> to vector<32x32xf32>
    %112 = vector.broadcast %cst_45 : f32 to vector<32x32xf32>
    %113 = arith.select %109, %111, %112 : vector<32x32xi1>, vector<32x32xf32>
    %114 = arith.addf %52, %113 : vector<32x32xf32>
    %cst_46 = arith.constant 0.000000e+00 : f32
    %115 = vector.broadcast %cst_46 : f32 to vector<1x32xf32>
    %116 = arith.cmpf oge, %61, %115 : vector<1x32xf32>
    %cst_47 = arith.constant 3.000000e+00 : f32
    %117 = vector.broadcast %cst_47 : f32 to vector<1x32xf32>
    %118 = arith.cmpf ole, %61, %117 : vector<1x32xf32>
    %119 = arith.andi %116, %118 : vector<1x32xi1>
    %cst_48 = arith.constant 0.000000e+00 : f32
    %120 = vector.broadcast %cst_48 : f32 to vector<1x32xf32>
    %121 = arith.cmpf oge, %51, %120 : vector<1x32xf32>
    %122 = arith.andi %119, %121 : vector<1x32xi1>
    %cst_49 = arith.constant 3.000000e+00 : f32
    %123 = vector.broadcast %cst_49 : f32 to vector<1x32xf32>
    %124 = arith.cmpf ole, %51, %123 : vector<1x32xf32>
    %125 = arith.andi %122, %124 : vector<1x32xi1>
    %cst_50 = arith.constant 0.000000e+00 : f32
    %cst_51 = arith.constant 3.000000e+00 : f32
    %126 = vector.broadcast %cst_50 : f32 to vector<1x32xf32>
    %127 = arith.maximumf %126, %61 : vector<1x32xf32>
    %128 = vector.broadcast %cst_51 : f32 to vector<1x32xf32>
    %129 = arith.minimumf %128, %127 : vector<1x32xf32>
    %130 = arith.fptosi %129 : vector<1x32xf32> to vector<1x32xi32>
    %cst_52 = arith.constant 0.000000e+00 : f32
    %cst_53 = arith.constant 3.000000e+00 : f32
    %131 = vector.broadcast %cst_52 : f32 to vector<1x32xf32>
    %132 = arith.maximumf %131, %51 : vector<1x32xf32>
    %133 = vector.broadcast %cst_53 : f32 to vector<1x32xf32>
    %134 = arith.minimumf %133, %132 : vector<1x32xf32>
    %135 = arith.fptosi %134 : vector<1x32xf32> to vector<1x32xi32>
    %c4_i32_54 = arith.constant 4 : i32
    %136 = vector.broadcast %c4_i32_54 : i32 to vector<1x32xi32>
    %137 = arith.muli %135, %136 : vector<1x32xi32>
    %138 = arith.addi %30, %137 : vector<1x32xi32>
    %139 = arith.addi %138, %130 : vector<1x32xi32>
    %140 = vector.broadcast %139 : vector<1x32xi32> to vector<32x32xi32>
    %141 = arith.cmpi eq, %31, %140 : vector<32x32xi32>
    %142 = vector.broadcast %125 : vector<1x32xi1> to vector<32x32xi1>
    %143 = arith.andi %141, %142 : vector<32x32xi1>
    %cst_55 = arith.constant 0.000000e+00 : f32
    %144 = vector.shape_cast %66 : vector<1x32xf32> to vector<1x32xf32>
    %145 = vector.broadcast %144 : vector<1x32xf32> to vector<32x32xf32>
    %146 = vector.broadcast %cst_55 : f32 to vector<32x32xf32>
    %147 = arith.select %143, %145, %146 : vector<32x32xi1>, vector<32x32xf32>
    %148 = arith.addf %114, %147 : vector<32x32xf32>
    %cst_56 = arith.constant 0.000000e+00 : f32
    %149 = vector.broadcast %cst_56 : f32 to vector<1x32xf32>
    %150 = arith.cmpf oge, %50, %149 : vector<1x32xf32>
    %cst_57 = arith.constant 3.000000e+00 : f32
    %151 = vector.broadcast %cst_57 : f32 to vector<1x32xf32>
    %152 = arith.cmpf ole, %50, %151 : vector<1x32xf32>
    %153 = arith.andi %150, %152 : vector<1x32xi1>
    %cst_58 = arith.constant 0.000000e+00 : f32
    %154 = vector.broadcast %cst_58 : f32 to vector<1x32xf32>
    %155 = arith.cmpf oge, %68, %154 : vector<1x32xf32>
    %156 = arith.andi %153, %155 : vector<1x32xi1>
    %cst_59 = arith.constant 3.000000e+00 : f32
    %157 = vector.broadcast %cst_59 : f32 to vector<1x32xf32>
    %158 = arith.cmpf ole, %68, %157 : vector<1x32xf32>
    %159 = arith.andi %156, %158 : vector<1x32xi1>
    %cst_60 = arith.constant 0.000000e+00 : f32
    %cst_61 = arith.constant 3.000000e+00 : f32
    %160 = vector.broadcast %cst_60 : f32 to vector<1x32xf32>
    %161 = arith.maximumf %160, %50 : vector<1x32xf32>
    %162 = vector.broadcast %cst_61 : f32 to vector<1x32xf32>
    %163 = arith.minimumf %162, %161 : vector<1x32xf32>
    %164 = arith.fptosi %163 : vector<1x32xf32> to vector<1x32xi32>
    %cst_62 = arith.constant 0.000000e+00 : f32
    %cst_63 = arith.constant 3.000000e+00 : f32
    %165 = vector.broadcast %cst_62 : f32 to vector<1x32xf32>
    %166 = arith.maximumf %165, %68 : vector<1x32xf32>
    %167 = vector.broadcast %cst_63 : f32 to vector<1x32xf32>
    %168 = arith.minimumf %167, %166 : vector<1x32xf32>
    %169 = arith.fptosi %168 : vector<1x32xf32> to vector<1x32xi32>
    %c4_i32_64 = arith.constant 4 : i32
    %170 = vector.broadcast %c4_i32_64 : i32 to vector<1x32xi32>
    %171 = arith.muli %169, %170 : vector<1x32xi32>
    %172 = arith.addi %30, %171 : vector<1x32xi32>
    %173 = arith.addi %172, %164 : vector<1x32xi32>
    %174 = vector.broadcast %173 : vector<1x32xi32> to vector<32x32xi32>
    %175 = arith.cmpi eq, %31, %174 : vector<32x32xi32>
    %176 = vector.broadcast %159 : vector<1x32xi1> to vector<32x32xi1>
    %177 = arith.andi %175, %176 : vector<32x32xi1>
    %cst_65 = arith.constant 0.000000e+00 : f32
    %178 = vector.shape_cast %73 : vector<1x32xf32> to vector<1x32xf32>
    %179 = vector.broadcast %178 : vector<1x32xf32> to vector<32x32xf32>
    %180 = vector.broadcast %cst_65 : f32 to vector<32x32xf32>
    %181 = arith.select %177, %179, %180 : vector<32x32xi1>, vector<32x32xf32>
    %182 = arith.addf %148, %181 : vector<32x32xf32>
    %cst_66 = arith.constant 0.000000e+00 : f32
    %183 = vector.broadcast %cst_66 : f32 to vector<1x32xf32>
    %184 = arith.cmpf oge, %75, %183 : vector<1x32xf32>
    %cst_67 = arith.constant 3.000000e+00 : f32
    %185 = vector.broadcast %cst_67 : f32 to vector<1x32xf32>
    %186 = arith.cmpf ole, %75, %185 : vector<1x32xf32>
    %187 = arith.andi %184, %186 : vector<1x32xi1>
    %cst_68 = arith.constant 0.000000e+00 : f32
    %188 = vector.broadcast %cst_68 : f32 to vector<1x32xf32>
    %189 = arith.cmpf oge, %77, %188 : vector<1x32xf32>
    %190 = arith.andi %187, %189 : vector<1x32xi1>
    %cst_69 = arith.constant 3.000000e+00 : f32
    %191 = vector.broadcast %cst_69 : f32 to vector<1x32xf32>
    %192 = arith.cmpf ole, %77, %191 : vector<1x32xf32>
    %193 = arith.andi %190, %192 : vector<1x32xi1>
    %cst_70 = arith.constant 0.000000e+00 : f32
    %cst_71 = arith.constant 3.000000e+00 : f32
    %194 = vector.broadcast %cst_70 : f32 to vector<1x32xf32>
    %195 = arith.maximumf %194, %75 : vector<1x32xf32>
    %196 = vector.broadcast %cst_71 : f32 to vector<1x32xf32>
    %197 = arith.minimumf %196, %195 : vector<1x32xf32>
    %198 = arith.fptosi %197 : vector<1x32xf32> to vector<1x32xi32>
    %cst_72 = arith.constant 0.000000e+00 : f32
    %cst_73 = arith.constant 3.000000e+00 : f32
    %199 = vector.broadcast %cst_72 : f32 to vector<1x32xf32>
    %200 = arith.maximumf %199, %77 : vector<1x32xf32>
    %201 = vector.broadcast %cst_73 : f32 to vector<1x32xf32>
    %202 = arith.minimumf %201, %200 : vector<1x32xf32>
    %203 = arith.fptosi %202 : vector<1x32xf32> to vector<1x32xi32>
    %c4_i32_74 = arith.constant 4 : i32
    %204 = vector.broadcast %c4_i32_74 : i32 to vector<1x32xi32>
    %205 = arith.muli %203, %204 : vector<1x32xi32>
    %206 = arith.addi %30, %205 : vector<1x32xi32>
    %207 = arith.addi %206, %198 : vector<1x32xi32>
    %208 = vector.broadcast %207 : vector<1x32xi32> to vector<32x32xi32>
    %209 = arith.cmpi eq, %31, %208 : vector<32x32xi32>
    %210 = vector.broadcast %193 : vector<1x32xi1> to vector<32x32xi1>
    %211 = arith.andi %209, %210 : vector<32x32xi1>
    %cst_75 = arith.constant 0.000000e+00 : f32
    %212 = vector.shape_cast %80 : vector<1x32xf32> to vector<1x32xf32>
    %213 = vector.broadcast %212 : vector<1x32xf32> to vector<32x32xf32>
    %214 = vector.broadcast %cst_75 : f32 to vector<32x32xf32>
    %215 = arith.select %211, %213, %214 : vector<32x32xi1>, vector<32x32xf32>
    %216 = arith.addf %182, %215 : vector<32x32xf32>
    %cst_76 = arith.constant dense<0.000000e+00> : vector<16x32xf32>
    %217 = tpu.matmul %0, %216, %cst_76 {dimension_numbers = #tpu.dot_dimension_numbers<[1], [0], [0], [1], [0, 0, 1, 1], [], []>} : vector<16x32xf32>, vector<32x32xf32>, vector<16x32xf32> -> vector<16x32xf32>
    %c0_77 = arith.constant 0 : index
    %c0_78 = arith.constant 0 : index
    %218 = vector.load %arg7[%c0_77, %c0_78] : memref<48x16xf32, #tpu.memory_space<vmem>>, vector<48x16xf32>
    %cst_79 = arith.constant dense<0.000000e+00> : vector<48x32xf32>
    %219 = tpu.matmul %218, %217, %cst_79 {dimension_numbers = #tpu.dot_dimension_numbers<[1], [0], [0], [1], [0, 0, 1, 1], [], []>} : vector<48x16xf32>, vector<16x32xf32>, vector<48x32xf32> -> vector<48x32xf32>
    %c0_80 = arith.constant 0 : index
    %c0_81 = arith.constant 0 : index
    %220 = vector.load %arg8[%c0_80, %c0_81] : memref<48x1xf32, #tpu.memory_space<vmem>>, vector<48x1xf32>
    %221 = vector.broadcast %220 : vector<48x1xf32> to vector<48x32xf32>
    %222 = arith.addf %219, %221 : vector<48x32xf32>
    %223 = vector.extract_strided_slice %6 {offsets = [0, 0], sizes = [16, 32], strides = [1, 1]} : vector<48x32xf32> to vector<16x32xf32>
    %224 = vector.extract_strided_slice %6 {offsets = [16, 0], sizes = [16, 32], strides = [1, 1]} : vector<48x32xf32> to vector<16x32xf32>
    %225 = vector.extract_strided_slice %6 {offsets = [32, 0], sizes = [16, 32], strides = [1, 1]} : vector<48x32xf32> to vector<16x32xf32>
    %226 = vector.extract_strided_slice %222 {offsets = [0, 0], sizes = [16, 32], strides = [1, 1]} : vector<48x32xf32> to vector<16x32xf32>
    %227 = vector.extract_strided_slice %222 {offsets = [16, 0], sizes = [16, 32], strides = [1, 1]} : vector<48x32xf32> to vector<16x32xf32>
    %228 = vector.extract_strided_slice %222 {offsets = [32, 0], sizes = [16, 32], strides = [1, 1]} : vector<48x32xf32> to vector<16x32xf32>
    %229 = arith.addf %223, %226 : vector<16x32xf32>
    %cst_82 = arith.constant 0.000000e+00 : f32
    %230 = vector.broadcast %cst_82 : f32 to vector<16x32xf32>
    %231 = arith.subf %230, %229 : vector<16x32xf32>
    %232 = math.exp %231 : vector<16x32xf32>
    %cst_83 = arith.constant 1.000000e+00 : f32
    %233 = vector.broadcast %cst_83 : f32 to vector<16x32xf32>
    %234 = arith.addf %233, %232 : vector<16x32xf32>
    %235 = tpu.reciprocal %234 {approx = true} : vector<16x32xf32> -> vector<16x32xf32>
    %236 = arith.addf %224, %227 : vector<16x32xf32>
    %cst_84 = arith.constant 0.000000e+00 : f32
    %237 = vector.broadcast %cst_84 : f32 to vector<16x32xf32>
    %238 = arith.subf %237, %236 : vector<16x32xf32>
    %239 = math.exp %238 : vector<16x32xf32>
    %cst_85 = arith.constant 1.000000e+00 : f32
    %240 = vector.broadcast %cst_85 : f32 to vector<16x32xf32>
    %241 = arith.addf %240, %239 : vector<16x32xf32>
    %242 = tpu.reciprocal %241 {approx = true} : vector<16x32xf32> -> vector<16x32xf32>
    %243 = arith.mulf %242, %228 : vector<16x32xf32>
    %244 = arith.addf %225, %243 : vector<16x32xf32>
    %cst_86 = arith.constant 0.000000e+00 : f32
    %245 = vector.broadcast %cst_86 : f32 to vector<16x32xf32>
    %246 = arith.cmpf oge, %244, %245 : vector<16x32xf32>
    %cst_87 = arith.constant 2.000000e-01 : f32
    %247 = vector.broadcast %cst_87 : f32 to vector<16x32xf32>
    %248 = arith.mulf %247, %244 : vector<16x32xf32>
    %249 = arith.select %246, %244, %248 : vector<16x32xi1>, vector<16x32xf32>
    %cst_88 = arith.constant 1.000000e+00 : f32
    %250 = vector.broadcast %cst_88 : f32 to vector<16x32xf32>
    %251 = arith.subf %250, %235 : vector<16x32xf32>
    %252 = arith.mulf %251, %249 : vector<16x32xf32>
    %253 = arith.mulf %235, %0 : vector<16x32xf32>
    %254 = arith.addf %252, %253 : vector<16x32xf32>
    %c0_89 = arith.constant 0 : index
    %c0_90 = arith.constant 0 : index
    %255 = vector.load %arg11[%c0_89, %c0_90] : memref<16x32xf32, #tpu.memory_space<vmem>>, vector<16x32xf32>
    tpu.vector_store %arg11[%c0_89, %c0_90], %254 {strides = array<i32>} : memref<16x32xf32, #tpu.memory_space<vmem>>, vector<16x32xf32>,
    return
  }
  func.func @transform_0(%arg0: i32) -> (i32, i32) {
    %c0_i32 = arith.constant 0 : i32
    %c0_i32_0 = arith.constant 0 : i32
    %c0_i32_1 = arith.constant 0 : i32
    return %c0_i32, %c0_i32_0 : i32, i32
  }
  func.func @transform_1(%arg0: i32) -> (i32, i32) {
    %c0_i32 = arith.constant 0 : i32
    %c0_i32_0 = arith.constant 0 : i32
    %c0_i32_1 = arith.constant 0 : i32
    return %c0_i32, %c0_i32_0 : i32, i32
  }
  func.func @transform_2(%arg0: i32) -> (i32, i32) {
    %c0_i32 = arith.constant 0 : i32
    %c0_i32_0 = arith.constant 0 : i32
    %c0_i32_1 = arith.constant 0 : i32
    return %c0_i32, %c0_i32_0 : i32, i32
  }
  func.func @transform_3(%arg0: i32) -> (i32, i32) {
    %c0_i32 = arith.constant 0 : i32
    %c0_i32_0 = arith.constant 0 : i32
    %c0_i32_1 = arith.constant 0 : i32
    return %c0_i32, %c0_i32_0 : i32, i32
  }
  func.func @transform_4(%arg0: i32) -> (i32, i32) {
    %c0_i32 = arith.constant 0 : i32
    %c0_i32_0 = arith.constant 0 : i32
    %c0_i32_1 = arith.constant 0 : i32
    return %c0_i32, %c0_i32_0 : i32, i32
  }
  func.func @transform_5(%arg0: i32) -> (i32, i32) {
    %c0_i32 = arith.constant 0 : i32
    %c0_i32_0 = arith.constant 0 : i32
    %c0_i32_1 = arith.constant 0 : i32
    return %c0_i32, %c0_i32_0 : i32, i32
  }
  func.func @transform_6(%arg0: i32) -> (i32, i32) {
    %c0_i32 = arith.constant 0 : i32
    %c0_i32_0 = arith.constant 0 : i32
    %c0_i32_1 = arith.constant 0 : i32
    return %c0_i32, %c0_i32_0 : i32, i32
  }
  func.func @transform_7(%arg0: i32) -> (i32, i32) {
    %c0_i32 = arith.constant 0 : i32
    %c0_i32_0 = arith.constant 0 : i32
    %c0_i32_1 = arith.constant 0 : i32
    return %c0_i32, %c0_i32_0 : i32, i32
  }
  func.func @transform_8(%arg0: i32) -> (i32, i32) {
    %c0_i32 = arith.constant 0 : i32
    %c0_i32_0 = arith.constant 0 : i32
    %c0_i32_1 = arith.constant 0 : i32
    return %c0_i32, %c0_i32_0 : i32, i32
  }
  func.func @transform_9(%arg0: i32) -> (i32, i32) {
    %c0_i32 = arith.constant 0 : i32
    %c0_i32_0 = arith.constant 0 : i32
    %c0_i32_1 = arith.constant 0 : i32
    return %c0_i32, %c0_i32_0 : i32, i32
  }
  func.func @transform_10(%arg0: i32) -> (i32, i32) {
    %c0_i32 = arith.constant 0 : i32
    %c0_i32_0 = arith.constant 0 : i32
    %c0_i32_1 = arith.constant 0 : i32
    return %c0_i32, %c0_i32_0 : i32, i32
  }
}

module attributes {stable_mosaic.version = 11 : i64} {
  func.func @_matmul_bias_kernel(%arg0: i32, %arg1: memref<8x9xbf16, #tpu.memory_space<vmem>>, %arg2: memref<9x256xbf16, #tpu.memory_space<vmem>>, %arg3: memref<8x1xf32, #tpu.memory_space<vmem>>, %arg4: memref<8x256xf32, #tpu.memory_space<vmem>>) attributes {dimension_semantics = [#tpu.dimension_semantics<parallel>], iteration_bounds = array<i64: 2>, scalar_prefetch = 0 : i64, scratch_operands = 0 : i64, tpu.core_type = #tpu.core_type<tc>, window_params = [{pipeline_mode = #tpu.pipeline_mode<synchronous>, transform_indices = @transform_0, window_bounds = array<i64: 8, 9>}, {transform_indices = @transform_1, window_bounds = array<i64: 9, 256>}, {pipeline_mode = #tpu.pipeline_mode<synchronous>, transform_indices = @transform_2, window_bounds = array<i64: 8, 1>}, {transform_indices = @transform_3, window_bounds = array<i64: 8, 256>}]} {
    %c0 = arith.constant 0 : index
    %c0_0 = arith.constant 0 : index
    %0 = vector.load %arg1[%c0, %c0_0] : memref<8x9xbf16, #tpu.memory_space<vmem>>, vector<8x9xbf16>
    %c0_1 = arith.constant 0 : index
    %c0_2 = arith.constant 0 : index
    %1 = vector.load %arg2[%c0_1, %c0_2] : memref<9x256xbf16, #tpu.memory_space<vmem>>, vector<9x256xbf16>
    %cst = arith.constant dense<0.000000e+00> : vector<8x256xf32>
    %2 = tpu.matmul %0, %1, %cst {dimension_numbers = #tpu.dot_dimension_numbers<[1], [0], [0], [1], [0, 0, 1, 1], [], []>} : vector<8x9xbf16>, vector<9x256xbf16>, vector<8x256xf32> -> vector<8x256xf32>
    %c0_3 = arith.constant 0 : index
    %c0_4 = arith.constant 0 : index
    %3 = vector.load %arg3[%c0_3, %c0_4] : memref<8x1xf32, #tpu.memory_space<vmem>>, vector<8x1xf32>
    %4 = vector.broadcast %3 : vector<8x1xf32> to vector<8x256xf32>
    %5 = arith.addf %2, %4 : vector<8x256xf32>
    %c0_5 = arith.constant 0 : index
    %c0_6 = arith.constant 0 : index
    %6 = vector.load %arg4[%c0_5, %c0_6] : memref<8x256xf32, #tpu.memory_space<vmem>>, vector<8x256xf32>
    tpu.vector_store %arg4[%c0_5, %c0_6], %5 {strides = array<i32>} : memref<8x256xf32, #tpu.memory_space<vmem>>, vector<8x256xf32>,
    return
  }
  func.func @transform_0(%arg0: i32) -> (i32, i32) {
    %c0_i32 = arith.constant 0 : i32
    %c0_i32_0 = arith.constant 0 : i32
    %c0_i32_1 = arith.constant 0 : i32
    return %c0_i32, %c0_i32_0 : i32, i32
  }
  func.func @transform_1(%arg0: i32) -> (i32, i32) {
    %c0_i32 = arith.constant 0 : i32
    %c0_i32_0 = arith.constant 0 : i32
    return %c0_i32, %arg0 : i32, i32
  }
  func.func @transform_2(%arg0: i32) -> (i32, i32) {
    %c0_i32 = arith.constant 0 : i32
    %c0_i32_0 = arith.constant 0 : i32
    %c0_i32_1 = arith.constant 0 : i32
    return %c0_i32, %c0_i32_0 : i32, i32
  }
  func.func @transform_3(%arg0: i32) -> (i32, i32) {
    %c0_i32 = arith.constant 0 : i32
    %c0_i32_0 = arith.constant 0 : i32
    return %c0_i32, %arg0 : i32, i32
  }
}

module attributes {stable_mosaic.version = 11 : i64} {
  func.func @_matmul_bias_kernel(%arg0: i32, %arg1: memref<8x144xbf16, #tpu.memory_space<vmem>>, %arg2: memref<144x128xbf16, #tpu.memory_space<vmem>>, %arg3: memref<8x1xf32, #tpu.memory_space<vmem>>, %arg4: memref<8x128xf32, #tpu.memory_space<vmem>>) attributes {dimension_semantics = [#tpu.dimension_semantics<parallel>], iteration_bounds = array<i64: 1>, scalar_prefetch = 0 : i64, scratch_operands = 0 : i64, tpu.core_type = #tpu.core_type<tc>, window_params = [{pipeline_mode = #tpu.pipeline_mode<synchronous>, transform_indices = @transform_0, window_bounds = array<i64: 8, 144>}, {transform_indices = @transform_1, window_bounds = array<i64: 144, 128>}, {pipeline_mode = #tpu.pipeline_mode<synchronous>, transform_indices = @transform_2, window_bounds = array<i64: 8, 1>}, {transform_indices = @transform_3, window_bounds = array<i64: 8, 128>}]} {
    %c0 = arith.constant 0 : index
    %c0_0 = arith.constant 0 : index
    %0 = vector.load %arg1[%c0, %c0_0] : memref<8x144xbf16, #tpu.memory_space<vmem>>, vector<8x144xbf16>
    %c0_1 = arith.constant 0 : index
    %c0_2 = arith.constant 0 : index
    %1 = vector.load %arg2[%c0_1, %c0_2] : memref<144x128xbf16, #tpu.memory_space<vmem>>, vector<144x128xbf16>
    %cst = arith.constant dense<0.000000e+00> : vector<8x128xf32>
    %2 = tpu.matmul %0, %1, %cst {dimension_numbers = #tpu.dot_dimension_numbers<[1], [0], [0], [1], [0, 0, 1, 1], [], []>} : vector<8x144xbf16>, vector<144x128xbf16>, vector<8x128xf32> -> vector<8x128xf32>
    %c0_3 = arith.constant 0 : index
    %c0_4 = arith.constant 0 : index
    %3 = vector.load %arg3[%c0_3, %c0_4] : memref<8x1xf32, #tpu.memory_space<vmem>>, vector<8x1xf32>
    %4 = vector.broadcast %3 : vector<8x1xf32> to vector<8x128xf32>
    %5 = arith.addf %2, %4 : vector<8x128xf32>
    %c0_5 = arith.constant 0 : index
    %c0_6 = arith.constant 0 : index
    %6 = vector.load %arg4[%c0_5, %c0_6] : memref<8x128xf32, #tpu.memory_space<vmem>>, vector<8x128xf32>
    tpu.vector_store %arg4[%c0_5, %c0_6], %5 {strides = array<i32>} : memref<8x128xf32, #tpu.memory_space<vmem>>, vector<8x128xf32>,
    return
  }
  func.func @transform_0(%arg0: i32) -> (i32, i32) {
    %c0_i32 = arith.constant 0 : i32
    %c0_i32_0 = arith.constant 0 : i32
    %c0_i32_1 = arith.constant 0 : i32
    return %c0_i32, %c0_i32_0 : i32, i32
  }
  func.func @transform_1(%arg0: i32) -> (i32, i32) {
    %c0_i32 = arith.constant 0 : i32
    %c0_i32_0 = arith.constant 0 : i32
    return %c0_i32, %arg0 : i32, i32
  }
  func.func @transform_2(%arg0: i32) -> (i32, i32) {
    %c0_i32 = arith.constant 0 : i32
    %c0_i32_0 = arith.constant 0 : i32
    %c0_i32_1 = arith.constant 0 : i32
    return %c0_i32, %c0_i32_0 : i32, i32
  }
  func.func @transform_3(%arg0: i32) -> (i32, i32) {
    %c0_i32 = arith.constant 0 : i32
    %c0_i32_0 = arith.constant 0 : i32
    return %c0_i32, %arg0 : i32, i32
  }
}

module attributes {stable_mosaic.version = 11 : i64} {
  func.func @_matmul_bias_kernel(%arg0: i32, %arg1: memref<8x72xbf16, #tpu.memory_space<vmem>>, %arg2: memref<72x256xbf16, #tpu.memory_space<vmem>>, %arg3: memref<8x1xf32, #tpu.memory_space<vmem>>, %arg4: memref<8x256xf32, #tpu.memory_space<vmem>>) attributes {dimension_semantics = [#tpu.dimension_semantics<parallel>], iteration_bounds = array<i64: 2>, scalar_prefetch = 0 : i64, scratch_operands = 0 : i64, tpu.core_type = #tpu.core_type<tc>, window_params = [{pipeline_mode = #tpu.pipeline_mode<synchronous>, transform_indices = @transform_0, window_bounds = array<i64: 8, 72>}, {transform_indices = @transform_1, window_bounds = array<i64: 72, 256>}, {pipeline_mode = #tpu.pipeline_mode<synchronous>, transform_indices = @transform_2, window_bounds = array<i64: 8, 1>}, {transform_indices = @transform_3, window_bounds = array<i64: 8, 256>}]} {
    %c0 = arith.constant 0 : index
    %c0_0 = arith.constant 0 : index
    %0 = vector.load %arg1[%c0, %c0_0] : memref<8x72xbf16, #tpu.memory_space<vmem>>, vector<8x72xbf16>
    %c0_1 = arith.constant 0 : index
    %c0_2 = arith.constant 0 : index
    %1 = vector.load %arg2[%c0_1, %c0_2] : memref<72x256xbf16, #tpu.memory_space<vmem>>, vector<72x256xbf16>
    %cst = arith.constant dense<0.000000e+00> : vector<8x256xf32>
    %2 = tpu.matmul %0, %1, %cst {dimension_numbers = #tpu.dot_dimension_numbers<[1], [0], [0], [1], [0, 0, 1, 1], [], []>} : vector<8x72xbf16>, vector<72x256xbf16>, vector<8x256xf32> -> vector<8x256xf32>
    %c0_3 = arith.constant 0 : index
    %c0_4 = arith.constant 0 : index
    %3 = vector.load %arg3[%c0_3, %c0_4] : memref<8x1xf32, #tpu.memory_space<vmem>>, vector<8x1xf32>
    %4 = vector.broadcast %3 : vector<8x1xf32> to vector<8x256xf32>
    %5 = arith.addf %2, %4 : vector<8x256xf32>
    %c0_5 = arith.constant 0 : index
    %c0_6 = arith.constant 0 : index
    %6 = vector.load %arg4[%c0_5, %c0_6] : memref<8x256xf32, #tpu.memory_space<vmem>>, vector<8x256xf32>
    tpu.vector_store %arg4[%c0_5, %c0_6], %5 {strides = array<i32>} : memref<8x256xf32, #tpu.memory_space<vmem>>, vector<8x256xf32>,
    return
  }
  func.func @transform_0(%arg0: i32) -> (i32, i32) {
    %c0_i32 = arith.constant 0 : i32
    %c0_i32_0 = arith.constant 0 : i32
    %c0_i32_1 = arith.constant 0 : i32
    return %c0_i32, %c0_i32_0 : i32, i32
  }
  func.func @transform_1(%arg0: i32) -> (i32, i32) {
    %c0_i32 = arith.constant 0 : i32
    %c0_i32_0 = arith.constant 0 : i32
    return %c0_i32, %arg0 : i32, i32
  }
  func.func @transform_2(%arg0: i32) -> (i32, i32) {
    %c0_i32 = arith.constant 0 : i32
    %c0_i32_0 = arith.constant 0 : i32
    %c0_i32_1 = arith.constant 0 : i32
    return %c0_i32, %c0_i32_0 : i32, i32
  }
  func.func @transform_3(%arg0: i32) -> (i32, i32) {
    %c0_i32 = arith.constant 0 : i32
    %c0_i32_0 = arith.constant 0 : i32
    return %c0_i32, %arg0 : i32, i32
  }
}

module attributes {stable_mosaic.version = 11 : i64} {
  func.func @_output_head_kernel(%arg0: i32, %arg1: memref<8x72xbf16, #tpu.memory_space<vmem>>, %arg2: memref<72x256xbf16, #tpu.memory_space<vmem>>, %arg3: memref<8x1xf32, #tpu.memory_space<vmem>>, %arg4: memref<1x8xf32, #tpu.memory_space<vmem>>, %arg5: memref<1x1xf32, #tpu.memory_space<vmem>>, %arg6: memref<1x256xf32, #tpu.memory_space<vmem>>) attributes {dimension_semantics = [#tpu.dimension_semantics<parallel>], iteration_bounds = array<i64: 2>, scalar_prefetch = 0 : i64, scratch_operands = 0 : i64, tpu.core_type = #tpu.core_type<tc>, window_params = [{pipeline_mode = #tpu.pipeline_mode<synchronous>, transform_indices = @transform_0, window_bounds = array<i64: 8, 72>}, {transform_indices = @transform_1, window_bounds = array<i64: 72, 256>}, {pipeline_mode = #tpu.pipeline_mode<synchronous>, transform_indices = @transform_2, window_bounds = array<i64: 8, 1>}, {pipeline_mode = #tpu.pipeline_mode<synchronous>, transform_indices = @transform_3, window_bounds = array<i64: 1, 8>}, {pipeline_mode = #tpu.pipeline_mode<synchronous>, transform_indices = @transform_4, window_bounds = array<i64: 1, 1>}, {transform_indices = @transform_5, window_bounds = array<i64: 1, 256>}]} {
    %c0 = arith.constant 0 : index
    %c0_0 = arith.constant 0 : index
    %0 = vector.load %arg1[%c0, %c0_0] : memref<8x72xbf16, #tpu.memory_space<vmem>>, vector<8x72xbf16>
    %c0_1 = arith.constant 0 : index
    %c0_2 = arith.constant 0 : index
    %1 = vector.load %arg2[%c0_1, %c0_2] : memref<72x256xbf16, #tpu.memory_space<vmem>>, vector<72x256xbf16>
    %cst = arith.constant dense<0.000000e+00> : vector<8x256xf32>
    %2 = tpu.matmul %0, %1, %cst {dimension_numbers = #tpu.dot_dimension_numbers<[1], [0], [0], [1], [0, 0, 1, 1], [], []>} : vector<8x72xbf16>, vector<72x256xbf16>, vector<8x256xf32> -> vector<8x256xf32>
    %c0_3 = arith.constant 0 : index
    %c0_4 = arith.constant 0 : index
    %3 = vector.load %arg3[%c0_3, %c0_4] : memref<8x1xf32, #tpu.memory_space<vmem>>, vector<8x1xf32>
    %4 = vector.broadcast %3 : vector<8x1xf32> to vector<8x256xf32>
    %5 = arith.addf %2, %4 : vector<8x256xf32>
    %c0_5 = arith.constant 0 : index
    %c0_6 = arith.constant 0 : index
    %6 = vector.load %arg4[%c0_5, %c0_6] : memref<1x8xf32, #tpu.memory_space<vmem>>, vector<1x8xf32>
    %cst_7 = arith.constant dense<0.000000e+00> : vector<1x256xf32>
    %7 = tpu.matmul %6, %5, %cst_7 {dimension_numbers = #tpu.dot_dimension_numbers<[1], [0], [0], [1], [0, 0, 1, 1], [], []>} : vector<1x8xf32>, vector<8x256xf32>, vector<1x256xf32> -> vector<1x256xf32>
    %c0_8 = arith.constant 0 : index
    %c0_9 = arith.constant 0 : index
    %8 = vector.load %arg5[%c0_8, %c0_9] : memref<1x1xf32, #tpu.memory_space<vmem>>, vector<1x1xf32>
    %9 = vector.broadcast %8 : vector<1x1xf32> to vector<1x256xf32>
    %10 = arith.addf %7, %9 : vector<1x256xf32>
    %c0_10 = arith.constant 0 : index
    %c0_11 = arith.constant 0 : index
    %11 = vector.load %arg6[%c0_10, %c0_11] : memref<1x256xf32, #tpu.memory_space<vmem>>, vector<1x256xf32>
    tpu.vector_store %arg6[%c0_10, %c0_11], %10 {strides = array<i32>} : memref<1x256xf32, #tpu.memory_space<vmem>>, vector<1x256xf32>,
    return
  }
  func.func @transform_0(%arg0: i32) -> (i32, i32) {
    %c0_i32 = arith.constant 0 : i32
    %c0_i32_0 = arith.constant 0 : i32
    %c0_i32_1 = arith.constant 0 : i32
    return %c0_i32, %c0_i32_0 : i32, i32
  }
  func.func @transform_1(%arg0: i32) -> (i32, i32) {
    %c0_i32 = arith.constant 0 : i32
    %c0_i32_0 = arith.constant 0 : i32
    return %c0_i32, %arg0 : i32, i32
  }
  func.func @transform_2(%arg0: i32) -> (i32, i32) {
    %c0_i32 = arith.constant 0 : i32
    %c0_i32_0 = arith.constant 0 : i32
    %c0_i32_1 = arith.constant 0 : i32
    return %c0_i32, %c0_i32_0 : i32, i32
  }
  func.func @transform_3(%arg0: i32) -> (i32, i32) {
    %c0_i32 = arith.constant 0 : i32
    %c0_i32_0 = arith.constant 0 : i32
    %c0_i32_1 = arith.constant 0 : i32
    return %c0_i32, %c0_i32_0 : i32, i32
  }
  func.func @transform_4(%arg0: i32) -> (i32, i32) {
    %c0_i32 = arith.constant 0 : i32
    %c0_i32_0 = arith.constant 0 : i32
    %c0_i32_1 = arith.constant 0 : i32
    return %c0_i32, %c0_i32_0 : i32, i32
  }
  func.func @transform_5(%arg0: i32) -> (i32, i32) {
    %c0_i32 = arith.constant 0 : i32
    %c0_i32_0 = arith.constant 0 : i32
    return %c0_i32, %arg0 : i32, i32
  }
}

</mosaic_0001>

<llo_original>
// kernel: _lambda_.18
$region0: #{_lambda_.18}
  #allocation0 [shape = 'u32[]', space=smem, size = 0x4, offset = 0x4, fixed_abs, tag = 'smem constant byte address 0x4 - core index']
  #allocation1 [shape = 'u32[144,128]{1,0:T(1,128)}', space=vmem, size = 0x12000, scoped, tag = 'internal scratch']
  %s0 = inlined_call_operand.hbm [shape: bf16[8,9], index: 0, kind: input, shape index: {}]
  %s1 = inlined_call_operand.vmem [shape: bf16[9,512], index: 1, kind: input, shape index: {}]
  %s2 = inlined_call_operand.hbm [shape: f32[8,1], index: 2, kind: input, shape index: {}]
  %s3 = inlined_call_operand.vmem [shape: f32[8,512], index: 3, kind: output, shape index: {}]
  %s4 = sld [smem:[#allocation0]]
  $region91: #{_lambda_.18} parent=0
    _
  %s6 = ssub.s32 1, %s4
  %s7 = scalar_select 0, %s6, %s4
  $region1: #{_lambda_.18} parent=0
    #allocation2 [shape = 'u8[2048]{0}', space=vmem, size = 0x800, scoped, tag = 'input window, operand 0, single buffered']
    #allocation3 [shape = 's32[2]{0}', space=sflag, size = 0x8, scoped, tag = 'scoped memory for _lambda_.18']
    #allocation4 [shape = 'u8[16384]{0}', space=vmem, size = 0x4000, scoped, tag = 'input window, operand 1']
    #allocation5 [shape = 'u8[4096]{0}', space=vmem, size = 0x1000, scoped, tag = 'input window, operand 2, single buffered']
    #allocation6 [shape = 's32[1]{0}', space=sflag, size = 0x4, scoped, tag = 'scoped memory for _lambda_.18']
    %8 = vsyncpa [#allocation3], 0
    %9 = vsyncpa [#allocation6], 0
    loop: start=0, step=1, limit=4
    $region2: #{_lambda_.18} parent=1 // loop_pre_header
      _
    $region3: #{_lambda_.18} parent=1 // loop_header
      %s11 = sphi 0, %s15
      %p12 = scmp.ge.s32.totalorder %s11, 4
      %s19 = sphi 0, %s19
      %s21 = sphi 0, %s19
      %s22 = sphi 0, %s21
      %s36 = sphi 0, %s22
      %s42 = sphi 0, %s44
      %s45 = sphi 0, %s42
      %s46 = sphi 0, %s45
      %s62 = sphi 0, %s46
      %s66 = sphi 0, %s66
      %s68 = sphi 0, %s66
      %s69 = sphi 0, %s68
      %s83 = sphi 0, %s69
      %s89 = sphi 0, %s91
      %s92 = sphi 0, %s89
      %s93 = sphi 0, %s92
      %s109 = sphi 0, %s93
    $region4: #{_lambda_.18} parent=1 // loop_header_branch
      %14 = sbr.rel (%p12) target = $region8
    $region5: #{_lambda_.18} parent=1 // loop_body
      %s16 = ssub.s32 %s11, 1
      %s17 = ssub.s32 %s11, 2
      %s18 = sadd.s32 %s11, 1
      %s20 = sadd.s32 %s19, 1
      %p23 = scmp.eq.s32.totalorder %s11, 1
      %p24 = scmp.ne.s32.totalorder %s19, %s21
      %p25 = scmp.eq.s32.totalorder %s11, 0
      %p26 = por %p24, %p25
      %p27 = scmp.ne.s32.totalorder %s19, %s21
      %p28 = scmp.eq.s32.totalorder %s16, 1
      %p29 = por %p27, %p28
      %p30 = scmp.ne.s32.totalorder %s21, %s22
      %p31 = scmp.eq.s32.totalorder %s16, 0
      %p32 = por %p30, %p31
      %p33 = scmp.ne.s32.totalorder %s21, %s22
      %p34 = scmp.eq.s32.totalorder %s17, 1
      %p35 = por %p33, %p34
      %p37 = scmp.ne.s32.totalorder %s22, %s36
      %p38 = scmp.eq.s32.totalorder %s17, 0
      %p39 = por %p37, %p38
      %s40 = ssub.s32 %s11, %s18
      %p41 = scmp.eq.s32.totalorder %s40, 0
      %s43 = sadd.s32 %s42, 1
      %s44 = scalar_select %p41, %s42, %s43
      %p47 = pneg %p41
      %p48 = scmp.eq.s32.totalorder %s11, 1
      %p49 = por %p47, %p48
      %p50 = scmp.ne.s32.totalorder %s42, %s45
      %p51 = scmp.eq.s32.totalorder %s11, 0
      %p52 = por %p50, %p51
      %p53 = scmp.ne.s32.totalorder %s42, %s45
      %p54 = scmp.eq.s32.totalorder %s16, 1
      %p55 = por %p53, %p54
      %p56 = scmp.ne.s32.totalorder %s45, %s46
      %p57 = scmp.eq.s32.totalorder %s16, 0
      %p58 = por %p56, %p57
      %p59 = scmp.ne.s32.totalorder %s45, %s46
      %p60 = scmp.eq.s32.totalorder %s17, 1
      %p61 = por %p59, %p60
      %p63 = scmp.ne.s32.totalorder %s46, %s62
      %p64 = scmp.eq.s32.totalorder %s17, 0
      %p65 = por %p63, %p64
      %s67 = sadd.s32 %s66, 1
      %p70 = scmp.eq.s32.totalorder %s11, 1
      %p71 = scmp.ne.s32.totalorder %s66, %s68
      %p72 = scmp.eq.s32.totalorder %s11, 0
      %p73 = por %p71, %p72
      %p74 = scmp.ne.s32.totalorder %s66, %s68
      %p75 = scmp.eq.s32.totalorder %s16, 1
      %p76 = por %p74, %p75
      %p77 = scmp.ne.s32.totalorder %s68, %s69
      %p78 = scmp.eq.s32.totalorder %s16, 0
      %p79 = por %p77, %p78
      %p80 = scmp.ne.s32.totalorder %s68, %s69
      %p81 = scmp.eq.s32.totalorder %s17, 1
      %p82 = por %p80, %p81
      %p84 = scmp.ne.s32.totalorder %s69, %s83
      %p85 = scmp.eq.s32.totalorder %s17, 0
      %p86 = por %p84, %p85
      %s87 = ssub.s32 %s11, %s18
      %p88 = scmp.eq.s32.totalorder %s87, 0
      %s90 = sadd.s32 %s89, 1
      %s91 = scalar_select %p88, %s89, %s90
      %p94 = pneg %p88
      %p95 = scmp.eq.s32.totalorder %s11, 1
      %p96 = por %p94, %p95
      %p97 = scmp.ne.s32.totalorder %s89, %s92
      %p98 = scmp.eq.s32.totalorder %s11, 0
      %p99 = por %p97, %p98
      %p100 = scmp.ne.s32.totalorder %s89, %s92
      %p101 = scmp.eq.s32.totalorder %s16, 1
      %p102 = por %p100, %p101
      %p103 = scmp.ne.s32.totalorder %s92, %s93
      %p104 = scmp.eq.s32.totalorder %s16, 0
      %p105 = por %p103, %p104
      %p106 = scmp.ne.s32.totalorder %s92, %s93
      %p107 = scmp.eq.s32.totalorder %s17, 1
      %p108 = por %p106, %p107
      %p110 = scmp.ne.s32.totalorder %s93, %s109
      %p111 = scmp.eq.s32.totalorder %s17, 0
      %p112 = por %p110, %p111
      %p113 = scmp.le.s32.totalorder 1, %s11
      %p114 = scmp.lt.s32.totalorder %s11, 3
      %p115 = pnand %p113, %p114
      %p116 = pneg %p115
      // Predicated region
      $region9: #{_lambda_.18} parent=5 // pred_check
        _
      $region10: #{_lambda_.18} parent=5 // pred_check_branch
        %118 = sbr.rel (%p115) target = $region12
      $region11: #{_lambda_.18} parent=5 // pred_region
        %s119 = ssub.s32 %s11, 1
        // Predicated region
        $region13: #{_lambda_.18} parent=11 // pred_check
          %p120 = pneg %p32
        $region14: #{_lambda_.18} parent=11 // pred_check_branch
          %122 = sbr.rel (%p120) target = $region16
        $region15: #{_lambda_.18} parent=11 // pred_region
          %s124 = ssub.s32 64, 64
          %125 = vsyncadd [#allocation3], %s124
          %s127 = sshll.u32 [#allocation2], 4
          %s128 = int_to_ptr.vmem [resolvable:$true] %s127
          %130 = dma.hbm_to_vmem [thread:$0]  %s0, 64, %s128, [#allocation3]
        $region16: #{_lambda_.18} parent=11 // pred_fallthru
          _
        // Predicated region
        $region17: #{_lambda_.18} parent=11 // pred_check
          %p131 = pneg %p79
        $region18: #{_lambda_.18} parent=11 // pred_check_branch
          %133 = sbr.rel (%p131) target = $region20
        $region19: #{_lambda_.18} parent=11 // pred_region
          %s135 = ssub.s32 128, 128
          %136 = vsyncadd [#allocation6], %s135
          %s138 = sshll.u32 [#allocation5], 4
          %s139 = int_to_ptr.vmem [resolvable:$true] %s138
          %141 = dma.hbm_to_vmem [thread:$0]  %s2, 128, %s139, [#allocation6]
        $region20: #{_lambda_.18} parent=11 // pred_fallthru
          _
      $region12: #{_lambda_.18} parent=5 // pred_fallthru
        _
      %p142 = scmp.lt.s32.totalorder %s11, 2
      // Predicated region
      $region21: #{_lambda_.18} parent=5 // pred_check
        %p143 = pneg %p142
      $region22: #{_lambda_.18} parent=5 // pred_check_branch
        %145 = sbr.rel (%p143) target = $region24
      $region23: #{_lambda_.18} parent=5 // pred_region
        // Predicated region
        $region25: #{_lambda_.18} parent=23 // pred_check
          %p146 = pneg %p52
        $region26: #{_lambda_.18} parent=23 // pred_check_branch
          %148 = sbr.rel (%p146) target = $region28
        $region27: #{_lambda_.18} parent=23 // pred_region
          %s149 = sand.u32 %s42, 1
          %s150 = sand.u32 %s42, 1
          %s151 = smul.addr %s150, 16
          %s152 = scalar_lea.vmem [#allocation4], %s151
          %s153 = smul.u32 2, %s11
          %s154 = smul.addr %s153, 4
          %s155 = scalar_lea.vmem %s1, %s154
          // Predicated region
          $region29: #{_lambda_.18} parent=27 // pred_check
            _
          $region30: #{_lambda_.18} parent=27 // pred_check_branch
            %157 = sbr.rel (0) target = $region32
          $region31: #{_lambda_.18} parent=27 // pred_region
            // Predicated region
            $region33: #{_lambda_.18} parent=31 // pred_check
              _
            $region34: #{_lambda_.18} parent=31 // pred_check_branch
              %159 = sbr.rel (0) target = $region36
            $region35: #{_lambda_.18} parent=31 // pred_region
              // Predicated region
              $region48: #{_lambda_.18} parent=35 // pred_check
                _
              $region49: #{_lambda_.18} parent=35 // pred_check_branch
                %177 = sbr.rel (0) target = $region51
              $region50: #{_lambda_.18} parent=35 // pred_region
                loop: start=0, step=1, limit=1
                $region52: #{_lambda_.18} parent=50 // loop_pre_header
                  _
                $region53: #{_lambda_.18} parent=50 // loop_header
                  %s179 = sphi 0, %s183
                  %p180 = scmp.ge.s32.totalorder %s179, 1
                  %s184 = sphi %s155, %s155
                  %s185 = sphi %s152, %s152
                $region54: #{_lambda_.18} parent=50 // loop_header_branch
                  %182 = sbr.rel (%p180) target = $region58
                $region55: #{_lambda_.18} parent=50 // loop_body
                  %v186 = vld [vmem:[%s184] sm:$0xff]
                  %187 = vst [vmem:[%s185] sm:$0xff] %v186
                  %v188 = vld [vmem:[%s184 + $0x10] sm:$0xff]
                  %189 = vst [vmem:[%s185 + $0x8] sm:$0xff] %v188
                $region56: #{_lambda_.18} parent=50 // loop_footer
                  %s183 = sadd.s32 1, %s179
                $region57: #{_lambda_.18} parent=50 // loop_footer_branch
                  %178 = sbr.rel target = $region53
                $region58: #{_lambda_.18} parent=50 // loop_exit
                  _
              $region51: #{_lambda_.18} parent=35 // pred_fallthru
                _
              // Predicated region
              $region59: #{_lambda_.18} parent=35 // pred_check
                _
              $region60: #{_lambda_.18} parent=35 // pred_check_branch
                %191 = sbr.rel target = $region62
              $region61: #{_lambda_.18} parent=35 // pred_region
                _
              $region62: #{_lambda_.18} parent=35 // pred_fallthru
                _
            $region36: #{_lambda_.18} parent=31 // pred_fallthru
              _
            // Predicated region
            $region37: #{_lambda_.18} parent=31 // pred_check
              _
            $region38: #{_lambda_.18} parent=31 // pred_check_branch
              %161 = sbr.rel target = $region40
            $region39: #{_lambda_.18} parent=31 // pred_region
              %s163 = ssub.s32 256, 1
              loop: start=0, step=1, limit=1
              $region41: #{_lambda_.18} parent=39 // loop_pre_header
                _
              $region42: #{_lambda_.18} parent=39 // loop_header
                %s165 = sphi 0, %s169
                %p166 = scmp.ge.s32.totalorder %s165, 1
                %s170 = sphi %s155, %s155
                %s171 = sphi %s152, %s152
              $region43: #{_lambda_.18} parent=39 // loop_header_branch
                %168 = sbr.rel (%p166) target = $region47
              $region44: #{_lambda_.18} parent=39 // loop_body
                %v172 = vld [vmem:[%s170] sm:%s163]
                %173 = vst [vmem:[%s171] sm:%s163] %v172
                %v174 = vld [vmem:[%s170 + $0x10] sm:%s163]
                %175 = vst [vmem:[%s171 + $0x8] sm:%s163] %v174
              $region45: #{_lambda_.18} parent=39 // loop_footer
                %s169 = sadd.s32 1, %s165
              $region46: #{_lambda_.18} parent=39 // loop_footer_branch
                %164 = sbr.rel target = $region42
              $region47: #{_lambda_.18} parent=39 // loop_exit
                _
            $region40: #{_lambda_.18} parent=31 // pred_fallthru
              _
          $region32: #{_lambda_.18} parent=27 // pred_fallthru
            _
          %192 = vnop
        $region28: #{_lambda_.18} parent=23 // pred_fallthru
          _
      $region24: #{_lambda_.18} parent=5 // pred_fallthru
        _
      %p193 = scmp.le.s32.totalorder 1, %s11
      %p194 = scmp.lt.s32.totalorder %s11, 3
      %p195 = pnand %p193, %p194
      %p196 = pneg %p195
      // Predicated region
      $region63: #{_lambda_.18} parent=5 // pred_check
        _
      $region64: #{_lambda_.18} parent=5 // pred_check_branch
        %198 = sbr.rel (%p195) target = $region66
      $region65: #{_lambda_.18} parent=5 // pred_region
        %s199 = ssub.s32 %s11, 1
        // Predicated region
        $region67: #{_lambda_.18} parent=65 // pred_check
          %p200 = pneg %p32
        $region68: #{_lambda_.18} parent=65 // pred_check_branch
          %202 = sbr.rel (%p200) target = $region70
        $region69: #{_lambda_.18} parent=65 // pred_region
          %203 = dma.done [#allocation3], 64
        $region70: #{_lambda_.18} parent=65 // pred_fallthru
          _
        %s204 = sand.u32 %s45, 1
        %s205 = sand.u32 %s45, 1
        %s206 = smul.addr %s205, 16
        %s207 = scalar_lea.vmem [#allocation4], %s206
        // Predicated region
        $region71: #{_lambda_.18} parent=65 // pred_check
          %p208 = pneg %p58
        $region72: #{_lambda_.18} parent=65 // pred_check_branch
          %210 = sbr.rel (%p208) target = $region74
        $region73: #{_lambda_.18} parent=65 // pred_region
          _
        $region74: #{_lambda_.18} parent=65 // pred_fallthru
          _
        // Predicated region
        $region75: #{_lambda_.18} parent=65 // pred_check
          %p211 = pneg %p79
        $region76: #{_lambda_.18} parent=65 // pred_check_branch
          %213 = sbr.rel (%p211) target = $region78
        $region77: #{_lambda_.18} parent=65 // pred_region
          %214 = dma.done [#allocation6], 128
        $region78: #{_lambda_.18} parent=65 // pred_fallthru
          _
        %p215 = pneg %p32
        %p216 = pneg %p29
        %s217 = sand.u32 %s45, 1
        %s218 = sand.u32 %s45, 1
        %s219 = smul.addr %s218, 16
        %s220 = scalar_lea.vmem [#allocation4], %s219
        %p221 = pneg %p58
        %p222 = pneg %p55
        %p223 = pneg %p79
        %p224 = pneg %p76
        %p225 = pneg %p105
        %p226 = pneg %p102
        %s227 = smul.u32 2, %s16
        %p228 = scmp.lt.s32.totalorder %s227, 3
        %s229 = scalar_select %p228, %s227, 3
        %s230 = smul.addr %s229, 8
        %s231 = scalar_lea.vmem %s3, %s230
        %s232 = smul.u32 2, %s16
        %s233 = smul.u32 2, %s16
        %p234 = scmp.lt.s32.totalorder %s233, 3
        %s235 = scalar_select %p234, %s233, 3
        %s236 = smul.addr %s235, 8
        %s237 = scalar_lea.vmem %s3, %s236
        %s238 = smul.u32 2, %s16
        %v240 = vld [vmem:[#allocation2] sm:$0xf]
        %v241 = vld [vmem:[%s207] sm:$0xff]
        %v242 = vld [vmem:[%s207 + $0x8] sm:$0x11]
        %v243 = vld [vmem:[#allocation5] sm:$0xff]
        %245 = vset.pattern.permute.xlu0 0
        %246 = vperm.xlu0 %245, %v243
        %v247 = vpop.permute.xlu0 %246
        %v251 = vunpack.c.l.b16 %v241
        %v252 = vunpack.c.h.b16 %v241
        %v253 = vunpack.c.l.b16 %v242
        %v254 = vunpack.c.h.b16 %v242
        %v255 = vpack.c.b16 %v253, %v251
        %v256 = vpack.c.b16 %v254, %v252
        %vm257 = vcmask 72704
        %v259 = vsel %vm257, %v240, 0
        %vm261 = vcmask 1043456
        %vm262 = vcmask 1044480
        %v263 = vsel %vm261, 4294967295, 65535
        %v264 = vsel %vm262, %v263, 0
        %v266 = vand.u32 %v255, %v264
        %v269 = vand.u32 %v256, %v264
        %271 = vmatprep.subr.bf16.mxu0 0
        %272 = vmatpush1.bf16.msra.mxu0 0
        %273 = vmatprep.subr.bf16.mxu0 0
        %274 = vmatpush1.bf16.msra.mxu0 0
        %275 = vmatprep.subr.bf16.mxu0 0
        %276 = vmatpush1.bf16.msra.mxu0 0
        %277 = vmatprep.subr.bf16.mxu0 0
        %278 = vmatpush1.bf16.msra.mxu0 0
        %279 = vmatprep.subr.bf16.mxu0 0
        %280 = vmatpush1.bf16.msra.mxu0 0
        %281 = vmatprep.subr.bf16.mxu0 0
        %282 = vmatpush1.bf16.msra.mxu0 0
        %283 = vmatprep.subr.bf16.mxu0 0
        %284 = vmatpush1.bf16.msra.mxu0 0
        %285 = vmatprep.subr.bf16.mxu0 %v269
        %286 = vmatpush1.bf16.msra.mxu0 %v266
        %287 = vmatprep.subr.bf16.mxu0 0
        %288 = vmatpush2.bf16.msra.mxu0 0
        %289 = vmatprep.subr.bf16.mxu0 0
        %290 = vmatpush2.bf16.msra.mxu0 0
        %291 = vmatprep.subr.bf16.mxu0 0
        %292 = vmatpush2.bf16.msra.mxu0 0
        %293 = vmatprep.subr.bf16.mxu0 0
        %294 = vmatpush2.bf16.msra.mxu0 0
        %295 = vmatprep.subr.bf16.mxu0 0
        %296 = vmatpush2.bf16.msra.mxu0 0
        %297 = vmatprep.subr.bf16.mxu0 0
        %298 = vmatpush2.bf16.msra.mxu0 0
        %299 = vmatprep.subr.bf16.mxu0 0
        %300 = vmatpush2.bf16.msra.mxu0 0
        %301 = vmatprep.subr.bf16.mxu0 0
        %302 = vmatpush2.bf16.msra.mxu0 0
        %303 = vmatprep.mubr.bf16.mxu0 0
        %304 = vmatmul.mubr.bf16.gmra.mxu0 %v259
        %v305 = vpop.f32.mrf.mxu0
        %v306 = vadd.f32 %v247, %v305
        %v307 = vpop.f32.mrf.mxu0
        %v308 = vadd.f32 %v247, %v307
        %v309 = vpop.f32.mrf.mxu0
        %v310 = vpop.f32.mrf.mxu0
        %311 = vdwg.mxu0
        %312 = vst [vmem:[%s237] sm:$0xff] %v306
        %313 = vst [vmem:[%s237 + $0x8] sm:$0xff] %v308
        %s314 = smul.u32 2, %s16
        %p315 = scmp.lt.s32.totalorder %s314, 3
        %s316 = scalar_select %p315, %s314, 3
        %s317 = smul.addr %s316, 8
        %s318 = scalar_lea.vmem %s3, %s317
        // Predicated region
        $region79: #{_lambda_.18} parent=65 // pred_check
          %p319 = pneg %p102
        $region80: #{_lambda_.18} parent=65 // pred_check_branch
          %321 = sbr.rel (%p319) target = $region82
        $region81: #{_lambda_.18} parent=65 // pred_region
          %s322 = smul.u32 2, %s16
        $region82: #{_lambda_.18} parent=65 // pred_fallthru
          _
      $region66: #{_lambda_.18} parent=5 // pred_fallthru
        _
      %p323 = scmp.le.s32.totalorder 2, %s11
      // Predicated region
      $region83: #{_lambda_.18} parent=5 // pred_check
        %p324 = pneg %p323
      $region84: #{_lambda_.18} parent=5 // pred_check_branch
        %326 = sbr.rel (%p324) target = $region86
      $region85: #{_lambda_.18} parent=5 // pred_region
        %s327 = ssub.s32 %s11, 2
        // Predicated region
        $region87: #{_lambda_.18} parent=85 // pred_check
          %p328 = pneg %p108
        $region88: #{_lambda_.18} parent=85 // pred_check_branch
          %330 = sbr.rel (%p328) target = $region90
        $region89: #{_lambda_.18} parent=85 // pred_region
          %s331 = smul.u32 2, %s17
          %p332 = scmp.lt.s32.totalorder %s331, 3
          %s333 = scalar_select %p332, %s331, 3
          %s334 = smul.addr %s333, 8
          %s335 = scalar_lea.vmem %s3, %s334
        $region90: #{_lambda_.18} parent=85 // pred_fallthru
          _
      $region86: #{_lambda_.18} parent=5 // pred_fallthru
        _
    $region6: #{_lambda_.18} parent=1 // loop_footer
      %s15 = sadd.s32 1, %s11
    $region7: #{_lambda_.18} parent=1 // loop_footer_branch
      %10 = sbr.rel target = $region3
    $region8: #{_lambda_.18} parent=1 // loop_exit
      _
    %336 = vsyncpa [#allocation3], 1
    %s337 = scalar_lea.sflag [#allocation3], 1
    %338 = vsyncpa %s337, 1
    %339 = vsyncpa [#allocation6], 1

// kernel: _lambda_.19
$region0: #{_lambda_.19}
  #allocation0 [shape = 'u32[]', space=smem, size = 0x4, offset = 0x4, fixed_abs, tag = 'smem constant byte address 0x4 - core index']
  #allocation1 [shape = 'u32[144,128]{1,0:T(1,128)}', space=vmem, size = 0x12000, scoped, tag = 'internal scratch']
  %s0 = inlined_call_operand.vmem [shape: bf16[24,72], index: 0, kind: input, shape index: {}]
  %s1 = inlined_call_operand.vmem [shape: bf16[72,128], index: 1, kind: input, shape index: {}]
  %s2 = inlined_call_operand.vmem [shape: f32[24,1], index: 2, kind: input, shape index: {}]
  %s3 = inlined_call_operand.vmem [shape: bf16[4,400], index: 3, kind: input, shape index: {}]
  %s4 = inlined_call_operand.vmem [shape: bf16[400,128], index: 4, kind: input, shape index: {}]
  %s5 = inlined_call_operand.vmem [shape: f32[4,1], index: 5, kind: input, shape index: {}]
  %s6 = inlined_call_operand.vmem [shape: f32[24,8], index: 6, kind: input, shape index: {}]
  %s7 = inlined_call_operand.vmem [shape: f32[24,1], index: 7, kind: input, shape index: {}]
  %s8 = inlined_call_operand.vmem [shape: s32[1,128], index: 8, kind: input, shape index: {}]
  %s9 = inlined_call_operand.vmem [shape: f32[8,128], index: 9, kind: input, shape index: {}]
  %s10 = inlined_call_operand.vmem [shape: f32[8,128], index: 10, kind: output, shape index: {}]
  %s11 = sld [smem:[#allocation0]]
  $region50: #{_lambda_.19} parent=0
    _
  %s13 = ssub.s32 1, %s11
  %s14 = scalar_select 0, %s13, %s11
  // Predicated region
  $region2: #{_lambda_.19} parent=0 // pred_check
    _
  $region3: #{_lambda_.19} parent=0 // pred_check_branch
    %16 = sbr.rel (0) target = $region5
  $region4: #{_lambda_.19} parent=0 // pred_region
    _
  $region5: #{_lambda_.19} parent=0 // pred_fallthru
    _
  // Predicated region
  $region6: #{_lambda_.19} parent=0 // pred_check
    _
  $region7: #{_lambda_.19} parent=0 // pred_check_branch
    %18 = sbr.rel (0) target = $region9
  $region8: #{_lambda_.19} parent=0 // pred_region
    _
  $region9: #{_lambda_.19} parent=0 // pred_fallthru
    _
  // Predicated region
  $region10: #{_lambda_.19} parent=0 // pred_check
    _
  $region11: #{_lambda_.19} parent=0 // pred_check_branch
    %20 = sbr.rel (0) target = $region13
  $region12: #{_lambda_.19} parent=0 // pred_region
    _
  $region13: #{_lambda_.19} parent=0 // pred_fallthru
    _
  // Predicated region
  $region14: #{_lambda_.19} parent=0 // pred_check
    _
  $region15: #{_lambda_.19} parent=0 // pred_check_branch
    %22 = sbr.rel (0) target = $region17
  $region16: #{_lambda_.19} parent=0 // pred_region
    _
  $region17: #{_lambda_.19} parent=0 // pred_fallthru
    _
  // Predicated region
  $region18: #{_lambda_.19} parent=0 // pred_check
    _
  $region19: #{_lambda_.19} parent=0 // pred_check_branch
    %24 = sbr.rel (0) target = $region21
  $region20: #{_lambda_.19} parent=0 // pred_region
    _
  $region21: #{_lambda_.19} parent=0 // pred_fallthru
    _
  // Predicated region
  $region22: #{_lambda_.19} parent=0 // pred_check
    _
  $region23: #{_lambda_.19} parent=0 // pred_check_branch
    %26 = sbr.rel (0) target = $region25
  $region24: #{_lambda_.19} parent=0 // pred_region
    _
  $region25: #{_lambda_.19} parent=0 // pred_fallthru
    _
  // Predicated region
  $region26: #{_lambda_.19} parent=0 // pred_check
    _
  $region27: #{_lambda_.19} parent=0 // pred_check_branch
    %28 = sbr.rel (0) target = $region29
  $region28: #{_lambda_.19} parent=0 // pred_region
    _
  $region29: #{_lambda_.19} parent=0 // pred_fallthru
    _
  // Predicated region
  $region30: #{_lambda_.19} parent=0 // pred_check
    _
  $region31: #{_lambda_.19} parent=0 // pred_check_branch
    %30 = sbr.rel (0) target = $region33
  $region32: #{_lambda_.19} parent=0 // pred_region
    _
  $region33: #{_lambda_.19} parent=0 // pred_fallthru
    _
  // Predicated region
  $region34: #{_lambda_.19} parent=0 // pred_check
    _
  $region35: #{_lambda_.19} parent=0 // pred_check_branch
    %32 = sbr.rel (0) target = $region37
  $region36: #{_lambda_.19} parent=0 // pred_region
    _
  $region37: #{_lambda_.19} parent=0 // pred_fallthru
    _
  // Predicated region
  $region38: #{_lambda_.19} parent=0 // pred_check
    _
  $region39: #{_lambda_.19} parent=0 // pred_check_branch
    %34 = sbr.rel (0) target = $region41
  $region40: #{_lambda_.19} parent=0 // pred_region
    _
  $region41: #{_lambda_.19} parent=0 // pred_fallthru
    _
  %v36 = vld [vmem:[%s9] sm:$0xff]
  %v37 = vld [vmem:[%s0] sm:$0xf]
  %v38 = vld [vmem:[%s0 + $0x4] sm:$0xf]
  %v39 = vld [vmem:[%s0 + $0x8] sm:$0xf]
  %v40 = vld [vmem:[%s1] sm:$0xf]
  %v41 = vld [vmem:[%s1 + $0x4] sm:$0xf]
  %v42 = vld [vmem:[%s1 + $0x8] sm:$0xf]
  %v43 = vld [vmem:[%s1 + $0xc] sm:$0xf]
  %v44 = vld [vmem:[%s1 + $0x10] sm:$0xf]
  %v45 = vld [vmem:[%s1 + $0x14] sm:$0xf]
  %v46 = vld [vmem:[%s1 + $0x18] sm:$0xf]
  %v47 = vld [vmem:[%s1 + $0x1c] sm:$0xf]
  %v48 = vld [vmem:[%s1 + $0x20] sm:$0xf]
  %v49 = vld [vmem:[%s2] sm:$0xff]
  %v50 = vld [vmem:[%s2 + $0x8] sm:$0xff]
  %v51 = vld [vmem:[%s2 + $0x10] sm:$0xff]
  %53 = vset.pattern.permute.xlu0 0
  %54 = vperm.xlu0 %53, %v49
  %v55 = vpop.permute.xlu0 %54
  %58 = vset.pattern.permute.xlu0 0
  %59 = vperm.xlu0 %58, %v50
  %v60 = vpop.permute.xlu0 %59
  %63 = vset.pattern.permute.xlu0 0
  %64 = vperm.xlu0 %63, %v51
  %v65 = vpop.permute.xlu0 %64
  %v70 = vunpack.c.l.b16 %v37
  %v71 = vunpack.c.l.b16 %v38
  %v72 = vunpack.c.l.b16 %v39
  %v73 = vpack.c.b16 %v71, %v70
  %v74 = vpack.c.b16 %v72, %v72
  %v84 = vunpack.c.l.b16 %v40
  %v85 = vunpack.c.l.b16 %v41
  %v86 = vunpack.c.l.b16 %v42
  %v87 = vunpack.c.l.b16 %v43
  %v88 = vunpack.c.l.b16 %v44
  %v89 = vunpack.c.l.b16 %v45
  %v90 = vunpack.c.l.b16 %v46
  %v91 = vunpack.c.l.b16 %v47
  %v92 = vunpack.c.l.b16 %v48
  %v93 = vpack.c.b16 %v85, %v84
  %v94 = vpack.c.b16 %v87, %v86
  %v95 = vpack.c.b16 %v89, %v88
  %v96 = vpack.c.b16 %v91, %v90
  %v97 = vpack.c.b16 %v92, %v92
  %vm102 = vcmask 588800
  %v104 = vsel %vm102, %v73, 0
  %v107 = vsel %vm102, %v74, 0
  %vm109 = vcmask 1043456
  %v111 = vsel %vm109, %v97, 0
  %113 = vmatprep.subr.bf16.mxu0 0
  %114 = vmatpush1.bf16.msra.mxu0 0
  %115 = vmatprep.subr.bf16.mxu0 0
  %116 = vmatpush1.bf16.msra.mxu0 0
  %117 = vmatprep.subr.bf16.mxu0 0
  %118 = vmatpush1.bf16.msra.mxu0 0
  %119 = vmatprep.subr.bf16.mxu0 0
  %120 = vmatpush1.bf16.msra.mxu0 %v111
  %121 = vmatprep.subr.bf16.mxu0 0
  %122 = vmatpush1.bf16.msra.mxu0 %v96
  %123 = vmatprep.subr.bf16.mxu0 0
  %124 = vmatpush1.bf16.msra.mxu0 %v95
  %125 = vmatprep.subr.bf16.mxu0 0
  %126 = vmatpush1.bf16.msra.mxu0 %v94
  %127 = vmatprep.subr.bf16.mxu0 0
  %128 = vmatpush1.bf16.msra.mxu0 %v93
  %129 = vmatprep.subr.bf16.mxu0 0
  %130 = vmatpush2.bf16.msra.mxu0 0
  %131 = vmatprep.subr.bf16.mxu0 0
  %132 = vmatpush2.bf16.msra.mxu0 0
  %133 = vmatprep.subr.bf16.mxu0 0
  %134 = vmatpush2.bf16.msra.mxu0 0
  %135 = vmatprep.subr.bf16.mxu0 0
  %136 = vmatpush2.bf16.msra.mxu0 0
  %137 = vmatprep.subr.bf16.mxu0 0
  %138 = vmatpush2.bf16.msra.mxu0 0
  %139 = vmatprep.subr.bf16.mxu0 0
  %140 = vmatpush2.bf16.msra.mxu0 0
  %141 = vmatprep.subr.bf16.mxu0 0
  %142 = vmatpush2.bf16.msra.mxu0 0
  %143 = vmatprep.subr.bf16.mxu0 0
  %144 = vmatpush2.bf16.msra.mxu0 0
  %145 = vmatprep.mubr.bf16.mxu0 0
  %146 = vmatmul.mubr.bf16.gmra.mxu0 %v104
  %v147 = vpop.f32.mrf.mxu0
  %v148 = vadd.f32 %v55, %v147
  %v149 = vpop.f32.mrf.mxu0
  %v150 = vpop.f32.mrf.mxu0
  %v151 = vadd.f32 %v60, %v150
  %v152 = vpop.f32.mrf.mxu0
  %153 = vmatprep.mubr.bf16.mxu0 0
  %154 = vmatmul.mubr.bf16.gmra.mxu0 %v107
  %v155 = vpop.f32.mrf.mxu0
  %v156 = vadd.f32 %v65, %v155
  %v157 = vpop.f32.mrf.mxu0
  %v158 = vpop.f32.mrf.mxu0
  %v159 = vpop.f32.mrf.mxu0
  %160 = vdwg.mxu0
  %v161 = vld [vmem:[%s3] sm:$0xff]
  %v162 = vld [vmem:[%s4] sm:$0xf]
  %v163 = vld [vmem:[%s4 + $0x4] sm:$0xf]
  %v164 = vld [vmem:[%s4 + $0x8] sm:$0xf]
  %v165 = vld [vmem:[%s4 + $0xc] sm:$0xf]
  %v166 = vld [vmem:[%s4 + $0x10] sm:$0xf]
  %v167 = vld [vmem:[%s4 + $0x14] sm:$0xf]
  %v168 = vld [vmem:[%s4 + $0x18] sm:$0xf]
  %v169 = vld [vmem:[%s4 + $0x1c] sm:$0xf]
  %v170 = vld [vmem:[%s4 + $0x20] sm:$0xf]
  %v171 = vld [vmem:[%s4 + $0x24] sm:$0xf]
  %v172 = vld [vmem:[%s4 + $0x28] sm:$0xf]
  %v173 = vld [vmem:[%s4 + $0x2c] sm:$0xf]
  %v174 = vld [vmem:[%s4 + $0x30] sm:$0xf]
  %v175 = vld [vmem:[%s4 + $0x34] sm:$0xf]
  %v176 = vld [vmem:[%s4 + $0x38] sm:$0xf]
  %v177 = vld [vmem:[%s4 + $0x3c] sm:$0xf]
  %v178 = vld [vmem:[%s4 + $0x40] sm:$0xf]
  %v179 = vld [vmem:[%s4 + $0x44] sm:$0xf]
  %v180 = vld [vmem:[%s4 + $0x48] sm:$0xf]
  %v181 = vld [vmem:[%s4 + $0x4c] sm:$0xf]
  %v182 = vld [vmem:[%s4 + $0x50] sm:$0xf]
  %v183 = vld [vmem:[%s4 + $0x54] sm:$0xf]
  %v184 = vld [vmem:[%s4 + $0x58] sm:$0xf]
  %v185 = vld [vmem:[%s4 + $0x5c] sm:$0xf]
  %v186 = vld [vmem:[%s4 + $0x60] sm:$0xf]
  %v187 = vld [vmem:[%s4 + $0x64] sm:$0xf]
  %v188 = vld [vmem:[%s4 + $0x68] sm:$0xf]
  %v189 = vld [vmem:[%s4 + $0x6c] sm:$0xf]
  %v190 = vld [vmem:[%s4 + $0x70] sm:$0xf]
  %v191 = vld [vmem:[%s4 + $0x74] sm:$0xf]
  %v192 = vld [vmem:[%s4 + $0x78] sm:$0xf]
  %v193 = vld [vmem:[%s4 + $0x7c] sm:$0xf]
  %v194 = vld [vmem:[%s4 + $0x80] sm:$0xf]
  %v195 = vld [vmem:[%s4 + $0x84] sm:$0xf]
  %v196 = vld [vmem:[%s4 + $0x88] sm:$0xf]
  %v197 = vld [vmem:[%s4 + $0x8c] sm:$0xf]
  %v198 = vld [vmem:[%s4 + $0x90] sm:$0xf]
  %v199 = vld [vmem:[%s4 + $0x94] sm:$0xf]
  %v200 = vld [vmem:[%s4 + $0x98] sm:$0xf]
  %v201 = vld [vmem:[%s4 + $0x9c] sm:$0xf]
  %v202 = vld [vmem:[%s4 + $0xa0] sm:$0xf]
  %v203 = vld [vmem:[%s4 + $0xa4] sm:$0xf]
  %v204 = vld [vmem:[%s4 + $0xa8] sm:$0xf]
  %v205 = vld [vmem:[%s4 + $0xac] sm:$0xf]
  %v206 = vld [vmem:[%s4 + $0xb0] sm:$0xf]
  %v207 = vld [vmem:[%s4 + $0xb4] sm:$0xf]
  %v208 = vld [vmem:[%s4 + $0xb8] sm:$0xf]
  %v209 = vld [vmem:[%s4 + $0xbc] sm:$0xf]
  %v210 = vld [vmem:[%s4 + $0xc0] sm:$0xf]
  %v211 = vld [vmem:[%s4 + $0xc4] sm:$0xf]
  %v212 = vld [vmem:[%s5] sm:$0xf]
  %214 = vset.pattern.permute.xlu0 0
  %215 = vperm.xlu0 %214, %v212
  %v216 = vpop.permute.xlu0 %215
  %v219 = vcombine.high %v161, %v161
  %v221 = vunpack.c.l.s4 1983009808
  %v222 = vunpack.c.0.s8 %v221
  %v223 = vlaneseq
  %v224 = vshrl.u32 %v223, 7
  %v225 = vsub.s32 %v222, %v224
  %v226 = vrot.slane %v161, %v225
  %v228 = vunpack.c.l.s4 1983009808
  %v229 = vunpack.c.0.s8 %v228
  %v230 = vlaneseq
  %v231 = vshrl.u32 %v230, 7
  %v232 = vsub.s32 %v229, %v231
  %v233 = vrot.slane %v219, %v232
  %v234 = vcombine.high %v226, %v226
  %v235 = vcombine.high %v233, %v233
  %v289 = vunpack.c.l.b16 %v162
  %v290 = vunpack.c.l.b16 %v163
  %v291 = vunpack.c.l.b16 %v164
  %v292 = vunpack.c.l.b16 %v165
  %v293 = vunpack.c.l.b16 %v166
  %v294 = vunpack.c.l.b16 %v167
  %v295 = vunpack.c.l.b16 %v168
  %v296 = vunpack.c.l.b16 %v169
  %v297 = vunpack.c.l.b16 %v170
  %v298 = vunpack.c.l.b16 %v171
  %v299 = vunpack.c.l.b16 %v172
  %v300 = vunpack.c.l.b16 %v173
  %v301 = vunpack.c.l.b16 %v174
  %v302 = vunpack.c.l.b16 %v175
  %v303 = vunpack.c.l.b16 %v176
  %v304 = vunpack.c.l.b16 %v177
  %v305 = vunpack.c.l.b16 %v178
  %v306 = vunpack.c.l.b16 %v179
  %v307 = vunpack.c.l.b16 %v180
  %v308 = vunpack.c.l.b16 %v181
  %v309 = vunpack.c.l.b16 %v182
  %v310 = vunpack.c.l.b16 %v183
  %v311 = vunpack.c.l.b16 %v184
  %v312 = vunpack.c.l.b16 %v185
  %v313 = vunpack.c.l.b16 %v186
  %v314 = vunpack.c.l.b16 %v187
  %v315 = vunpack.c.l.b16 %v188
  %v316 = vunpack.c.l.b16 %v189
  %v317 = vunpack.c.l.b16 %v190
  %v318 = vunpack.c.l.b16 %v191
  %v319 = vunpack.c.l.b16 %v192
  %v320 = vunpack.c.l.b16 %v193
  %v321 = vunpack.c.l.b16 %v194
  %v322 = vunpack.c.l.b16 %v195
  %v323 = vunpack.c.l.b16 %v196
  %v324 = vunpack.c.l.b16 %v197
  %v325 = vunpack.c.l.b16 %v198
  %v326 = vunpack.c.l.b16 %v199
  %v327 = vunpack.c.l.b16 %v200
  %v328 = vunpack.c.l.b16 %v201
  %v329 = vunpack.c.l.b16 %v202
  %v330 = vunpack.c.l.b16 %v203
  %v331 = vunpack.c.l.b16 %v204
  %v332 = vunpack.c.l.b16 %v205
  %v333 = vunpack.c.l.b16 %v206
  %v334 = vunpack.c.l.b16 %v207
  %v335 = vunpack.c.l.b16 %v208
  %v336 = vunpack.c.l.b16 %v209
  %v337 = vunpack.c.l.b16 %v210
  %v338 = vunpack.c.l.b16 %v211
  %v339 = vpack.c.b16 %v290, %v289
  %v340 = vpack.c.b16 %v292, %v291
  %v341 = vpack.c.b16 %v294, %v293
  %v342 = vpack.c.b16 %v296, %v295
  %v343 = vpack.c.b16 %v298, %v297
  %v344 = vpack.c.b16 %v300, %v299
  %v345 = vpack.c.b16 %v302, %v301
  %v346 = vpack.c.b16 %v304, %v303
  %v347 = vpack.c.b16 %v306, %v305
  %v348 = vpack.c.b16 %v308, %v307
  %v349 = vpack.c.b16 %v310, %v309
  %v350 = vpack.c.b16 %v312, %v311
  %v351 = vpack.c.b16 %v314, %v313
  %v352 = vpack.c.b16 %v316, %v315
  %v353 = vpack.c.b16 %v318, %v317
  %v354 = vpack.c.b16 %v320, %v319
  %v355 = vpack.c.b16 %v322, %v321
  %v356 = vpack.c.b16 %v324, %v323
  %v357 = vpack.c.b16 %v326, %v325
  %v358 = vpack.c.b16 %v328, %v327
  %v359 = vpack.c.b16 %v330, %v329
  %v360 = vpack.c.b16 %v332, %v331
  %v361 = vpack.c.b16 %v334, %v333
  %v362 = vpack.c.b16 %v336, %v335
  %v363 = vpack.c.b16 %v338, %v337
  %vm389 = vcmask 130048
  %v391 = vsel %vm389, %v235, 0
  %393 = vmatprep.subr.bf16.mxu0 0
  %394 = vmatpush1.bf16.msra.mxu0 %v346
  %395 = vmatprep.subr.bf16.mxu0 0
  %396 = vmatpush1.bf16.msra.mxu0 %v345
  %397 = vmatprep.subr.bf16.mxu0 0
  %398 = vmatpush1.bf16.msra.mxu0 %v344
  %399 = vmatprep.subr.bf16.mxu0 0
  %400 = vmatpush1.bf16.msra.mxu0 %v343
  %401 = vmatprep.subr.bf16.mxu0 0
  %402 = vmatpush1.bf16.msra.mxu0 %v342
  %403 = vmatprep.subr.bf16.mxu0 0
  %404 = vmatpush1.bf16.msra.mxu0 %v341
  %405 = vmatprep.subr.bf16.mxu0 0
  %406 = vmatpush1.bf16.msra.mxu0 %v340
  %407 = vmatprep.subr.bf16.mxu0 0
  %408 = vmatpush1.bf16.msra.mxu0 %v339
  %409 = vmatprep.subr.bf16.mxu0 0
  %410 = vmatpush2.bf16.msra.mxu0 %v354
  %411 = vmatprep.subr.bf16.mxu0 0
  %412 = vmatpush2.bf16.msra.mxu0 %v353
  %413 = vmatprep.subr.bf16.mxu0 0
  %414 = vmatpush2.bf16.msra.mxu0 %v352
  %415 = vmatprep.subr.bf16.mxu0 0
  %416 = vmatpush2.bf16.msra.mxu0 %v351
  %417 = vmatprep.subr.bf16.mxu0 0
  %418 = vmatpush2.bf16.msra.mxu0 %v350
  %419 = vmatprep.subr.bf16.mxu0 0
  %420 = vmatpush2.bf16.msra.mxu0 %v349
  %421 = vmatprep.subr.bf16.mxu0 0
  %422 = vmatpush2.bf16.msra.mxu0 %v348
  %423 = vmatprep.subr.bf16.mxu0 0
  %424 = vmatpush2.bf16.msra.mxu0 %v347
  %425 = vmatprep.mubr.bf16.mxu0 %v234
  %426 = vmatmul.mubr.bf16.gmra.mxu0 %v226
  %v427 = vpop.f32.mrf.mxu0
  %v428 = vadd.f32 %v216, %v427
  %v429 = vpop.f32.mrf.mxu0
  %v430 = vpop.f32.mrf.mxu0
  %v431 = vpop.f32.mrf.mxu0
  %432 = vdwg.mxu0
  %433 = vmatprep.subr.bf16.mxu0 0
  %434 = vmatpush1.bf16.msra.mxu0 %v362
  %435 = vmatprep.subr.bf16.mxu0 0
  %436 = vmatpush1.bf16.msra.mxu0 %v361
  %437 = vmatprep.subr.bf16.mxu0 0
  %438 = vmatpush1.bf16.msra.mxu0 %v360
  %439 = vmatprep.subr.bf16.mxu0 0
  %440 = vmatpush1.bf16.msra.mxu0 %v359
  %441 = vmatprep.subr.bf16.mxu0 0
  %442 = vmatpush1.bf16.msra.mxu0 %v358
  %443 = vmatprep.subr.bf16.mxu0 0
  %444 = vmatpush1.bf16.msra.mxu0 %v357
  %445 = vmatprep.subr.bf16.mxu0 0
  %446 = vmatpush1.bf16.msra.mxu0 %v356
  %447 = vmatprep.subr.bf16.mxu0 0
  %448 = vmatpush1.bf16.msra.mxu0 %v355
  %449 = vmatprep.subr.bf16.mxu0 0
  %450 = vmatpush2.bf16.msra.mxu0 0
  %451 = vmatprep.subr.bf16.mxu0 0
  %452 = vmatpush2.bf16.msra.mxu0 0
  %453 = vmatprep.subr.bf16.mxu0 0
  %454 = vmatpush2.bf16.msra.mxu0 0
  %455 = vmatprep.subr.bf16.mxu0 0
  %456 = vmatpush2.bf16.msra.mxu0 0
  %457 = vmatprep.subr.bf16.mxu0 0
  %458 = vmatpush2.bf16.msra.mxu0 0
  %459 = vmatprep.subr.bf16.mxu0 0
  %460 = vmatpush2.bf16.msra.mxu0 0
  %461 = vmatprep.subr.bf16.mxu0 0
  %462 = vmatpush2.bf16.msra.mxu0 0
  %463 = vmatprep.subr.bf16.mxu0 0
  %464 = vmatpush2.bf16.msra.mxu0 %v363
  %465 = vmatprep.mubr.bf16.mxu0 %v391
  %466 = vmatmul.mubr.bf16.gmra.mxu0 %v233
  %v467 = vpop.f32.mrf.mxu0
  %v468 = vadd.f32 %v428, %v467
  %v469 = vpop.f32.mrf.mxu0
  %v470 = vpop.f32.mrf.mxu0
  %v471 = vpop.f32.mrf.mxu0
  %472 = vdwg.mxu0
  %v473 = vsel %vm109, %v468, inf
  %474 = vmin.xlane.f32.xlu0 %v473
  %v475 = vpop.xlane.xlu0 %474
  %v476 = vrot.slane %v475, 4
  %v477 = vmin.f32 %v475, %v476
  %v478 = vrot.slane %v477, 2
  %v479 = vmin.f32 %v477, %v478
  %v480 = vrot.slane %v479, 1
  %v481 = vmin.f32 %v479, %v480
  %s482 = vtos %v481
  %v483 = vsel %vm109, %v468, -inf
  %484 = vmax.xlane.f32.xlu0 %v483
  %v485 = vpop.xlane.xlu0 %484
  %v486 = vrot.slane %v485, 4
  %v487 = vmax.f32 %v485, %v486
  %v488 = vrot.slane %v487, 2
  %v489 = vmax.f32 %v487, %v488
  %v490 = vrot.slane %v489, 1
  %v491 = vmax.f32 %v489, %v490
  %s492 = vtos %v491
  %v493 = vstv %s482
  %v494 = vsub.f32 %v468, %v493
  %s495 = ssub.f32 %s492, %s482
  %v496 = vstv %s495
  %v497 = vrcp.pop %v496
  %v498 = vmul.f32 %v494, %v497
  %v499 = vmul.f32 %v498, 2.0
  %v500 = vsub.f32 %v499, 1.0
  %v501 = vld [vmem:[%s8] sm:$0x1]
  %v502 = vlaneseq
  %v503 = vshrl.u32 %v502, 7
  %v504 = vadd.s32 %v503, 8
  %v505 = vadd.s32 %v503, 16
  %v506 = vadd.s32 %v503, 24
  %v507 = vadd.s32 %v503, 32
  %v508 = vadd.s32 %v503, 40
  %v509 = vadd.s32 %v503, 48
  %v510 = vadd.s32 %v503, 56
  %v511 = vadd.s32 %v503, 64
  %v512 = vadd.s32 %v503, 72
  %v513 = vadd.s32 %v503, 80
  %v514 = vadd.s32 %v503, 88
  %v515 = vadd.s32 %v503, 96
  %v516 = vadd.s32 %v503, 104
  %v517 = vadd.s32 %v503, 112
  %v518 = vadd.s32 %v503, 120
  %v519 = vadd.f32 %v500, 1.0
  %v520 = vmul.f32 %v519, 8.0
  %v521 = vsub.f32 %v520, 1.0
  %v522 = vmul.f32 %v521, 0.5
  %v523 = vfloor.f32 %v522
  %v524 = vadd.f32 %v523, 1.0
  %v525 = vsub.f32 %v524, %v522
  %v527 = vrot.slane %v525, 1
  %v529 = vmul.f32 %v525, %v527
  %v530 = vsub.f32 %v522, %v523
  %v531 = vmul.f32 %v530, %v527
  %v533 = vrot.slane %v530, 1
  %v535 = vmul.f32 %v525, %v533
  %v536 = vmul.f32 %v530, %v533
  %vm537 = vcmp.ge.f32.partialorder %v523, 0.0
  %vm538 = vcmp.le.f32.partialorder %v523, 7.0
  %vm539 = vmand %vm537, %vm538
  %v540 = vsel %vm537, 1, 0
  %v541 = vrot.slane %v540, 1
  %vm542 = vcmp.ne.s32.totalorder %v541, 0
  %vm543 = vmand %vm539, %vm542
  %v544 = vsel %vm538, 1, 0
  %v545 = vrot.slane %v544, 1
  %vm546 = vcmp.ne.s32.totalorder %v545, 0
  %vm547 = vmand %vm543, %vm546
  %v548 = vmax.f32 %v523, 0.0
  %v549 = vmin.f32 %v548, 7.0
  %v550 = vcvt.f32.s32.to.zero.pseudo %v549
  %v551 = vmul.u32 %v550, 8
  %v553 = vunpack.c.l.s4 1966171168
  %v554 = vunpack.c.0.s8 %v553
  %v555 = vlaneseq
  %v556 = vshrl.u32 %v555, 7
  %v557 = vsub.s32 %v554, %v556
  %v558 = vrot.slane %v551, %v557
  %v559 = vcombine.high %v558, %v558
  %v561 = vunpack.c.l.s4 1966171168
  %v562 = vunpack.c.0.s8 %v561
  %v563 = vlaneseq
  %v564 = vshrl.u32 %v563, 7
  %v565 = vsub.s32 %v562, %v564
  %v566 = vrot.slane %v559, %v565
  %v567 = vadd.s32 %v501, %v566
  %v568 = vadd.s32 %v567, %v550
  %v569 = vlaneseq
  %v570 = vshrl.u32 %v569, 7
  %v571 = vsub.s32 0, %v570
  %v572 = vrot.slane %v568, %v571
  %vm573 = vcmp.eq.s32.totalorder %v503, %v572
  %vm574 = vcmp.eq.s32.totalorder %v504, %v572
  %vm575 = vcmp.eq.s32.totalorder %v505, %v572
  %vm576 = vcmp.eq.s32.totalorder %v506, %v572
  %vm577 = vcmp.eq.s32.totalorder %v507, %v572
  %vm578 = vcmp.eq.s32.totalorder %v508, %v572
  %vm579 = vcmp.eq.s32.totalorder %v509, %v572
  %vm580 = vcmp.eq.s32.totalorder %v510, %v572
  %vm581 = vcmp.eq.s32.totalorder %v511, %v572
  %vm582 = vcmp.eq.s32.totalorder %v512, %v572
  %vm583 = vcmp.eq.s32.totalorder %v513, %v572
  %vm584 = vcmp.eq.s32.totalorder %v514, %v572
  %vm585 = vcmp.eq.s32.totalorder %v515, %v572
  %vm586 = vcmp.eq.s32.totalorder %v516, %v572
  %vm587 = vcmp.eq.s32.totalorder %v517, %v572
  %vm588 = vcmp.eq.s32.totalorder %v518, %v572
  %v589 = vsel %vm547, 1, 0
  %v590 = vlaneseq
  %v591 = vshrl.u32 %v590, 7
  %v592 = vsub.s32 0, %v591
  %v593 = vrot.slane %v589, %v592
  %vm594 = vcmp.eq.s32.totalorder %v593, 1
  %vm595 = vmand %vm573, %vm594
  %vm596 = vmand %vm574, %vm594
  %vm597 = vmand %vm575, %vm594
  %vm598 = vmand %vm576, %vm594
  %vm599 = vmand %vm577, %vm594
  %vm600 = vmand %vm578, %vm594
  %vm601 = vmand %vm579, %vm594
  %vm602 = vmand %vm580, %vm594
  %vm603 = vmand %vm581, %vm594
  %vm604 = vmand %vm582, %vm594
  %vm605 = vmand %vm583, %vm594
  %vm606 = vmand %vm584, %vm594
  %vm607 = vmand %vm585, %vm594
  %vm608 = vmand %vm586, %vm594
  %vm609 = vmand %vm587, %vm594
  %vm610 = vmand %vm588, %vm594
  %v611 = vlaneseq
  %v612 = vshrl.u32 %v611, 7
  %v613 = vsub.s32 0, %v612
  %v614 = vrot.slane %v529, %v613
  %v615 = vsel %vm595, %v614, 0.0
  %v616 = vsel %vm596, %v614, 0.0
  %v617 = vsel %vm597, %v614, 0.0
  %v618 = vsel %vm598, %v614, 0.0
  %v619 = vsel %vm599, %v614, 0.0
  %v620 = vsel %vm600, %v614, 0.0
  %v621 = vsel %vm601, %v614, 0.0
  %v622 = vsel %vm602, %v614, 0.0
  %v623 = vsel %vm603, %v614, 0.0
  %v624 = vsel %vm604, %v614, 0.0
  %v625 = vsel %vm605, %v614, 0.0
  %v626 = vsel %vm606, %v614, 0.0
  %v627 = vsel %vm607, %v614, 0.0
  %v628 = vsel %vm608, %v614, 0.0
  %v629 = vsel %vm609, %v614, 0.0
  %v630 = vsel %vm610, %v614, 0.0
  %v631 = vadd.f32 %v615, 0.0
  %v632 = vadd.f32 %v616, 0.0
  %v633 = vadd.f32 %v617, 0.0
  %v634 = vadd.f32 %v618, 0.0
  %v635 = vadd.f32 %v619, 0.0
  %v636 = vadd.f32 %v620, 0.0
  %v637 = vadd.f32 %v621, 0.0
  %v638 = vadd.f32 %v622, 0.0
  %v639 = vadd.f32 %v623, 0.0
  %v640 = vadd.f32 %v624, 0.0
  %v641 = vadd.f32 %v625, 0.0
  %v642 = vadd.f32 %v626, 0.0
  %v643 = vadd.f32 %v627, 0.0
  %v644 = vadd.f32 %v628, 0.0
  %v645 = vadd.f32 %v629, 0.0
  %v646 = vadd.f32 %v630, 0.0
  %vm647 = vcmp.ge.f32.partialorder %v524, 0.0
  %vm648 = vcmp.le.f32.partialorder %v524, 7.0
  %vm649 = vmand %vm647, %vm648
  %vm650 = vmand %vm649, %vm542
  %vm651 = vmand %vm650, %vm546
  %v652 = vmax.f32 %v524, 0.0
  %v653 = vmin.f32 %v652, 7.0
  %v654 = vcvt.f32.s32.to.zero.pseudo %v653
  %v655 = vadd.s32 %v567, %v654
  %v656 = vlaneseq
  %v657 = vshrl.u32 %v656, 7
  %v658 = vsub.s32 0, %v657
  %v659 = vrot.slane %v655, %v658
  %vm660 = vcmp.eq.s32.totalorder %v503, %v659
  %vm661 = vcmp.eq.s32.totalorder %v504, %v659
  %vm662 = vcmp.eq.s32.totalorder %v505, %v659
  %vm663 = vcmp.eq.s32.totalorder %v506, %v659
  %vm664 = vcmp.eq.s32.totalorder %v507, %v659
  %vm665 = vcmp.eq.s32.totalorder %v508, %v659
  %vm666 = vcmp.eq.s32.totalorder %v509, %v659
  %vm667 = vcmp.eq.s32.totalorder %v510, %v659
  %vm668 = vcmp.eq.s32.totalorder %v511, %v659
  %vm669 = vcmp.eq.s32.totalorder %v512, %v659
  %vm670 = vcmp.eq.s32.totalorder %v513, %v659
  %vm671 = vcmp.eq.s32.totalorder %v514, %v659
  %vm672 = vcmp.eq.s32.totalorder %v515, %v659
  %vm673 = vcmp.eq.s32.totalorder %v516, %v659
  %vm674 = vcmp.eq.s32.totalorder %v517, %v659
  %vm675 = vcmp.eq.s32.totalorder %v518, %v659
  %v676 = vsel %vm651, 1, 0
  %v677 = vlaneseq
  %v678 = vshrl.u32 %v677, 7
  %v679 = vsub.s32 0, %v678
  %v680 = vrot.slane %v676, %v679
  %vm681 = vcmp.eq.s32.totalorder %v680, 1
  %vm682 = vmand %vm660, %vm681
  %vm683 = vmand %vm661, %vm681
  %vm684 = vmand %vm662, %vm681
  %vm685 = vmand %vm663, %vm681
  %vm686 = vmand %vm664, %vm681
  %vm687 = vmand %vm665, %vm681
  %vm688 = vmand %vm666, %vm681
  %vm689 = vmand %vm667, %vm681
  %vm690 = vmand %vm668, %vm681
  %vm691 = vmand %vm669, %vm681
  %vm692 = vmand %vm670, %vm681
  %vm693 = vmand %vm671, %vm681
  %vm694 = vmand %vm672, %vm681
  %vm695 = vmand %vm673, %vm681
  %vm696 = vmand %vm674, %vm681
  %vm697 = vmand %vm675, %vm681
  %v698 = vlaneseq
  %v699 = vshrl.u32 %v698, 7
  %v700 = vsub.s32 0, %v699
  %v701 = vrot.slane %v531, %v700
  %v702 = vsel %vm682, %v701, 0.0
  %v703 = vsel %vm683, %v701, 0.0
  %v704 = vsel %vm684, %v701, 0.0
  %v705 = vsel %vm685, %v701, 0.0
  %v706 = vsel %vm686, %v701, 0.0
  %v707 = vsel %vm687, %v701, 0.0
  %v708 = vsel %vm688, %v701, 0.0
  %v709 = vsel %vm689, %v701, 0.0
  %v710 = vsel %vm690, %v701, 0.0
  %v711 = vsel %vm691, %v701, 0.0
  %v712 = vsel %vm692, %v701, 0.0
  %v713 = vsel %vm693, %v701, 0.0
  %v714 = vsel %vm694, %v701, 0.0
  %v715 = vsel %vm695, %v701, 0.0
  %v716 = vsel %vm696, %v701, 0.0
  %v717 = vsel %vm697, %v701, 0.0
  %v718 = vadd.f32 %v631, %v702
  %v719 = vadd.f32 %v632, %v703
  %v720 = vadd.f32 %v633, %v704
  %v721 = vadd.f32 %v634, %v705
  %v722 = vadd.f32 %v635, %v706
  %v723 = vadd.f32 %v636, %v707
  %v724 = vadd.f32 %v637, %v708
  %v725 = vadd.f32 %v638, %v709
  %v726 = vadd.f32 %v639, %v710
  %v727 = vadd.f32 %v640, %v711
  %v728 = vadd.f32 %v641, %v712
  %v729 = vadd.f32 %v642, %v713
  %v730 = vadd.f32 %v643, %v714
  %v731 = vadd.f32 %v644, %v715
  %v732 = vadd.f32 %v645, %v716
  %v733 = vadd.f32 %v646, %v717
  %v734 = vsel %vm647, 1, 0
  %v735 = vrot.slane %v734, 1
  %vm736 = vcmp.ne.s32.totalorder %v735, 0
  %vm737 = vmand %vm539, %vm736
  %v738 = vsel %vm648, 1, 0
  %v739 = vrot.slane %v738, 1
  %vm740 = vcmp.ne.s32.totalorder %v739, 0
  %vm741 = vmand %vm737, %vm740
  %v742 = vmul.u32 %v654, 8
  %v744 = vunpack.c.l.s4 1966171168
  %v745 = vunpack.c.0.s8 %v744
  %v746 = vlaneseq
  %v747 = vshrl.u32 %v746, 7
  %v748 = vsub.s32 %v745, %v747
  %v749 = vrot.slane %v742, %v748
  %v750 = vcombine.high %v749, %v749
  %v752 = vunpack.c.l.s4 1966171168
  %v753 = vunpack.c.0.s8 %v752
  %v754 = vlaneseq
  %v755 = vshrl.u32 %v754, 7
  %v756 = vsub.s32 %v753, %v755
  %v757 = vrot.slane %v750, %v756
  %v758 = vadd.s32 %v501, %v757
  %v759 = vadd.s32 %v758, %v550
  %v760 = vlaneseq
  %v761 = vshrl.u32 %v760, 7
  %v762 = vsub.s32 0, %v761
  %v763 = vrot.slane %v759, %v762
  %vm764 = vcmp.eq.s32.totalorder %v503, %v763
  %vm765 = vcmp.eq.s32.totalorder %v504, %v763
  %vm766 = vcmp.eq.s32.totalorder %v505, %v763
  %vm767 = vcmp.eq.s32.totalorder %v506, %v763
  %vm768 = vcmp.eq.s32.totalorder %v507, %v763
  %vm769 = vcmp.eq.s32.totalorder %v508, %v763
  %vm770 = vcmp.eq.s32.totalorder %v509, %v763
  %vm771 = vcmp.eq.s32.totalorder %v510, %v763
  %vm772 = vcmp.eq.s32.totalorder %v511, %v763
  %vm773 = vcmp.eq.s32.totalorder %v512, %v763
  %vm774 = vcmp.eq.s32.totalorder %v513, %v763
  %vm775 = vcmp.eq.s32.totalorder %v514, %v763
  %vm776 = vcmp.eq.s32.totalorder %v515, %v763
  %vm777 = vcmp.eq.s32.totalorder %v516, %v763
  %vm778 = vcmp.eq.s32.totalorder %v517, %v763
  %vm779 = vcmp.eq.s32.totalorder %v518, %v763
  %v780 = vsel %vm741, 1, 0
  %v781 = vlaneseq
  %v782 = vshrl.u32 %v781, 7
  %v783 = vsub.s32 0, %v782
  %v784 = vrot.slane %v780, %v783
  %vm785 = vcmp.eq.s32.totalorder %v784, 1
  %vm786 = vmand %vm764, %vm785
  %vm787 = vmand %vm765, %vm785
  %vm788 = vmand %vm766, %vm785
  %vm789 = vmand %vm767, %vm785
  %vm790 = vmand %vm768, %vm785
  %vm791 = vmand %vm769, %vm785
  %vm792 = vmand %vm770, %vm785
  %vm793 = vmand %vm771, %vm785
  %vm794 = vmand %vm772, %vm785
  %vm795 = vmand %vm773, %vm785
  %vm796 = vmand %vm774, %vm785
  %vm797 = vmand %vm775, %vm785
  %vm798 = vmand %vm776, %vm785
  %vm799 = vmand %vm777, %vm785
  %vm800 = vmand %vm778, %vm785
  %vm801 = vmand %vm779, %vm785
  %v802 = vlaneseq
  %v803 = vshrl.u32 %v802, 7
  %v804 = vsub.s32 0, %v803
  %v805 = vrot.slane %v535, %v804
  %v806 = vsel %vm786, %v805, 0.0
  %v807 = vsel %vm787, %v805, 0.0
  %v808 = vsel %vm788, %v805, 0.0
  %v809 = vsel %vm789, %v805, 0.0
  %v810 = vsel %vm790, %v805, 0.0
  %v811 = vsel %vm791, %v805, 0.0
  %v812 = vsel %vm792, %v805, 0.0
  %v813 = vsel %vm793, %v805, 0.0
  %v814 = vsel %vm794, %v805, 0.0
  %v815 = vsel %vm795, %v805, 0.0
  %v816 = vsel %vm796, %v805, 0.0
  %v817 = vsel %vm797, %v805, 0.0
  %v818 = vsel %vm798, %v805, 0.0
  %v819 = vsel %vm799, %v805, 0.0
  %v820 = vsel %vm800, %v805, 0.0
  %v821 = vsel %vm801, %v805, 0.0
  %v822 = vadd.f32 %v718, %v806
  %v823 = vadd.f32 %v719, %v807
  %v824 = vadd.f32 %v720, %v808
  %v825 = vadd.f32 %v721, %v809
  %v826 = vadd.f32 %v722, %v810
  %v827 = vadd.f32 %v723, %v811
  %v828 = vadd.f32 %v724, %v812
  %v829 = vadd.f32 %v725, %v813
  %v830 = vadd.f32 %v726, %v814
  %v831 = vadd.f32 %v727, %v815
  %v832 = vadd.f32 %v728, %v816
  %v833 = vadd.f32 %v729, %v817
  %v834 = vadd.f32 %v730, %v818
  %v835 = vadd.f32 %v731, %v819
  %v836 = vadd.f32 %v732, %v820
  %v837 = vadd.f32 %v733, %v821
  %vm838 = vmand %vm649, %vm736
  %vm839 = vmand %vm838, %vm740
  %v840 = vadd.s32 %v758, %v654
  %v841 = vlaneseq
  %v842 = vshrl.u32 %v841, 7
  %v843 = vsub.s32 0, %v842
  %v844 = vrot.slane %v840, %v843
  %vm845 = vcmp.eq.s32.totalorder %v503, %v844
  %vm846 = vcmp.eq.s32.totalorder %v504, %v844
  %vm847 = vcmp.eq.s32.totalorder %v505, %v844
  %vm848 = vcmp.eq.s32.totalorder %v506, %v844
  %vm849 = vcmp.eq.s32.totalorder %v507, %v844
  %vm850 = vcmp.eq.s32.totalorder %v508, %v844
  %vm851 = vcmp.eq.s32.totalorder %v509, %v844
  %vm852 = vcmp.eq.s32.totalorder %v510, %v844
  %vm853 = vcmp.eq.s32.totalorder %v511, %v844
  %vm854 = vcmp.eq.s32.totalorder %v512, %v844
  %vm855 = vcmp.eq.s32.totalorder %v513, %v844
  %vm856 = vcmp.eq.s32.totalorder %v514, %v844
  %vm857 = vcmp.eq.s32.totalorder %v515, %v844
  %vm858 = vcmp.eq.s32.totalorder %v516, %v844
  %vm859 = vcmp.eq.s32.totalorder %v517, %v844
  %vm860 = vcmp.eq.s32.totalorder %v518, %v844
  %v861 = vsel %vm839, 1, 0
  %v862 = vlaneseq
  %v863 = vshrl.u32 %v862, 7
  %v864 = vsub.s32 0, %v863
  %v865 = vrot.slane %v861, %v864
  %vm866 = vcmp.eq.s32.totalorder %v865, 1
  %vm867 = vmand %vm845, %vm866
  %vm868 = vmand %vm846, %vm866
  %vm869 = vmand %vm847, %vm866
  %vm870 = vmand %vm848, %vm866
  %vm871 = vmand %vm849, %vm866
  %vm872 = vmand %vm850, %vm866
  %vm873 = vmand %vm851, %vm866
  %vm874 = vmand %vm852, %vm866
  %vm875 = vmand %vm853, %vm866
  %vm876 = vmand %vm854, %vm866
  %vm877 = vmand %vm855, %vm866
  %vm878 = vmand %vm856, %vm866
  %vm879 = vmand %vm857, %vm866
  %vm880 = vmand %vm858, %vm866
  %vm881 = vmand %vm859, %vm866
  %vm882 = vmand %vm860, %vm866
  %v883 = vlaneseq
  %v884 = vshrl.u32 %v883, 7
  %v885 = vsub.s32 0, %v884
  %v886 = vrot.slane %v536, %v885
  %v887 = vsel %vm867, %v886, 0.0
  %v888 = vsel %vm868, %v886, 0.0
  %v889 = vsel %vm869, %v886, 0.0
  %v890 = vsel %vm870, %v886, 0.0
  %v891 = vsel %vm871, %v886, 0.0
  %v892 = vsel %vm872, %v886, 0.0
  %v893 = vsel %vm873, %v886, 0.0
  %v894 = vsel %vm874, %v886, 0.0
  %v895 = vsel %vm875, %v886, 0.0
  %v896 = vsel %vm876, %v886, 0.0
  %v897 = vsel %vm877, %v886, 0.0
  %v898 = vsel %vm878, %v886, 0.0
  %v899 = vsel %vm879, %v886, 0.0
  %v900 = vsel %vm880, %v886, 0.0
  %v901 = vsel %vm881, %v886, 0.0
  %v902 = vsel %vm882, %v886, 0.0
  %v903 = vadd.f32 %v822, %v887
  %v904 = vadd.f32 %v823, %v888
  %v905 = vadd.f32 %v824, %v889
  %v906 = vadd.f32 %v825, %v890
  %v907 = vadd.f32 %v826, %v891
  %v908 = vadd.f32 %v827, %v892
  %v909 = vadd.f32 %v828, %v893
  %v910 = vadd.f32 %v829, %v894
  %v911 = vadd.f32 %v830, %v895
  %v912 = vadd.f32 %v831, %v896
  %v913 = vadd.f32 %v832, %v897
  %v914 = vadd.f32 %v833, %v898
  %v915 = vadd.f32 %v834, %v899
  %v916 = vadd.f32 %v835, %v900
  %v917 = vadd.f32 %v836, %v901
  %v918 = vadd.f32 %v837, %v902
  %919 = vmatprep.subr.mxu0 0.0
  %920 = vmatpush1.msra.mxu0 %v918
  %921 = vmatprep.subr.mxu0 0.0
  %922 = vmatpush1.msra.mxu0 %v917
  %923 = vmatprep.subr.mxu0 0.0
  %924 = vmatpush1.msra.mxu0 %v916
  %925 = vmatprep.subr.mxu0 0.0
  %926 = vmatpush1.msra.mxu0 %v915
  %927 = vmatprep.subr.mxu0 0.0
  %928 = vmatpush1.msra.mxu0 %v914
  %929 = vmatprep.subr.mxu0 0.0
  %930 = vmatpush1.msra.mxu0 %v913
  %931 = vmatprep.subr.mxu0 0.0
  %932 = vmatpush1.msra.mxu0 %v912
  %933 = vmatprep.subr.mxu0 0.0
  %934 = vmatpush1.msra.mxu0 %v911
  %935 = vmatprep.subr.mxu0 0.0
  %936 = vmatpush1.msra.mxu0 %v910
  %937 = vmatprep.subr.mxu0 0.0
  %938 = vmatpush1.msra.mxu0 %v909
  %939 = vmatprep.subr.mxu0 0.0
  %940 = vmatpush1.msra.mxu0 %v908
  %941 = vmatprep.subr.mxu0 0.0
  %942 = vmatpush1.msra.mxu0 %v907
  %943 = vmatprep.subr.mxu0 0.0
  %944 = vmatpush1.msra.mxu0 %v906
  %945 = vmatprep.subr.mxu0 0.0
  %946 = vmatpush1.msra.mxu0 %v905
  %947 = vmatprep.subr.mxu0 0.0
  %948 = vmatpush1.msra.mxu0 %v904
  %949 = vmatprep.subr.mxu0 0.0
  %950 = vmatpush1.msra.mxu0 %v903
  %951 = vmatprep.subr.mxu0 0.0
  %952 = vmatpush2.msra.mxu0 0.0
  %953 = vmatprep.subr.mxu0 0.0
  %954 = vmatpush2.msra.mxu0 0.0
  %955 = vmatprep.subr.mxu0 0.0
  %956 = vmatpush2.msra.mxu0 0.0
  %957 = vmatprep.subr.mxu0 0.0
  %958 = vmatpush2.msra.mxu0 0.0
  %959 = vmatprep.subr.mxu0 0.0
  %960 = vmatpush2.msra.mxu0 0.0
  %961 = vmatprep.subr.mxu0 0.0
  %962 = vmatpush2.msra.mxu0 0.0
  %963 = vmatprep.subr.mxu0 0.0
  %964 = vmatpush2.msra.mxu0 0.0
  %965 = vmatprep.subr.mxu0 0.0
  %966 = vmatpush2.msra.mxu0 0.0
  %967 = vmatprep.subr.mxu0 0.0
  %968 = vmatpush2.msra.mxu0 0.0
  %969 = vmatprep.subr.mxu0 0.0
  %970 = vmatpush2.msra.mxu0 0.0
  %971 = vmatprep.subr.mxu0 0.0
  %972 = vmatpush2.msra.mxu0 0.0
  %973 = vmatprep.subr.mxu0 0.0
  %974 = vmatpush2.msra.mxu0 0.0
  %975 = vmatprep.subr.mxu0 0.0
  %976 = vmatpush2.msra.mxu0 0.0
  %977 = vmatprep.subr.mxu0 0.0
  %978 = vmatpush2.msra.mxu0 0.0
  %979 = vmatprep.subr.mxu0 0.0
  %980 = vmatpush2.msra.mxu0 0.0
  %981 = vmatprep.subr.mxu0 0.0
  %982 = vmatpush2.msra.mxu0 0.0
  %983 = vmatprep.mubr.f32.mxu0 0.0
  %984 = vmatmul.mubr.f32.gmra.mxu0 %v36
  %v985 = vpop.f32.mrf.mxu0
  %v986 = vadd.f32 0.0, %v985
  %v987 = vpop.f32.mrf.mxu0
  %988 = vdwg.mxu0
  %v989 = vld [vmem:[%s6] sm:$0xff]
  %v990 = vld [vmem:[%s6 + $0x8] sm:$0xff]
  %v991 = vld [vmem:[%s6 + $0x10] sm:$0xff]
  %v992 = vld [vmem:[%s7] sm:$0xff]
  %v993 = vld [vmem:[%s7 + $0x8] sm:$0xff]
  %v994 = vld [vmem:[%s7 + $0x10] sm:$0xff]
  %996 = vset.pattern.permute.xlu0 0
  %997 = vperm.xlu0 %996, %v992
  %v998 = vpop.permute.xlu0 %997
  %1001 = vset.pattern.permute.xlu0 0
  %1002 = vperm.xlu0 %1001, %v993
  %v1003 = vpop.permute.xlu0 %1002
  %1006 = vset.pattern.permute.xlu0 0
  %1007 = vperm.xlu0 %1006, %v994
  %v1008 = vpop.permute.xlu0 %1007
  %vm1010 = vcmask 64512
  %v1012 = vsel %vm1010, %v989, 0
  %v1015 = vsel %vm1010, %v990, 0
  %v1018 = vsel %vm1010, %v991, 0
  %1020 = vmatprep.subr.mxu0 0.0
  %1021 = vmatpush1.msra.mxu0 0.0
  %1022 = vmatprep.subr.mxu0 0.0
  %1023 = vmatpush1.msra.mxu0 0.0
  %1024 = vmatprep.subr.mxu0 0.0
  %1025 = vmatpush1.msra.mxu0 0.0
  %1026 = vmatprep.subr.mxu0 0.0
  %1027 = vmatpush1.msra.mxu0 0.0
  %1028 = vmatprep.subr.mxu0 0.0
  %1029 = vmatpush1.msra.mxu0 0.0
  %1030 = vmatprep.subr.mxu0 0.0
  %1031 = vmatpush1.msra.mxu0 0.0
  %1032 = vmatprep.subr.mxu0 0.0
  %1033 = vmatpush1.msra.mxu0 0.0
  %1034 = vmatprep.subr.mxu0 0.0
  %1035 = vmatpush1.msra.mxu0 0.0
  %1036 = vmatprep.subr.mxu0 0.0
  %1037 = vmatpush1.msra.mxu0 0.0
  %1038 = vmatprep.subr.mxu0 0.0
  %1039 = vmatpush1.msra.mxu0 0.0
  %1040 = vmatprep.subr.mxu0 0.0
  %1041 = vmatpush1.msra.mxu0 0.0
  %1042 = vmatprep.subr.mxu0 0.0
  %1043 = vmatpush1.msra.mxu0 0.0
  %1044 = vmatprep.subr.mxu0 0.0
  %1045 = vmatpush1.msra.mxu0 0.0
  %1046 = vmatprep.subr.mxu0 0.0
  %1047 = vmatpush1.msra.mxu0 0.0
  %1048 = vmatprep.subr.mxu0 0.0
  %1049 = vmatpush1.msra.mxu0 0.0
  %1050 = vmatprep.subr.mxu0 0.0
  %1051 = vmatpush1.msra.mxu0 %v986
  %1052 = vmatprep.subr.mxu0 0.0
  %1053 = vmatpush2.msra.mxu0 0.0
  %1054 = vmatprep.subr.mxu0 0.0
  %1055 = vmatpush2.msra.mxu0 0.0
  %1056 = vmatprep.subr.mxu0 0.0
  %1057 = vmatpush2.msra.mxu0 0.0
  %1058 = vmatprep.subr.mxu0 0.0
  %1059 = vmatpush2.msra.mxu0 0.0
  %1060 = vmatprep.subr.mxu0 0.0
  %1061 = vmatpush2.msra.mxu0 0.0
  %1062 = vmatprep.subr.mxu0 0.0
  %1063 = vmatpush2.msra.mxu0 0.0
  %1064 = vmatprep.subr.mxu0 0.0
  %1065 = vmatpush2.msra.mxu0 0.0
  %1066 = vmatprep.subr.mxu0 0.0
  %1067 = vmatpush2.msra.mxu0 0.0
  %1068 = vmatprep.subr.mxu0 0.0
  %1069 = vmatpush2.msra.mxu0 0.0
  %1070 = vmatprep.subr.mxu0 0.0
  %1071 = vmatpush2.msra.mxu0 0.0
  %1072 = vmatprep.subr.mxu0 0.0
  %1073 = vmatpush2.msra.mxu0 0.0
  %1074 = vmatprep.subr.mxu0 0.0
  %1075 = vmatpush2.msra.mxu0 0.0
  %1076 = vmatprep.subr.mxu0 0.0
  %1077 = vmatpush2.msra.mxu0 0.0
  %1078 = vmatprep.subr.mxu0 0.0
  %1079 = vmatpush2.msra.mxu0 0.0
  %1080 = vmatprep.subr.mxu0 0.0
  %1081 = vmatpush2.msra.mxu0 0.0
  %1082 = vmatprep.subr.mxu0 0.0
  %1083 = vmatpush2.msra.mxu0 0.0
  %1084 = vmatprep.mubr.f32.mxu0 0.0
  %1085 = vmatmul.mubr.f32.gmra.mxu0 %v1012
  %v1086 = vpop.f32.mrf.mxu0
  %v1087 = vadd.f32 %v998, %v1086
  %v1088 = vpop.f32.mrf.mxu0
  %1089 = vmatprep.mubr.f32.mxu0 0.0
  %1090 = vmatmul.mubr.f32.gmra.mxu0 %v1015
  %v1091 = vpop.f32.mrf.mxu0
  %v1092 = vadd.f32 %v1003, %v1091
  %v1093 = vpop.f32.mrf.mxu0
  %1094 = vmatprep.mubr.f32.mxu0 0.0
  %1095 = vmatmul.mubr.f32.gmra.mxu0 %v1018
  %v1096 = vpop.f32.mrf.mxu0
  %v1097 = vadd.f32 %v1008, %v1096
  %v1098 = vpop.f32.mrf.mxu0
  %1099 = vdwg.mxu0
  %v1100 = vadd.f32 %v148, %v1087
  %v1101 = vsub.f32 0.0, %v1100
  %v1102 = vmul.f32 %v1101, 1.442695
  %v1103 = vpow.pop %v1102
  %v1104 = vadd.f32 %v1103, 1.0
  %v1105 = vrcp.pop %v1104
  %v1106 = vadd.f32 %v151, %v1092
  %v1107 = vsub.f32 0.0, %v1106
  %v1108 = vmul.f32 %v1107, 1.442695
  %v1109 = vpow.pop %v1108
  %v1110 = vadd.f32 %v1109, 1.0
  %v1111 = vrcp.pop %v1110
  %v1112 = vmul.f32 %v1111, %v1097
  %v1113 = vadd.f32 %v156, %v1112
  %vm1114 = vcmp.ge.f32.partialorder %v1113, 0.0
  %v1115 = vmul.f32 %v1113, 0.2
  %v1116 = vsel %vm1114, %v1113, %v1115
  %v1117 = vsub.f32 1.0, %v1105
  %v1118 = vmul.f32 %v1117, %v1116
  %v1119 = vmul.f32 %v1105, %v36
  %v1120 = vadd.f32 %v1118, %v1119
  %1121 = vst [vmem:[%s10] sm:$0xff] %v1120
  // Predicated region
  $region42: #{_lambda_.19} parent=0 // pred_check
    _
  $region43: #{_lambda_.19} parent=0 // pred_check_branch
    %1123 = sbr.rel (0) target = $region45
  $region44: #{_lambda_.19} parent=0 // pred_region
    _
  $region45: #{_lambda_.19} parent=0 // pred_fallthru
    _
  // Predicated region
  $region46: #{_lambda_.19} parent=0 // pred_check
    _
  $region47: #{_lambda_.19} parent=0 // pred_check_branch
    %1125 = sbr.rel (0) target = $region49
  $region48: #{_lambda_.19} parent=0 // pred_region
    _
  $region49: #{_lambda_.19} parent=0 // pred_fallthru
    _

// kernel: _lambda_.20
$region0: #{_lambda_.20}
  #allocation0 [shape = 'u32[]', space=smem, size = 0x4, offset = 0x4, fixed_abs, tag = 'smem constant byte address 0x4 - core index']
  #allocation1 [shape = 'u32[144,128]{1,0:T(1,128)}', space=vmem, size = 0x12000, scoped, tag = 'internal scratch']
  %s0 = inlined_call_operand.vmem [shape: bf16[16,72], index: 0, kind: input, shape index: {}]
  %s1 = inlined_call_operand.vmem [shape: bf16[72,128], index: 1, kind: input, shape index: {}]
  %s2 = inlined_call_operand.vmem [shape: f32[16,1], index: 2, kind: input, shape index: {}]
  %s3 = inlined_call_operand.vmem [shape: f32[16,128], index: 3, kind: output, shape index: {}]
  %s4 = sld [smem:[#allocation0]]
  $region22: #{_lambda_.20} parent=0
    _
  %s6 = ssub.s32 1, %s4
  %s7 = scalar_select 0, %s6, %s4
  // Predicated region
  $region2: #{_lambda_.20} parent=0 // pred_check
    _
  $region3: #{_lambda_.20} parent=0 // pred_check_branch
    %9 = sbr.rel (0) target = $region5
  $region4: #{_lambda_.20} parent=0 // pred_region
    _
  $region5: #{_lambda_.20} parent=0 // pred_fallthru
    _
  // Predicated region
  $region6: #{_lambda_.20} parent=0 // pred_check
    _
  $region7: #{_lambda_.20} parent=0 // pred_check_branch
    %11 = sbr.rel (0) target = $region9
  $region8: #{_lambda_.20} parent=0 // pred_region
    _
  $region9: #{_lambda_.20} parent=0 // pred_fallthru
    _
  // Predicated region
  $region10: #{_lambda_.20} parent=0 // pred_check
    _
  $region11: #{_lambda_.20} parent=0 // pred_check_branch
    %13 = sbr.rel (0) target = $region13
  $region12: #{_lambda_.20} parent=0 // pred_region
    _
  $region13: #{_lambda_.20} parent=0 // pred_fallthru
    _
  %v15 = vld [vmem:[%s0] sm:$0xf]
  %v16 = vld [vmem:[%s0 + $0x4] sm:$0xf]
  %v17 = vld [vmem:[%s1] sm:$0xf]
  %v18 = vld [vmem:[%s1 + $0x4] sm:$0xf]
  %v19 = vld [vmem:[%s1 + $0x8] sm:$0xf]
  %v20 = vld [vmem:[%s1 + $0xc] sm:$0xf]
  %v21 = vld [vmem:[%s1 + $0x10] sm:$0xf]
  %v22 = vld [vmem:[%s1 + $0x14] sm:$0xf]
  %v23 = vld [vmem:[%s1 + $0x18] sm:$0xf]
  %v24 = vld [vmem:[%s1 + $0x1c] sm:$0xf]
  %v25 = vld [vmem:[%s1 + $0x20] sm:$0xf]
  %v26 = vld [vmem:[%s2] sm:$0xff]
  %v27 = vld [vmem:[%s2 + $0x8] sm:$0xff]
  %29 = vset.pattern.permute.xlu0 0
  %30 = vperm.xlu0 %29, %v26
  %v31 = vpop.permute.xlu0 %30
  %34 = vset.pattern.permute.xlu0 0
  %35 = vperm.xlu0 %34, %v27
  %v36 = vpop.permute.xlu0 %35
  %v40 = vunpack.c.l.b16 %v15
  %v41 = vunpack.c.l.b16 %v16
  %v42 = vpack.c.b16 %v41, %v40
  %v52 = vunpack.c.l.b16 %v17
  %v53 = vunpack.c.l.b16 %v18
  %v54 = vunpack.c.l.b16 %v19
  %v55 = vunpack.c.l.b16 %v20
  %v56 = vunpack.c.l.b16 %v21
  %v57 = vunpack.c.l.b16 %v22
  %v58 = vunpack.c.l.b16 %v23
  %v59 = vunpack.c.l.b16 %v24
  %v60 = vunpack.c.l.b16 %v25
  %v61 = vpack.c.b16 %v53, %v52
  %v62 = vpack.c.b16 %v55, %v54
  %v63 = vpack.c.b16 %v57, %v56
  %v64 = vpack.c.b16 %v59, %v58
  %v65 = vpack.c.b16 %v60, %v60
  %vm70 = vcmask 588800
  %v72 = vsel %vm70, %v42, 0
  %vm74 = vcmask 1043456
  %v76 = vsel %vm74, %v65, 0
  %78 = vmatprep.subr.bf16.mxu0 0
  %79 = vmatpush1.bf16.msra.mxu0 0
  %80 = vmatprep.subr.bf16.mxu0 0
  %81 = vmatpush1.bf16.msra.mxu0 0
  %82 = vmatprep.subr.bf16.mxu0 0
  %83 = vmatpush1.bf16.msra.mxu0 0
  %84 = vmatprep.subr.bf16.mxu0 0
  %85 = vmatpush1.bf16.msra.mxu0 %v76
  %86 = vmatprep.subr.bf16.mxu0 0
  %87 = vmatpush1.bf16.msra.mxu0 %v64
  %88 = vmatprep.subr.bf16.mxu0 0
  %89 = vmatpush1.bf16.msra.mxu0 %v63
  %90 = vmatprep.subr.bf16.mxu0 0
  %91 = vmatpush1.bf16.msra.mxu0 %v62
  %92 = vmatprep.subr.bf16.mxu0 0
  %93 = vmatpush1.bf16.msra.mxu0 %v61
  %94 = vmatprep.subr.bf16.mxu0 0
  %95 = vmatpush2.bf16.msra.mxu0 0
  %96 = vmatprep.subr.bf16.mxu0 0
  %97 = vmatpush2.bf16.msra.mxu0 0
  %98 = vmatprep.subr.bf16.mxu0 0
  %99 = vmatpush2.bf16.msra.mxu0 0
  %100 = vmatprep.subr.bf16.mxu0 0
  %101 = vmatpush2.bf16.msra.mxu0 0
  %102 = vmatprep.subr.bf16.mxu0 0
  %103 = vmatpush2.bf16.msra.mxu0 0
  %104 = vmatprep.subr.bf16.mxu0 0
  %105 = vmatpush2.bf16.msra.mxu0 0
  %106 = vmatprep.subr.bf16.mxu0 0
  %107 = vmatpush2.bf16.msra.mxu0 0
  %108 = vmatprep.subr.bf16.mxu0 0
  %109 = vmatpush2.bf16.msra.mxu0 0
  %110 = vmatprep.mubr.bf16.mxu0 0
  %111 = vmatmul.mubr.bf16.gmra.mxu0 %v72
  %v112 = vpop.f32.mrf.mxu0
  %v113 = vadd.f32 %v31, %v112
  %v114 = vpop.f32.mrf.mxu0
  %v115 = vpop.f32.mrf.mxu0
  %v116 = vadd.f32 %v36, %v115
  %v117 = vpop.f32.mrf.mxu0
  %118 = vdwg.mxu0
  %119 = vst [vmem:[%s3] sm:$0xff] %v113
  %120 = vst [vmem:[%s3 + $0x8] sm:$0xff] %v116
  // Predicated region
  $region14: #{_lambda_.20} parent=0 // pred_check
    _
  $region15: #{_lambda_.20} parent=0 // pred_check_branch
    %122 = sbr.rel (0) target = $region17
  $region16: #{_lambda_.20} parent=0 // pred_region
    _
  $region17: #{_lambda_.20} parent=0 // pred_fallthru
    _
  // Predicated region
  $region18: #{_lambda_.20} parent=0 // pred_check
    _
  $region19: #{_lambda_.20} parent=0 // pred_check_branch
    %124 = sbr.rel (0) target = $region21
  $region20: #{_lambda_.20} parent=0 // pred_region
    _
  $region21: #{_lambda_.20} parent=0 // pred_fallthru
    _

// kernel: _lambda_.22
$region0: #{_lambda_.22}
  #allocation0 [shape = 'u32[]', space=smem, size = 0x4, offset = 0x4, fixed_abs, tag = 'smem constant byte address 0x4 - core index']
  #allocation1 [shape = 'u32[144,128]{1,0:T(1,128)}', space=vmem, size = 0x12000, scoped, tag = 'internal scratch']
  %s0 = inlined_call_operand.vmem [shape: bf16[8,9], index: 0, kind: input, shape index: {}]
  %s1 = inlined_call_operand.vmem [shape: bf16[9,512], index: 1, kind: input, shape index: {}]
  %s2 = inlined_call_operand.vmem [shape: f32[8,1], index: 2, kind: input, shape index: {}]
  %s3 = inlined_call_operand.vmem [shape: f32[8,512], index: 3, kind: output, shape index: {}]
  %s4 = sld [smem:[#allocation0]]
  $region83: #{_lambda_.22} parent=0
    _
  %s6 = ssub.s32 1, %s4
  %s7 = scalar_select 0, %s6, %s4
  $region1: #{_lambda_.22} parent=0
    #allocation2 [shape = 'u8[16384]{0}', space=vmem, size = 0x4000, scoped, tag = 'input window, operand 1']
    loop: start=0, step=1, limit=4
    $region2: #{_lambda_.22} parent=1 // loop_pre_header
      _
    $region3: #{_lambda_.22} parent=1 // loop_header
      %s9 = sphi 0, %s13
      %p10 = scmp.ge.s32.totalorder %s9, 4
      %s17 = sphi 0, %s17
      %s19 = sphi 0, %s17
      %s20 = sphi 0, %s19
      %s34 = sphi 0, %s20
      %s40 = sphi 0, %s42
      %s43 = sphi 0, %s40
      %s44 = sphi 0, %s43
      %s60 = sphi 0, %s44
      %s64 = sphi 0, %s64
      %s66 = sphi 0, %s64
      %s67 = sphi 0, %s66
      %s81 = sphi 0, %s67
      %s87 = sphi 0, %s89
      %s90 = sphi 0, %s87
      %s91 = sphi 0, %s90
      %s107 = sphi 0, %s91
    $region4: #{_lambda_.22} parent=1 // loop_header_branch
      %12 = sbr.rel (%p10) target = $region8
    $region5: #{_lambda_.22} parent=1 // loop_body
      %s14 = ssub.s32 %s9, 1
      %s15 = ssub.s32 %s9, 2
      %s16 = sadd.s32 %s9, 1
      %s18 = sadd.s32 %s17, 1
      %p21 = scmp.eq.s32.totalorder %s9, 1
      %p22 = scmp.ne.s32.totalorder %s17, %s19
      %p23 = scmp.eq.s32.totalorder %s9, 0
      %p24 = por %p22, %p23
      %p25 = scmp.ne.s32.totalorder %s17, %s19
      %p26 = scmp.eq.s32.totalorder %s14, 1
      %p27 = por %p25, %p26
      %p28 = scmp.ne.s32.totalorder %s19, %s20
      %p29 = scmp.eq.s32.totalorder %s14, 0
      %p30 = por %p28, %p29
      %p31 = scmp.ne.s32.totalorder %s19, %s20
      %p32 = scmp.eq.s32.totalorder %s15, 1
      %p33 = por %p31, %p32
      %p35 = scmp.ne.s32.totalorder %s20, %s34
      %p36 = scmp.eq.s32.totalorder %s15, 0
      %p37 = por %p35, %p36
      %s38 = ssub.s32 %s9, %s16
      %p39 = scmp.eq.s32.totalorder %s38, 0
      %s41 = sadd.s32 %s40, 1
      %s42 = scalar_select %p39, %s40, %s41
      %p45 = pneg %p39
      %p46 = scmp.eq.s32.totalorder %s9, 1
      %p47 = por %p45, %p46
      %p48 = scmp.ne.s32.totalorder %s40, %s43
      %p49 = scmp.eq.s32.totalorder %s9, 0
      %p50 = por %p48, %p49
      %p51 = scmp.ne.s32.totalorder %s40, %s43
      %p52 = scmp.eq.s32.totalorder %s14, 1
      %p53 = por %p51, %p52
      %p54 = scmp.ne.s32.totalorder %s43, %s44
      %p55 = scmp.eq.s32.totalorder %s14, 0
      %p56 = por %p54, %p55
      %p57 = scmp.ne.s32.totalorder %s43, %s44
      %p58 = scmp.eq.s32.totalorder %s15, 1
      %p59 = por %p57, %p58
      %p61 = scmp.ne.s32.totalorder %s44, %s60
      %p62 = scmp.eq.s32.totalorder %s15, 0
      %p63 = por %p61, %p62
      %s65 = sadd.s32 %s64, 1
      %p68 = scmp.eq.s32.totalorder %s9, 1
      %p69 = scmp.ne.s32.totalorder %s64, %s66
      %p70 = scmp.eq.s32.totalorder %s9, 0
      %p71 = por %p69, %p70
      %p72 = scmp.ne.s32.totalorder %s64, %s66
      %p73 = scmp.eq.s32.totalorder %s14, 1
      %p74 = por %p72, %p73
      %p75 = scmp.ne.s32.totalorder %s66, %s67
      %p76 = scmp.eq.s32.totalorder %s14, 0
      %p77 = por %p75, %p76
      %p78 = scmp.ne.s32.totalorder %s66, %s67
      %p79 = scmp.eq.s32.totalorder %s15, 1
      %p80 = por %p78, %p79
      %p82 = scmp.ne.s32.totalorder %s67, %s81
      %p83 = scmp.eq.s32.totalorder %s15, 0
      %p84 = por %p82, %p83
      %s85 = ssub.s32 %s9, %s16
      %p86 = scmp.eq.s32.totalorder %s85, 0
      %s88 = sadd.s32 %s87, 1
      %s89 = scalar_select %p86, %s87, %s88
      %p92 = pneg %p86
      %p93 = scmp.eq.s32.totalorder %s9, 1
      %p94 = por %p92, %p93
      %p95 = scmp.ne.s32.totalorder %s87, %s90
      %p96 = scmp.eq.s32.totalorder %s9, 0
      %p97 = por %p95, %p96
      %p98 = scmp.ne.s32.totalorder %s87, %s90
      %p99 = scmp.eq.s32.totalorder %s14, 1
      %p100 = por %p98, %p99
      %p101 = scmp.ne.s32.totalorder %s90, %s91
      %p102 = scmp.eq.s32.totalorder %s14, 0
      %p103 = por %p101, %p102
      %p104 = scmp.ne.s32.totalorder %s90, %s91
      %p105 = scmp.eq.s32.totalorder %s15, 1
      %p106 = por %p104, %p105
      %p108 = scmp.ne.s32.totalorder %s91, %s107
      %p109 = scmp.eq.s32.totalorder %s15, 0
      %p110 = por %p108, %p109
      %p111 = scmp.le.s32.totalorder 1, %s9
      %p112 = scmp.lt.s32.totalorder %s9, 3
      %p113 = pnand %p111, %p112
      %p114 = pneg %p113
      // Predicated region
      $region9: #{_lambda_.22} parent=5 // pred_check
        _
      $region10: #{_lambda_.22} parent=5 // pred_check_branch
        %116 = sbr.rel (%p113) target = $region12
      $region11: #{_lambda_.22} parent=5 // pred_region
        %s117 = ssub.s32 %s9, 1
        // Predicated region
        $region13: #{_lambda_.22} parent=11 // pred_check
          %p118 = pneg %p30
        $region14: #{_lambda_.22} parent=11 // pred_check_branch
          %120 = sbr.rel (%p118) target = $region16
        $region15: #{_lambda_.22} parent=11 // pred_region
          _
        $region16: #{_lambda_.22} parent=11 // pred_fallthru
          _
        // Predicated region
        $region17: #{_lambda_.22} parent=11 // pred_check
          %p121 = pneg %p77
        $region18: #{_lambda_.22} parent=11 // pred_check_branch
          %123 = sbr.rel (%p121) target = $region20
        $region19: #{_lambda_.22} parent=11 // pred_region
          _
        $region20: #{_lambda_.22} parent=11 // pred_fallthru
          _
      $region12: #{_lambda_.22} parent=5 // pred_fallthru
        _
      %p124 = scmp.lt.s32.totalorder %s9, 2
      // Predicated region
      $region21: #{_lambda_.22} parent=5 // pred_check
        %p125 = pneg %p124
      $region22: #{_lambda_.22} parent=5 // pred_check_branch
        %127 = sbr.rel (%p125) target = $region24
      $region23: #{_lambda_.22} parent=5 // pred_region
        // Predicated region
        $region25: #{_lambda_.22} parent=23 // pred_check
          %p128 = pneg %p50
        $region26: #{_lambda_.22} parent=23 // pred_check_branch
          %130 = sbr.rel (%p128) target = $region28
        $region27: #{_lambda_.22} parent=23 // pred_region
          %s131 = sand.u32 %s40, 1
          %s132 = sand.u32 %s40, 1
          %s133 = smul.addr %s132, 16
          %s134 = scalar_lea.vmem [#allocation2], %s133
          %s135 = smul.u32 2, %s9
          %s136 = smul.addr %s135, 4
          %s137 = scalar_lea.vmem %s1, %s136
          // Predicated region
          $region29: #{_lambda_.22} parent=27 // pred_check
            _
          $region30: #{_lambda_.22} parent=27 // pred_check_branch
            %139 = sbr.rel (0) target = $region32
          $region31: #{_lambda_.22} parent=27 // pred_region
            // Predicated region
            $region33: #{_lambda_.22} parent=31 // pred_check
              _
            $region34: #{_lambda_.22} parent=31 // pred_check_branch
              %141 = sbr.rel (0) target = $region36
            $region35: #{_lambda_.22} parent=31 // pred_region
              // Predicated region
              $region48: #{_lambda_.22} parent=35 // pred_check
                _
              $region49: #{_lambda_.22} parent=35 // pred_check_branch
                %159 = sbr.rel (0) target = $region51
              $region50: #{_lambda_.22} parent=35 // pred_region
                loop: start=0, step=1, limit=1
                $region52: #{_lambda_.22} parent=50 // loop_pre_header
                  _
                $region53: #{_lambda_.22} parent=50 // loop_header
                  %s161 = sphi 0, %s165
                  %p162 = scmp.ge.s32.totalorder %s161, 1
                  %s166 = sphi %s137, %s137
                  %s167 = sphi %s134, %s134
                $region54: #{_lambda_.22} parent=50 // loop_header_branch
                  %164 = sbr.rel (%p162) target = $region58
                $region55: #{_lambda_.22} parent=50 // loop_body
                  %v168 = vld [vmem:[%s166] sm:$0xff]
                  %169 = vst [vmem:[%s167] sm:$0xff] %v168
                  %v170 = vld [vmem:[%s166 + $0x10] sm:$0xff]
                  %171 = vst [vmem:[%s167 + $0x8] sm:$0xff] %v170
                $region56: #{_lambda_.22} parent=50 // loop_footer
                  %s165 = sadd.s32 1, %s161
                $region57: #{_lambda_.22} parent=50 // loop_footer_branch
                  %160 = sbr.rel target = $region53
                $region58: #{_lambda_.22} parent=50 // loop_exit
                  _
              $region51: #{_lambda_.22} parent=35 // pred_fallthru
                _
              // Predicated region
              $region59: #{_lambda_.22} parent=35 // pred_check
                _
              $region60: #{_lambda_.22} parent=35 // pred_check_branch
                %173 = sbr.rel target = $region62
              $region61: #{_lambda_.22} parent=35 // pred_region
                _
              $region62: #{_lambda_.22} parent=35 // pred_fallthru
                _
            $region36: #{_lambda_.22} parent=31 // pred_fallthru
              _
            // Predicated region
            $region37: #{_lambda_.22} parent=31 // pred_check
              _
            $region38: #{_lambda_.22} parent=31 // pred_check_branch
              %143 = sbr.rel target = $region40
            $region39: #{_lambda_.22} parent=31 // pred_region
              %s145 = ssub.s32 256, 1
              loop: start=0, step=1, limit=1
              $region41: #{_lambda_.22} parent=39 // loop_pre_header
                _
              $region42: #{_lambda_.22} parent=39 // loop_header
                %s147 = sphi 0, %s151
                %p148 = scmp.ge.s32.totalorder %s147, 1
                %s152 = sphi %s137, %s137
                %s153 = sphi %s134, %s134
              $region43: #{_lambda_.22} parent=39 // loop_header_branch
                %150 = sbr.rel (%p148) target = $region47
              $region44: #{_lambda_.22} parent=39 // loop_body
                %v154 = vld [vmem:[%s152] sm:%s145]
                %155 = vst [vmem:[%s153] sm:%s145] %v154
                %v156 = vld [vmem:[%s152 + $0x10] sm:%s145]
                %157 = vst [vmem:[%s153 + $0x8] sm:%s145] %v156
              $region45: #{_lambda_.22} parent=39 // loop_footer
                %s151 = sadd.s32 1, %s147
              $region46: #{_lambda_.22} parent=39 // loop_footer_branch
                %146 = sbr.rel target = $region42
              $region47: #{_lambda_.22} parent=39 // loop_exit
                _
            $region40: #{_lambda_.22} parent=31 // pred_fallthru
              _
          $region32: #{_lambda_.22} parent=27 // pred_fallthru
            _
          %174 = vnop
        $region28: #{_lambda_.22} parent=23 // pred_fallthru
          _
      $region24: #{_lambda_.22} parent=5 // pred_fallthru
        _
      %p175 = scmp.le.s32.totalorder 1, %s9
      %p176 = scmp.lt.s32.totalorder %s9, 3
      %p177 = pnand %p175, %p176
      %p178 = pneg %p177
      // Predicated region
      $region63: #{_lambda_.22} parent=5 // pred_check
        _
      $region64: #{_lambda_.22} parent=5 // pred_check_branch
        %180 = sbr.rel (%p177) target = $region66
      $region65: #{_lambda_.22} parent=5 // pred_region
        %s181 = ssub.s32 %s9, 1
        %s182 = sand.u32 %s43, 1
        %s183 = sand.u32 %s43, 1
        %s184 = smul.addr %s183, 16
        %s185 = scalar_lea.vmem [#allocation2], %s184
        // Predicated region
        $region67: #{_lambda_.22} parent=65 // pred_check
          %p186 = pneg %p56
        $region68: #{_lambda_.22} parent=65 // pred_check_branch
          %188 = sbr.rel (%p186) target = $region70
        $region69: #{_lambda_.22} parent=65 // pred_region
          _
        $region70: #{_lambda_.22} parent=65 // pred_fallthru
          _
        %p189 = pneg %p30
        %p190 = pneg %p27
        %s191 = sand.u32 %s43, 1
        %s192 = sand.u32 %s43, 1
        %s193 = smul.addr %s192, 16
        %s194 = scalar_lea.vmem [#allocation2], %s193
        %p195 = pneg %p56
        %p196 = pneg %p53
        %p197 = pneg %p77
        %p198 = pneg %p74
        %p199 = pneg %p103
        %p200 = pneg %p100
        %s201 = smul.u32 2, %s14
        %p202 = scmp.lt.s32.totalorder %s201, 3
        %s203 = scalar_select %p202, %s201, 3
        %s204 = smul.addr %s203, 8
        %s205 = scalar_lea.vmem %s3, %s204
        %s206 = smul.u32 2, %s14
        %s207 = smul.u32 2, %s14
        %p208 = scmp.lt.s32.totalorder %s207, 3
        %s209 = scalar_select %p208, %s207, 3
        %s210 = smul.addr %s209, 8
        %s211 = scalar_lea.vmem %s3, %s210
        %s212 = smul.u32 2, %s14
        %v214 = vld [vmem:[%s0] sm:$0xf]
        %v215 = vld [vmem:[%s185] sm:$0xff]
        %v216 = vld [vmem:[%s185 + $0x8] sm:$0x11]
        %v217 = vld [vmem:[%s2] sm:$0xff]
        %219 = vset.pattern.permute.xlu0 0
        %220 = vperm.xlu0 %219, %v217
        %v221 = vpop.permute.xlu0 %220
        %v225 = vunpack.c.l.b16 %v215
        %v226 = vunpack.c.h.b16 %v215
        %v227 = vunpack.c.l.b16 %v216
        %v228 = vunpack.c.h.b16 %v216
        %v229 = vpack.c.b16 %v227, %v225
        %v230 = vpack.c.b16 %v228, %v226
        %vm231 = vcmask 72704
        %v233 = vsel %vm231, %v214, 0
        %vm235 = vcmask 1043456
        %vm236 = vcmask 1044480
        %v237 = vsel %vm235, 4294967295, 65535
        %v238 = vsel %vm236, %v237, 0
        %v240 = vand.u32 %v229, %v238
        %v243 = vand.u32 %v230, %v238
        %245 = vmatprep.subr.bf16.mxu0 0
        %246 = vmatpush1.bf16.msra.mxu0 0
        %247 = vmatprep.subr.bf16.mxu0 0
        %248 = vmatpush1.bf16.msra.mxu0 0
        %249 = vmatprep.subr.bf16.mxu0 0
        %250 = vmatpush1.bf16.msra.mxu0 0
        %251 = vmatprep.subr.bf16.mxu0 0
        %252 = vmatpush1.bf16.msra.mxu0 0
        %253 = vmatprep.subr.bf16.mxu0 0
        %254 = vmatpush1.bf16.msra.mxu0 0
        %255 = vmatprep.subr.bf16.mxu0 0
        %256 = vmatpush1.bf16.msra.mxu0 0
        %257 = vmatprep.subr.bf16.mxu0 0
        %258 = vmatpush1.bf16.msra.mxu0 0
        %259 = vmatprep.subr.bf16.mxu0 %v243
        %260 = vmatpush1.bf16.msra.mxu0 %v240
        %261 = vmatprep.subr.bf16.mxu0 0
        %262 = vmatpush2.bf16.msra.mxu0 0
        %263 = vmatprep.subr.bf16.mxu0 0
        %264 = vmatpush2.bf16.msra.mxu0 0
        %265 = vmatprep.subr.bf16.mxu0 0
        %266 = vmatpush2.bf16.msra.mxu0 0
        %267 = vmatprep.subr.bf16.mxu0 0
        %268 = vmatpush2.bf16.msra.mxu0 0
        %269 = vmatprep.subr.bf16.mxu0 0
        %270 = vmatpush2.bf16.msra.mxu0 0
        %271 = vmatprep.subr.bf16.mxu0 0
        %272 = vmatpush2.bf16.msra.mxu0 0
        %273 = vmatprep.subr.bf16.mxu0 0
        %274 = vmatpush2.bf16.msra.mxu0 0
        %275 = vmatprep.subr.bf16.mxu0 0
        %276 = vmatpush2.bf16.msra.mxu0 0
        %277 = vmatprep.mubr.bf16.mxu0 0
        %278 = vmatmul.mubr.bf16.gmra.mxu0 %v233
        %v279 = vpop.f32.mrf.mxu0
        %v280 = vadd.f32 %v221, %v279
        %v281 = vpop.f32.mrf.mxu0
        %v282 = vadd.f32 %v221, %v281
        %v283 = vpop.f32.mrf.mxu0
        %v284 = vpop.f32.mrf.mxu0
        %285 = vdwg.mxu0
        %286 = vst [vmem:[%s211] sm:$0xff] %v280
        %287 = vst [vmem:[%s211 + $0x8] sm:$0xff] %v282
        %s288 = smul.u32 2, %s14
        %p289 = scmp.lt.s32.totalorder %s288, 3
        %s290 = scalar_select %p289, %s288, 3
        %s291 = smul.addr %s290, 8
        %s292 = scalar_lea.vmem %s3, %s291
        // Predicated region
        $region71: #{_lambda_.22} parent=65 // pred_check
          %p293 = pneg %p100
        $region72: #{_lambda_.22} parent=65 // pred_check_branch
          %295 = sbr.rel (%p293) target = $region74
        $region73: #{_lambda_.22} parent=65 // pred_region
          %s296 = smul.u32 2, %s14
        $region74: #{_lambda_.22} parent=65 // pred_fallthru
          _
      $region66: #{_lambda_.22} parent=5 // pred_fallthru
        _
      %p297 = scmp.le.s32.totalorder 2, %s9
      // Predicated region
      $region75: #{_lambda_.22} parent=5 // pred_check
        %p298 = pneg %p297
      $region76: #{_lambda_.22} parent=5 // pred_check_branch
        %300 = sbr.rel (%p298) target = $region78
      $region77: #{_lambda_.22} parent=5 // pred_region
        %s301 = ssub.s32 %s9, 2
        // Predicated region
        $region79: #{_lambda_.22} parent=77 // pred_check
          %p302 = pneg %p106
        $region80: #{_lambda_.22} parent=77 // pred_check_branch
          %304 = sbr.rel (%p302) target = $region82
        $region81: #{_lambda_.22} parent=77 // pred_region
          %s305 = smul.u32 2, %s15
          %p306 = scmp.lt.s32.totalorder %s305, 3
          %s307 = scalar_select %p306, %s305, 3
          %s308 = smul.addr %s307, 8
          %s309 = scalar_lea.vmem %s3, %s308
        $region82: #{_lambda_.22} parent=77 // pred_fallthru
          _
      $region78: #{_lambda_.22} parent=5 // pred_fallthru
        _
    $region6: #{_lambda_.22} parent=1 // loop_footer
      %s13 = sadd.s32 1, %s9
    $region7: #{_lambda_.22} parent=1 // loop_footer_branch
      %8 = sbr.rel target = $region3
    $region8: #{_lambda_.22} parent=1 // loop_exit
      _

// kernel: _lambda_.21
$region0: #{_lambda_.21}
  #allocation0 [shape = 'u32[]', space=smem, size = 0x4, offset = 0x4, fixed_abs, tag = 'smem constant byte address 0x4 - core index']
  #allocation1 [shape = 'u32[144,128]{1,0:T(1,128)}', space=vmem, size = 0x12000, scoped, tag = 'internal scratch']
  %s0 = inlined_call_operand.vmem [shape: bf16[48,144], index: 0, kind: input, shape index: {}]
  %s1 = inlined_call_operand.vmem [shape: bf16[144,32], index: 1, kind: input, shape index: {}]
  %s2 = inlined_call_operand.vmem [shape: f32[48,1], index: 2, kind: input, shape index: {}]
  %s3 = inlined_call_operand.vmem [shape: bf16[4,800], index: 3, kind: input, shape index: {}]
  %s4 = inlined_call_operand.vmem [shape: bf16[800,32], index: 4, kind: input, shape index: {}]
  %s5 = inlined_call_operand.vmem [shape: f32[4,1], index: 5, kind: input, shape index: {}]
  %s6 = inlined_call_operand.vmem [shape: f32[48,16], index: 6, kind: input, shape index: {}]
  %s7 = inlined_call_operand.vmem [shape: f32[48,1], index: 7, kind: input, shape index: {}]
  %s8 = inlined_call_operand.vmem [shape: s32[1,32], index: 8, kind: input, shape index: {}]
  %s9 = inlined_call_operand.vmem [shape: f32[16,32], index: 9, kind: input, shape index: {}]
  %s10 = inlined_call_operand.vmem [shape: f32[16,32], index: 10, kind: output, shape index: {}]
  %s11 = sld [smem:[#allocation0]]
  $region50: #{_lambda_.21} parent=0
    _
  %s13 = ssub.s32 1, %s11
  %s14 = scalar_select 0, %s13, %s11
  // Predicated region
  $region2: #{_lambda_.21} parent=0 // pred_check
    _
  $region3: #{_lambda_.21} parent=0 // pred_check_branch
    %16 = sbr.rel (0) target = $region5
  $region4: #{_lambda_.21} parent=0 // pred_region
    _
  $region5: #{_lambda_.21} parent=0 // pred_fallthru
    _
  // Predicated region
  $region6: #{_lambda_.21} parent=0 // pred_check
    _
  $region7: #{_lambda_.21} parent=0 // pred_check_branch
    %18 = sbr.rel (0) target = $region9
  $region8: #{_lambda_.21} parent=0 // pred_region
    _
  $region9: #{_lambda_.21} parent=0 // pred_fallthru
    _
  // Predicated region
  $region10: #{_lambda_.21} parent=0 // pred_check
    _
  $region11: #{_lambda_.21} parent=0 // pred_check_branch
    %20 = sbr.rel (0) target = $region13
  $region12: #{_lambda_.21} parent=0 // pred_region
    _
  $region13: #{_lambda_.21} parent=0 // pred_fallthru
    _
  // Predicated region
  $region14: #{_lambda_.21} parent=0 // pred_check
    _
  $region15: #{_lambda_.21} parent=0 // pred_check_branch
    %22 = sbr.rel (0) target = $region17
  $region16: #{_lambda_.21} parent=0 // pred_region
    _
  $region17: #{_lambda_.21} parent=0 // pred_fallthru
    _
  // Predicated region
  $region18: #{_lambda_.21} parent=0 // pred_check
    _
  $region19: #{_lambda_.21} parent=0 // pred_check_branch
    %24 = sbr.rel (0) target = $region21
  $region20: #{_lambda_.21} parent=0 // pred_region
    _
  $region21: #{_lambda_.21} parent=0 // pred_fallthru
    _
  // Predicated region
  $region22: #{_lambda_.21} parent=0 // pred_check
    _
  $region23: #{_lambda_.21} parent=0 // pred_check_branch
    %26 = sbr.rel (0) target = $region25
  $region24: #{_lambda_.21} parent=0 // pred_region
    _
  $region25: #{_lambda_.21} parent=0 // pred_fallthru
    _
  // Predicated region
  $region26: #{_lambda_.21} parent=0 // pred_check
    _
  $region27: #{_lambda_.21} parent=0 // pred_check_branch
    %28 = sbr.rel (0) target = $region29
  $region28: #{_lambda_.21} parent=0 // pred_region
    _
  $region29: #{_lambda_.21} parent=0 // pred_fallthru
    _
  // Predicated region
  $region30: #{_lambda_.21} parent=0 // pred_check
    _
  $region31: #{_lambda_.21} parent=0 // pred_check_branch
    %30 = sbr.rel (0) target = $region33
  $region32: #{_lambda_.21} parent=0 // pred_region
    _
  $region33: #{_lambda_.21} parent=0 // pred_fallthru
    _
  // Predicated region
  $region34: #{_lambda_.21} parent=0 // pred_check
    _
  $region35: #{_lambda_.21} parent=0 // pred_check_branch
    %32 = sbr.rel (0) target = $region37
  $region36: #{_lambda_.21} parent=0 // pred_region
    _
  $region37: #{_lambda_.21} parent=0 // pred_fallthru
    _
  // Predicated region
  $region38: #{_lambda_.21} parent=0 // pred_check
    _
  $region39: #{_lambda_.21} parent=0 // pred_check_branch
    %34 = sbr.rel (0) target = $region41
  $region40: #{_lambda_.21} parent=0 // pred_region
    _
  $region41: #{_lambda_.21} parent=0 // pred_fallthru
    _
  %v36 = vld [vmem:[%s9] sm:$0xff]
  %v37 = vld [vmem:[%s9 + $0x8] sm:$0xff]
  %v38 = vld [vmem:[%s0] sm:$0xff]
  %v39 = vld [vmem:[%s0 + $0x8] sm:$0xff]
  %v40 = vld [vmem:[%s0 + $0x10] sm:$0xff]
  %v41 = vld [vmem:[%s0 + $0x18] sm:$0xff]
  %v42 = vld [vmem:[%s0 + $0x20] sm:$0xff]
  %v43 = vld [vmem:[%s0 + $0x28] sm:$0xff]
  %v44 = vld [vmem:[%s1] sm:$0xf]
  %v45 = vld [vmem:[%s1 + $0x4] sm:$0xf]
  %v46 = vld [vmem:[%s1 + $0x8] sm:$0xf]
  %v47 = vld [vmem:[%s1 + $0xc] sm:$0xf]
  %v48 = vld [vmem:[%s1 + $0x10] sm:$0xf]
  %v49 = vld [vmem:[%s1 + $0x14] sm:$0xf]
  %v50 = vld [vmem:[%s1 + $0x18] sm:$0xf]
  %v51 = vld [vmem:[%s1 + $0x1c] sm:$0xf]
  %v52 = vld [vmem:[%s1 + $0x20] sm:$0xf]
  %v53 = vld [vmem:[%s1 + $0x24] sm:$0xf]
  %v54 = vld [vmem:[%s1 + $0x28] sm:$0xf]
  %v55 = vld [vmem:[%s1 + $0x2c] sm:$0xf]
  %v56 = vld [vmem:[%s1 + $0x30] sm:$0xf]
  %v57 = vld [vmem:[%s1 + $0x34] sm:$0xf]
  %v58 = vld [vmem:[%s1 + $0x38] sm:$0xf]
  %v59 = vld [vmem:[%s1 + $0x3c] sm:$0xf]
  %v60 = vld [vmem:[%s1 + $0x40] sm:$0xf]
  %v61 = vld [vmem:[%s1 + $0x44] sm:$0xf]
  %v62 = vld [vmem:[%s2] sm:$0xff]
  %v63 = vld [vmem:[%s2 + $0x8] sm:$0xff]
  %v64 = vld [vmem:[%s2 + $0x10] sm:$0xff]
  %v65 = vld [vmem:[%s2 + $0x18] sm:$0xff]
  %v66 = vld [vmem:[%s2 + $0x20] sm:$0xff]
  %v67 = vld [vmem:[%s2 + $0x28] sm:$0xff]
  %69 = vset.pattern.permute.xlu0 0
  %70 = vperm.xlu0 %69, %v62
  %v71 = vpop.permute.xlu0 %70
  %74 = vset.pattern.permute.xlu0 0
  %75 = vperm.xlu0 %74, %v63
  %v76 = vpop.permute.xlu0 %75
  %79 = vset.pattern.permute.xlu0 0
  %80 = vperm.xlu0 %79, %v64
  %v81 = vpop.permute.xlu0 %80
  %84 = vset.pattern.permute.xlu0 0
  %85 = vperm.xlu0 %84, %v65
  %v86 = vpop.permute.xlu0 %85
  %89 = vset.pattern.permute.xlu0 0
  %90 = vperm.xlu0 %89, %v66
  %v91 = vpop.permute.xlu0 %90
  %94 = vset.pattern.permute.xlu0 0
  %95 = vperm.xlu0 %94, %v67
  %v96 = vpop.permute.xlu0 %95
  %v104 = vunpack.c.l.b16 %v38
  %v105 = vunpack.c.h.b16 %v38
  %v106 = vunpack.c.l.b16 %v39
  %v107 = vunpack.c.h.b16 %v39
  %v108 = vunpack.c.l.b16 %v40
  %v109 = vunpack.c.h.b16 %v40
  %v110 = vunpack.c.l.b16 %v41
  %v111 = vunpack.c.h.b16 %v41
  %v112 = vunpack.c.l.b16 %v42
  %v113 = vunpack.c.h.b16 %v42
  %v114 = vunpack.c.l.b16 %v43
  %v115 = vunpack.c.h.b16 %v43
  %v116 = vpack.c.b16 %v106, %v104
  %v117 = vpack.c.b16 %v107, %v105
  %v118 = vpack.c.b16 %v110, %v108
  %v119 = vpack.c.b16 %v111, %v109
  %v120 = vpack.c.b16 %v114, %v112
  %v121 = vpack.c.b16 %v115, %v113
  %v143 = vunpack.c.l.b16 %v44
  %v144 = vunpack.c.l.b16 %v45
  %v145 = vunpack.c.l.b16 %v46
  %v146 = vunpack.c.l.b16 %v47
  %v147 = vunpack.c.l.b16 %v48
  %v148 = vunpack.c.l.b16 %v49
  %v149 = vunpack.c.l.b16 %v50
  %v150 = vunpack.c.l.b16 %v51
  %v151 = vunpack.c.l.b16 %v52
  %v152 = vunpack.c.l.b16 %v53
  %v153 = vunpack.c.l.b16 %v54
  %v154 = vunpack.c.l.b16 %v55
  %v155 = vunpack.c.l.b16 %v56
  %v156 = vunpack.c.l.b16 %v57
  %v157 = vunpack.c.l.b16 %v58
  %v158 = vunpack.c.l.b16 %v59
  %v159 = vunpack.c.l.b16 %v60
  %v160 = vunpack.c.l.b16 %v61
  %v161 = vpack.c.b16 %v144, %v143
  %v162 = vpack.c.b16 %v146, %v145
  %v163 = vpack.c.b16 %v148, %v147
  %v164 = vpack.c.b16 %v150, %v149
  %v165 = vpack.c.b16 %v152, %v151
  %v166 = vpack.c.b16 %v154, %v153
  %v167 = vpack.c.b16 %v156, %v155
  %v168 = vpack.c.b16 %v158, %v157
  %v169 = vpack.c.b16 %v160, %v159
  %vm179 = vcmask 130048
  %v181 = vsel %vm179, %v117, 0
  %v184 = vsel %vm179, %v119, 0
  %v187 = vsel %vm179, %v121, 0
  %189 = vmatprep.subr.bf16.mxu0 0
  %190 = vmatpush1.bf16.msra.mxu0 %v168
  %191 = vmatprep.subr.bf16.mxu0 0
  %192 = vmatpush1.bf16.msra.mxu0 %v167
  %193 = vmatprep.subr.bf16.mxu0 0
  %194 = vmatpush1.bf16.msra.mxu0 %v166
  %195 = vmatprep.subr.bf16.mxu0 0
  %196 = vmatpush1.bf16.msra.mxu0 %v165
  %197 = vmatprep.subr.bf16.mxu0 0
  %198 = vmatpush1.bf16.msra.mxu0 %v164
  %199 = vmatprep.subr.bf16.mxu0 0
  %200 = vmatpush1.bf16.msra.mxu0 %v163
  %201 = vmatprep.subr.bf16.mxu0 0
  %202 = vmatpush1.bf16.msra.mxu0 %v162
  %203 = vmatprep.subr.bf16.mxu0 0
  %204 = vmatpush1.bf16.msra.mxu0 %v161
  %205 = vmatprep.subr.bf16.mxu0 0
  %206 = vmatpush2.bf16.msra.mxu0 0
  %207 = vmatprep.subr.bf16.mxu0 0
  %208 = vmatpush2.bf16.msra.mxu0 0
  %209 = vmatprep.subr.bf16.mxu0 0
  %210 = vmatpush2.bf16.msra.mxu0 0
  %211 = vmatprep.subr.bf16.mxu0 0
  %212 = vmatpush2.bf16.msra.mxu0 0
  %213 = vmatprep.subr.bf16.mxu0 0
  %214 = vmatpush2.bf16.msra.mxu0 0
  %215 = vmatprep.subr.bf16.mxu0 0
  %216 = vmatpush2.bf16.msra.mxu0 0
  %217 = vmatprep.subr.bf16.mxu0 0
  %218 = vmatpush2.bf16.msra.mxu0 0
  %219 = vmatprep.subr.bf16.mxu0 0
  %220 = vmatpush2.bf16.msra.mxu0 %v169
  %221 = vmatprep.mubr.bf16.mxu0 %v181
  %222 = vmatmul.mubr.bf16.gmra.mxu0 %v116
  %v223 = vpop.f32.mrf.mxu0
  %v224 = vadd.f32 %v71, %v223
  %v225 = vpop.f32.mrf.mxu0
  %v226 = vpop.f32.mrf.mxu0
  %v227 = vadd.f32 %v76, %v226
  %v228 = vpop.f32.mrf.mxu0
  %229 = vmatprep.mubr.bf16.mxu0 %v184
  %230 = vmatmul.mubr.bf16.gmra.mxu0 %v118
  %v231 = vpop.f32.mrf.mxu0
  %v232 = vadd.f32 %v81, %v231
  %v233 = vpop.f32.mrf.mxu0
  %v234 = vpop.f32.mrf.mxu0
  %v235 = vadd.f32 %v86, %v234
  %v236 = vpop.f32.mrf.mxu0
  %237 = vmatprep.mubr.bf16.mxu0 %v187
  %238 = vmatmul.mubr.bf16.gmra.mxu0 %v120
  %v239 = vpop.f32.mrf.mxu0
  %v240 = vadd.f32 %v91, %v239
  %v241 = vpop.f32.mrf.mxu0
  %v242 = vpop.f32.mrf.mxu0
  %v243 = vadd.f32 %v96, %v242
  %v244 = vpop.f32.mrf.mxu0
  %245 = vdwg.mxu0
  %v246 = vld [vmem:[%s3] sm:$0xff]
  %v247 = vld [vmem:[%s3 + $0x8] sm:$0x3f]
  %v248 = vld [vmem:[%s4] sm:$0xf]
  %v249 = vld [vmem:[%s4 + $0x4] sm:$0xf]
  %v250 = vld [vmem:[%s4 + $0x8] sm:$0xf]
  %v251 = vld [vmem:[%s4 + $0xc] sm:$0xf]
  %v252 = vld [vmem:[%s4 + $0x10] sm:$0xf]
  %v253 = vld [vmem:[%s4 + $0x14] sm:$0xf]
  %v254 = vld [vmem:[%s4 + $0x18] sm:$0xf]
  %v255 = vld [vmem:[%s4 + $0x1c] sm:$0xf]
  %v256 = vld [vmem:[%s4 + $0x20] sm:$0xf]
  %v257 = vld [vmem:[%s4 + $0x24] sm:$0xf]
  %v258 = vld [vmem:[%s4 + $0x28] sm:$0xf]
  %v259 = vld [vmem:[%s4 + $0x2c] sm:$0xf]
  %v260 = vld [vmem:[%s4 + $0x30] sm:$0xf]
  %v261 = vld [vmem:[%s4 + $0x34] sm:$0xf]
  %v262 = vld [vmem:[%s4 + $0x38] sm:$0xf]
  %v263 = vld [vmem:[%s4 + $0x3c] sm:$0xf]
  %v264 = vld [vmem:[%s4 + $0x40] sm:$0xf]
  %v265 = vld [vmem:[%s4 + $0x44] sm:$0xf]
  %v266 = vld [vmem:[%s4 + $0x48] sm:$0xf]
  %v267 = vld [vmem:[%s4 + $0x4c] sm:$0xf]
  %v268 = vld [vmem:[%s4 + $0x50] sm:$0xf]
  %v269 = vld [vmem:[%s4 + $0x54] sm:$0xf]
  %v270 = vld [vmem:[%s4 + $0x58] sm:$0xf]
  %v271 = vld [vmem:[%s4 + $0x5c] sm:$0xf]
  %v272 = vld [vmem:[%s4 + $0x60] sm:$0xf]
  %v273 = vld [vmem:[%s4 + $0x64] sm:$0xf]
  %v274 = vld [vmem:[%s4 + $0x68] sm:$0xf]
  %v275 = vld [vmem:[%s4 + $0x6c] sm:$0xf]
  %v276 = vld [vmem:[%s4 + $0x70] sm:$0xf]
  %v277 = vld [vmem:[%s4 + $0x74] sm:$0xf]
  %v278 = vld [vmem:[%s4 + $0x78] sm:$0xf]
  %v279 = vld [vmem:[%s4 + $0x7c] sm:$0xf]
  %v280 = vld [vmem:[%s4 + $0x80] sm:$0xf]
  %v281 = vld [vmem:[%s4 + $0x84] sm:$0xf]
  %v282 = vld [vmem:[%s4 + $0x88] sm:$0xf]
  %v283 = vld [vmem:[%s4 + $0x8c] sm:$0xf]
  %v284 = vld [vmem:[%s4 + $0x90] sm:$0xf]
  %v285 = vld [vmem:[%s4 + $0x94] sm:$0xf]
  %v286 = vld [vmem:[%s4 + $0x98] sm:$0xf]
  %v287 = vld [vmem:[%s4 + $0x9c] sm:$0xf]
  %v288 = vld [vmem:[%s4 + $0xa0] sm:$0xf]
  %v289 = vld [vmem:[%s4 + $0xa4] sm:$0xf]
  %v290 = vld [vmem:[%s4 + $0xa8] sm:$0xf]
  %v291 = vld [vmem:[%s4 + $0xac] sm:$0xf]
  %v292 = vld [vmem:[%s4 + $0xb0] sm:$0xf]
  %v293 = vld [vmem:[%s4 + $0xb4] sm:$0xf]
  %v294 = vld [vmem:[%s4 + $0xb8] sm:$0xf]
  %v295 = vld [vmem:[%s4 + $0xbc] sm:$0xf]
  %v296 = vld [vmem:[%s4 + $0xc0] sm:$0xf]
  %v297 = vld [vmem:[%s4 + $0xc4] sm:$0xf]
  %v298 = vld [vmem:[%s4 + $0xc8] sm:$0xf]
  %v299 = vld [vmem:[%s4 + $0xcc] sm:$0xf]
  %v300 = vld [vmem:[%s4 + $0xd0] sm:$0xf]
  %v301 = vld [vmem:[%s4 + $0xd4] sm:$0xf]
  %v302 = vld [vmem:[%s4 + $0xd8] sm:$0xf]
  %v303 = vld [vmem:[%s4 + $0xdc] sm:$0xf]
  %v304 = vld [vmem:[%s4 + $0xe0] sm:$0xf]
  %v305 = vld [vmem:[%s4 + $0xe4] sm:$0xf]
  %v306 = vld [vmem:[%s4 + $0xe8] sm:$0xf]
  %v307 = vld [vmem:[%s4 + $0xec] sm:$0xf]
  %v308 = vld [vmem:[%s4 + $0xf0] sm:$0xf]
  %v309 = vld [vmem:[%s4 + $0xf4] sm:$0xf]
  %v310 = vld [vmem:[%s4 + $0xf8] sm:$0xf]
  %v311 = vld [vmem:[%s4 + $0xfc] sm:$0xf]
  %v312 = vld [vmem:[%s4 + $0x100] sm:$0xf]
  %v313 = vld [vmem:[%s4 + $0x104] sm:$0xf]
  %v314 = vld [vmem:[%s4 + $0x108] sm:$0xf]
  %v315 = vld [vmem:[%s4 + $0x10c] sm:$0xf]
  %v316 = vld [vmem:[%s4 + $0x110] sm:$0xf]
  %v317 = vld [vmem:[%s4 + $0x114] sm:$0xf]
  %v318 = vld [vmem:[%s4 + $0x118] sm:$0xf]
  %v319 = vld [vmem:[%s4 + $0x11c] sm:$0xf]
  %v320 = vld [vmem:[%s4 + $0x120] sm:$0xf]
  %v321 = vld [vmem:[%s4 + $0x124] sm:$0xf]
  %v322 = vld [vmem:[%s4 + $0x128] sm:$0xf]
  %v323 = vld [vmem:[%s4 + $0x12c] sm:$0xf]
  %v324 = vld [vmem:[%s4 + $0x130] sm:$0xf]
  %v325 = vld [vmem:[%s4 + $0x134] sm:$0xf]
  %v326 = vld [vmem:[%s4 + $0x138] sm:$0xf]
  %v327 = vld [vmem:[%s4 + $0x13c] sm:$0xf]
  %v328 = vld [vmem:[%s4 + $0x140] sm:$0xf]
  %v329 = vld [vmem:[%s4 + $0x144] sm:$0xf]
  %v330 = vld [vmem:[%s4 + $0x148] sm:$0xf]
  %v331 = vld [vmem:[%s4 + $0x14c] sm:$0xf]
  %v332 = vld [vmem:[%s4 + $0x150] sm:$0xf]
  %v333 = vld [vmem:[%s4 + $0x154] sm:$0xf]
  %v334 = vld [vmem:[%s4 + $0x158] sm:$0xf]
  %v335 = vld [vmem:[%s4 + $0x15c] sm:$0xf]
  %v336 = vld [vmem:[%s4 + $0x160] sm:$0xf]
  %v337 = vld [vmem:[%s4 + $0x164] sm:$0xf]
  %v338 = vld [vmem:[%s4 + $0x168] sm:$0xf]
  %v339 = vld [vmem:[%s4 + $0x16c] sm:$0xf]
  %v340 = vld [vmem:[%s4 + $0x170] sm:$0xf]
  %v341 = vld [vmem:[%s4 + $0x174] sm:$0xf]
  %v342 = vld [vmem:[%s4 + $0x178] sm:$0xf]
  %v343 = vld [vmem:[%s4 + $0x17c] sm:$0xf]
  %v344 = vld [vmem:[%s4 + $0x180] sm:$0xf]
  %v345 = vld [vmem:[%s4 + $0x184] sm:$0xf]
  %v346 = vld [vmem:[%s4 + $0x188] sm:$0xf]
  %v347 = vld [vmem:[%s4 + $0x18c] sm:$0xf]
  %v348 = vld [vmem:[%s5] sm:$0xf]
  %350 = vset.pattern.permute.xlu0 0
  %351 = vperm.xlu0 %350, %v348
  %v352 = vpop.permute.xlu0 %351
  %v356 = vcombine.high %v246, %v246
  %v358 = vunpack.c.l.s4 1983009808
  %v359 = vunpack.c.0.s8 %v358
  %v360 = vlaneseq
  %v361 = vshrl.u32 %v360, 7
  %v362 = vsub.s32 %v359, %v361
  %v363 = vrot.slane %v246, %v362
  %v365 = vunpack.c.l.s4 1983009808
  %v366 = vunpack.c.0.s8 %v365
  %v367 = vlaneseq
  %v368 = vshrl.u32 %v367, 7
  %v369 = vsub.s32 %v366, %v368
  %v370 = vrot.slane %v356, %v369
  %v371 = vcombine.high %v363, %v363
  %v372 = vcombine.high %v370, %v370
  %v373 = vcombine.high %v247, %v247
  %v375 = vunpack.c.l.s4 1983009808
  %v376 = vunpack.c.0.s8 %v375
  %v377 = vlaneseq
  %v378 = vshrl.u32 %v377, 7
  %v379 = vsub.s32 %v376, %v378
  %v380 = vrot.slane %v247, %v379
  %v382 = vunpack.c.l.s4 1983009808
  %v383 = vunpack.c.0.s8 %v382
  %v384 = vlaneseq
  %v385 = vshrl.u32 %v384, 7
  %v386 = vsub.s32 %v383, %v385
  %v387 = vrot.slane %v373, %v386
  %v388 = vcombine.high %v380, %v380
  %v495 = vunpack.c.l.b16 %v248
  %v496 = vunpack.c.l.b16 %v249
  %v497 = vunpack.c.l.b16 %v250
  %v498 = vunpack.c.l.b16 %v251
  %v499 = vunpack.c.l.b16 %v252
  %v500 = vunpack.c.l.b16 %v253
  %v501 = vunpack.c.l.b16 %v254
  %v502 = vunpack.c.l.b16 %v255
  %v503 = vunpack.c.l.b16 %v256
  %v504 = vunpack.c.l.b16 %v257
  %v505 = vunpack.c.l.b16 %v258
  %v506 = vunpack.c.l.b16 %v259
  %v507 = vunpack.c.l.b16 %v260
  %v508 = vunpack.c.l.b16 %v261
  %v509 = vunpack.c.l.b16 %v262
  %v510 = vunpack.c.l.b16 %v263
  %v511 = vunpack.c.l.b16 %v264
  %v512 = vunpack.c.l.b16 %v265
  %v513 = vunpack.c.l.b16 %v266
  %v514 = vunpack.c.l.b16 %v267
  %v515 = vunpack.c.l.b16 %v268
  %v516 = vunpack.c.l.b16 %v269
  %v517 = vunpack.c.l.b16 %v270
  %v518 = vunpack.c.l.b16 %v271
  %v519 = vunpack.c.l.b16 %v272
  %v520 = vunpack.c.l.b16 %v273
  %v521 = vunpack.c.l.b16 %v274
  %v522 = vunpack.c.l.b16 %v275
  %v523 = vunpack.c.l.b16 %v276
  %v524 = vunpack.c.l.b16 %v277
  %v525 = vunpack.c.l.b16 %v278
  %v526 = vunpack.c.l.b16 %v279
  %v527 = vunpack.c.l.b16 %v280
  %v528 = vunpack.c.l.b16 %v281
  %v529 = vunpack.c.l.b16 %v282
  %v530 = vunpack.c.l.b16 %v283
  %v531 = vunpack.c.l.b16 %v284
  %v532 = vunpack.c.l.b16 %v285
  %v533 = vunpack.c.l.b16 %v286
  %v534 = vunpack.c.l.b16 %v287
  %v535 = vunpack.c.l.b16 %v288
  %v536 = vunpack.c.l.b16 %v289
  %v537 = vunpack.c.l.b16 %v290
  %v538 = vunpack.c.l.b16 %v291
  %v539 = vunpack.c.l.b16 %v292
  %v540 = vunpack.c.l.b16 %v293
  %v541 = vunpack.c.l.b16 %v294
  %v542 = vunpack.c.l.b16 %v295
  %v543 = vunpack.c.l.b16 %v296
  %v544 = vunpack.c.l.b16 %v297
  %v545 = vunpack.c.l.b16 %v298
  %v546 = vunpack.c.l.b16 %v299
  %v547 = vunpack.c.l.b16 %v300
  %v548 = vunpack.c.l.b16 %v301
  %v549 = vunpack.c.l.b16 %v302
  %v550 = vunpack.c.l.b16 %v303
  %v551 = vunpack.c.l.b16 %v304
  %v552 = vunpack.c.l.b16 %v305
  %v553 = vunpack.c.l.b16 %v306
  %v554 = vunpack.c.l.b16 %v307
  %v555 = vunpack.c.l.b16 %v308
  %v556 = vunpack.c.l.b16 %v309
  %v557 = vunpack.c.l.b16 %v310
  %v558 = vunpack.c.l.b16 %v311
  %v559 = vunpack.c.l.b16 %v312
  %v560 = vunpack.c.l.b16 %v313
  %v561 = vunpack.c.l.b16 %v314
  %v562 = vunpack.c.l.b16 %v315
  %v563 = vunpack.c.l.b16 %v316
  %v564 = vunpack.c.l.b16 %v317
  %v565 = vunpack.c.l.b16 %v318
  %v566 = vunpack.c.l.b16 %v319
  %v567 = vunpack.c.l.b16 %v320
  %v568 = vunpack.c.l.b16 %v321
  %v569 = vunpack.c.l.b16 %v322
  %v570 = vunpack.c.l.b16 %v323
  %v571 = vunpack.c.l.b16 %v324
  %v572 = vunpack.c.l.b16 %v325
  %v573 = vunpack.c.l.b16 %v326
  %v574 = vunpack.c.l.b16 %v327
  %v575 = vunpack.c.l.b16 %v328
  %v576 = vunpack.c.l.b16 %v329
  %v577 = vunpack.c.l.b16 %v330
  %v578 = vunpack.c.l.b16 %v331
  %v579 = vunpack.c.l.b16 %v332
  %v580 = vunpack.c.l.b16 %v333
  %v581 = vunpack.c.l.b16 %v334
  %v582 = vunpack.c.l.b16 %v335
  %v583 = vunpack.c.l.b16 %v336
  %v584 = vunpack.c.l.b16 %v337
  %v585 = vunpack.c.l.b16 %v338
  %v586 = vunpack.c.l.b16 %v339
  %v587 = vunpack.c.l.b16 %v340
  %v588 = vunpack.c.l.b16 %v341
  %v589 = vunpack.c.l.b16 %v342
  %v590 = vunpack.c.l.b16 %v343
  %v591 = vunpack.c.l.b16 %v344
  %v592 = vunpack.c.l.b16 %v345
  %v593 = vunpack.c.l.b16 %v346
  %v594 = vunpack.c.l.b16 %v347
  %v595 = vpack.c.b16 %v496, %v495
  %v596 = vpack.c.b16 %v498, %v497
  %v597 = vpack.c.b16 %v500, %v499
  %v598 = vpack.c.b16 %v502, %v501
  %v599 = vpack.c.b16 %v504, %v503
  %v600 = vpack.c.b16 %v506, %v505
  %v601 = vpack.c.b16 %v508, %v507
  %v602 = vpack.c.b16 %v510, %v509
  %v603 = vpack.c.b16 %v512, %v511
  %v604 = vpack.c.b16 %v514, %v513
  %v605 = vpack.c.b16 %v516, %v515
  %v606 = vpack.c.b16 %v518, %v517
  %v607 = vpack.c.b16 %v520, %v519
  %v608 = vpack.c.b16 %v522, %v521
  %v609 = vpack.c.b16 %v524, %v523
  %v610 = vpack.c.b16 %v526, %v525
  %v611 = vpack.c.b16 %v528, %v527
  %v612 = vpack.c.b16 %v530, %v529
  %v613 = vpack.c.b16 %v532, %v531
  %v614 = vpack.c.b16 %v534, %v533
  %v615 = vpack.c.b16 %v536, %v535
  %v616 = vpack.c.b16 %v538, %v537
  %v617 = vpack.c.b16 %v540, %v539
  %v618 = vpack.c.b16 %v542, %v541
  %v619 = vpack.c.b16 %v544, %v543
  %v620 = vpack.c.b16 %v546, %v545
  %v621 = vpack.c.b16 %v548, %v547
  %v622 = vpack.c.b16 %v550, %v549
  %v623 = vpack.c.b16 %v552, %v551
  %v624 = vpack.c.b16 %v554, %v553
  %v625 = vpack.c.b16 %v556, %v555
  %v626 = vpack.c.b16 %v558, %v557
  %v627 = vpack.c.b16 %v560, %v559
  %v628 = vpack.c.b16 %v562, %v561
  %v629 = vpack.c.b16 %v564, %v563
  %v630 = vpack.c.b16 %v566, %v565
  %v631 = vpack.c.b16 %v568, %v567
  %v632 = vpack.c.b16 %v570, %v569
  %v633 = vpack.c.b16 %v572, %v571
  %v634 = vpack.c.b16 %v574, %v573
  %v635 = vpack.c.b16 %v576, %v575
  %v636 = vpack.c.b16 %v578, %v577
  %v637 = vpack.c.b16 %v580, %v579
  %v638 = vpack.c.b16 %v582, %v581
  %v639 = vpack.c.b16 %v584, %v583
  %v640 = vpack.c.b16 %v586, %v585
  %v641 = vpack.c.b16 %v588, %v587
  %v642 = vpack.c.b16 %v590, %v589
  %v643 = vpack.c.b16 %v592, %v591
  %v644 = vpack.c.b16 %v594, %v593
  %vm695 = vcmask 261120
  %v697 = vsel %vm695, %v387, 0
  %699 = vmatprep.subr.bf16.mxu0 0
  %700 = vmatpush1.bf16.msra.mxu0 %v602
  %701 = vmatprep.subr.bf16.mxu0 0
  %702 = vmatpush1.bf16.msra.mxu0 %v601
  %703 = vmatprep.subr.bf16.mxu0 0
  %704 = vmatpush1.bf16.msra.mxu0 %v600
  %705 = vmatprep.subr.bf16.mxu0 0
  %706 = vmatpush1.bf16.msra.mxu0 %v599
  %707 = vmatprep.subr.bf16.mxu0 0
  %708 = vmatpush1.bf16.msra.mxu0 %v598
  %709 = vmatprep.subr.bf16.mxu0 0
  %710 = vmatpush1.bf16.msra.mxu0 %v597
  %711 = vmatprep.subr.bf16.mxu0 0
  %712 = vmatpush1.bf16.msra.mxu0 %v596
  %713 = vmatprep.subr.bf16.mxu0 0
  %714 = vmatpush1.bf16.msra.mxu0 %v595
  %715 = vmatprep.subr.bf16.mxu0 0
  %716 = vmatpush2.bf16.msra.mxu0 %v610
  %717 = vmatprep.subr.bf16.mxu0 0
  %718 = vmatpush2.bf16.msra.mxu0 %v609
  %719 = vmatprep.subr.bf16.mxu0 0
  %720 = vmatpush2.bf16.msra.mxu0 %v608
  %721 = vmatprep.subr.bf16.mxu0 0
  %722 = vmatpush2.bf16.msra.mxu0 %v607
  %723 = vmatprep.subr.bf16.mxu0 0
  %724 = vmatpush2.bf16.msra.mxu0 %v606
  %725 = vmatprep.subr.bf16.mxu0 0
  %726 = vmatpush2.bf16.msra.mxu0 %v605
  %727 = vmatprep.subr.bf16.mxu0 0
  %728 = vmatpush2.bf16.msra.mxu0 %v604
  %729 = vmatprep.subr.bf16.mxu0 0
  %730 = vmatpush2.bf16.msra.mxu0 %v603
  %731 = vmatprep.mubr.bf16.mxu0 %v371
  %732 = vmatmul.mubr.bf16.gmra.mxu0 %v363
  %v733 = vpop.f32.mrf.mxu0
  %v734 = vadd.f32 %v352, %v733
  %v735 = vpop.f32.mrf.mxu0
  %v736 = vpop.f32.mrf.mxu0
  %v737 = vpop.f32.mrf.mxu0
  %738 = vdwg.mxu0
  %739 = vmatprep.subr.bf16.mxu0 0
  %740 = vmatpush1.bf16.msra.mxu0 %v618
  %741 = vmatprep.subr.bf16.mxu0 0
  %742 = vmatpush1.bf16.msra.mxu0 %v617
  %743 = vmatprep.subr.bf16.mxu0 0
  %744 = vmatpush1.bf16.msra.mxu0 %v616
  %745 = vmatprep.subr.bf16.mxu0 0
  %746 = vmatpush1.bf16.msra.mxu0 %v615
  %747 = vmatprep.subr.bf16.mxu0 0
  %748 = vmatpush1.bf16.msra.mxu0 %v614
  %749 = vmatprep.subr.bf16.mxu0 0
  %750 = vmatpush1.bf16.msra.mxu0 %v613
  %751 = vmatprep.subr.bf16.mxu0 0
  %752 = vmatpush1.bf16.msra.mxu0 %v612
  %753 = vmatprep.subr.bf16.mxu0 0
  %754 = vmatpush1.bf16.msra.mxu0 %v611
  %755 = vmatprep.subr.bf16.mxu0 0
  %756 = vmatpush2.bf16.msra.mxu0 %v626
  %757 = vmatprep.subr.bf16.mxu0 0
  %758 = vmatpush2.bf16.msra.mxu0 %v625
  %759 = vmatprep.subr.bf16.mxu0 0
  %760 = vmatpush2.bf16.msra.mxu0 %v624
  %761 = vmatprep.subr.bf16.mxu0 0
  %762 = vmatpush2.bf16.msra.mxu0 %v623
  %763 = vmatprep.subr.bf16.mxu0 0
  %764 = vmatpush2.bf16.msra.mxu0 %v622
  %765 = vmatprep.subr.bf16.mxu0 0
  %766 = vmatpush2.bf16.msra.mxu0 %v621
  %767 = vmatprep.subr.bf16.mxu0 0
  %768 = vmatpush2.bf16.msra.mxu0 %v620
  %769 = vmatprep.subr.bf16.mxu0 0
  %770 = vmatpush2.bf16.msra.mxu0 %v619
  %771 = vmatprep.mubr.bf16.mxu0 %v372
  %772 = vmatmul.mubr.bf16.gmra.mxu0 %v370
  %v773 = vpop.f32.mrf.mxu0
  %v774 = vadd.f32 %v734, %v773
  %v775 = vpop.f32.mrf.mxu0
  %v776 = vpop.f32.mrf.mxu0
  %v777 = vpop.f32.mrf.mxu0
  %778 = vdwg.mxu0
  %779 = vmatprep.subr.bf16.mxu0 0
  %780 = vmatpush1.bf16.msra.mxu0 %v634
  %781 = vmatprep.subr.bf16.mxu0 0
  %782 = vmatpush1.bf16.msra.mxu0 %v633
  %783 = vmatprep.subr.bf16.mxu0 0
  %784 = vmatpush1.bf16.msra.mxu0 %v632
  %785 = vmatprep.subr.bf16.mxu0 0
  %786 = vmatpush1.bf16.msra.mxu0 %v631
  %787 = vmatprep.subr.bf16.mxu0 0
  %788 = vmatpush1.bf16.msra.mxu0 %v630
  %789 = vmatprep.subr.bf16.mxu0 0
  %790 = vmatpush1.bf16.msra.mxu0 %v629
  %791 = vmatprep.subr.bf16.mxu0 0
  %792 = vmatpush1.bf16.msra.mxu0 %v628
  %793 = vmatprep.subr.bf16.mxu0 0
  %794 = vmatpush1.bf16.msra.mxu0 %v627
  %795 = vmatprep.subr.bf16.mxu0 0
  %796 = vmatpush2.bf16.msra.mxu0 %v642
  %797 = vmatprep.subr.bf16.mxu0 0
  %798 = vmatpush2.bf16.msra.mxu0 %v641
  %799 = vmatprep.subr.bf16.mxu0 0
  %800 = vmatpush2.bf16.msra.mxu0 %v640
  %801 = vmatprep.subr.bf16.mxu0 0
  %802 = vmatpush2.bf16.msra.mxu0 %v639
  %803 = vmatprep.subr.bf16.mxu0 0
  %804 = vmatpush2.bf16.msra.mxu0 %v638
  %805 = vmatprep.subr.bf16.mxu0 0
  %806 = vmatpush2.bf16.msra.mxu0 %v637
  %807 = vmatprep.subr.bf16.mxu0 0
  %808 = vmatpush2.bf16.msra.mxu0 %v636
  %809 = vmatprep.subr.bf16.mxu0 0
  %810 = vmatpush2.bf16.msra.mxu0 %v635
  %811 = vmatprep.mubr.bf16.mxu0 %v388
  %812 = vmatmul.mubr.bf16.gmra.mxu0 %v380
  %v813 = vpop.f32.mrf.mxu0
  %v814 = vadd.f32 %v774, %v813
  %v815 = vpop.f32.mrf.mxu0
  %v816 = vpop.f32.mrf.mxu0
  %v817 = vpop.f32.mrf.mxu0
  %818 = vdwg.mxu0
  %819 = vmatprep.subr.bf16.mxu0 0
  %820 = vmatpush1.bf16.msra.mxu0 0
  %821 = vmatprep.subr.bf16.mxu0 0
  %822 = vmatpush1.bf16.msra.mxu0 0
  %823 = vmatprep.subr.bf16.mxu0 0
  %824 = vmatpush1.bf16.msra.mxu0 0
  %825 = vmatprep.subr.bf16.mxu0 0
  %826 = vmatpush1.bf16.msra.mxu0 0
  %827 = vmatprep.subr.bf16.mxu0 0
  %828 = vmatpush1.bf16.msra.mxu0 0
  %829 = vmatprep.subr.bf16.mxu0 0
  %830 = vmatpush1.bf16.msra.mxu0 0
  %831 = vmatprep.subr.bf16.mxu0 0
  %832 = vmatpush1.bf16.msra.mxu0 %v644
  %833 = vmatprep.subr.bf16.mxu0 0
  %834 = vmatpush1.bf16.msra.mxu0 %v643
  %835 = vmatprep.subr.bf16.mxu0 0
  %836 = vmatpush2.bf16.msra.mxu0 0
  %837 = vmatprep.subr.bf16.mxu0 0
  %838 = vmatpush2.bf16.msra.mxu0 0
  %839 = vmatprep.subr.bf16.mxu0 0
  %840 = vmatpush2.bf16.msra.mxu0 0
  %841 = vmatprep.subr.bf16.mxu0 0
  %842 = vmatpush2.bf16.msra.mxu0 0
  %843 = vmatprep.subr.bf16.mxu0 0
  %844 = vmatpush2.bf16.msra.mxu0 0
  %845 = vmatprep.subr.bf16.mxu0 0
  %846 = vmatpush2.bf16.msra.mxu0 0
  %847 = vmatprep.subr.bf16.mxu0 0
  %848 = vmatpush2.bf16.msra.mxu0 0
  %849 = vmatprep.subr.bf16.mxu0 0
  %850 = vmatpush2.bf16.msra.mxu0 0
  %851 = vmatprep.mubr.bf16.mxu0 0
  %852 = vmatmul.mubr.bf16.gmra.mxu0 %v697
  %v853 = vpop.f32.mrf.mxu0
  %v854 = vadd.f32 %v814, %v853
  %v855 = vpop.f32.mrf.mxu0
  %v856 = vpop.f32.mrf.mxu0
  %v857 = vpop.f32.mrf.mxu0
  %858 = vdwg.mxu0
  %vm859 = vcmask 257024
  %v860 = vsel %vm859, %v854, inf
  %861 = vmin.xlane.f32.xlu0 %v860
  %v862 = vpop.xlane.xlu0 %861
  %v863 = vrot.slane %v862, 4
  %v864 = vmin.f32 %v862, %v863
  %v865 = vrot.slane %v864, 2
  %v866 = vmin.f32 %v864, %v865
  %v867 = vrot.slane %v866, 1
  %v868 = vmin.f32 %v866, %v867
  %s869 = vtos %v868
  %v870 = vsel %vm859, %v854, -inf
  %871 = vmax.xlane.f32.xlu0 %v870
  %v872 = vpop.xlane.xlu0 %871
  %v873 = vrot.slane %v872, 4
  %v874 = vmax.f32 %v872, %v873
  %v875 = vrot.slane %v874, 2
  %v876 = vmax.f32 %v874, %v875
  %v877 = vrot.slane %v876, 1
  %v878 = vmax.f32 %v876, %v877
  %s879 = vtos %v878
  %v880 = vstv %s869
  %v881 = vsub.f32 %v854, %v880
  %s882 = ssub.f32 %s879, %s869
  %v883 = vstv %s882
  %v884 = vrcp.pop %v883
  %v885 = vmul.f32 %v881, %v884
  %v886 = vmul.f32 %v885, 2.0
  %v887 = vsub.f32 %v886, 1.0
  %v888 = vld [vmem:[%s8] sm:$0x1]
  %v889 = vlaneseq
  %v890 = vshrl.u32 %v889, 7
  %v891 = vadd.s32 %v890, 8
  %v892 = vadd.s32 %v890, 16
  %v893 = vadd.s32 %v890, 24
  %v894 = vadd.f32 %v887, 1.0
  %v895 = vmul.f32 %v894, 4.0
  %v896 = vsub.f32 %v895, 1.0
  %v897 = vmul.f32 %v896, 0.5
  %v898 = vfloor.f32 %v897
  %v899 = vadd.f32 %v898, 1.0
  %v900 = vsub.f32 %v899, %v897
  %v902 = vrot.slane %v900, 1
  %v904 = vmul.f32 %v900, %v902
  %v905 = vsub.f32 %v897, %v898
  %v906 = vmul.f32 %v905, %v902
  %v908 = vrot.slane %v905, 1
  %v910 = vmul.f32 %v900, %v908
  %v911 = vmul.f32 %v905, %v908
  %vm912 = vcmp.ge.f32.partialorder %v898, 0.0
  %vm913 = vcmp.le.f32.partialorder %v898, 3.0
  %vm914 = vmand %vm912, %vm913
  %v915 = vsel %vm912, 1, 0
  %v916 = vrot.slane %v915, 1
  %vm917 = vcmp.ne.s32.totalorder %v916, 0
  %vm918 = vmand %vm914, %vm917
  %v919 = vsel %vm913, 1, 0
  %v920 = vrot.slane %v919, 1
  %vm921 = vcmp.ne.s32.totalorder %v920, 0
  %vm922 = vmand %vm918, %vm921
  %v923 = vmax.f32 %v898, 0.0
  %v924 = vmin.f32 %v923, 3.0
  %v925 = vcvt.f32.s32.to.zero.pseudo %v924
  %v926 = vmul.u32 %v925, 4
  %v928 = vunpack.c.l.s4 1966171168
  %v929 = vunpack.c.0.s8 %v928
  %v930 = vlaneseq
  %v931 = vshrl.u32 %v930, 7
  %v932 = vsub.s32 %v929, %v931
  %v933 = vrot.slane %v926, %v932
  %v934 = vcombine.high %v933, %v933
  %v936 = vunpack.c.l.s4 1966171168
  %v937 = vunpack.c.0.s8 %v936
  %v938 = vlaneseq
  %v939 = vshrl.u32 %v938, 7
  %v940 = vsub.s32 %v937, %v939
  %v941 = vrot.slane %v934, %v940
  %v942 = vadd.s32 %v888, %v941
  %v943 = vadd.s32 %v942, %v925
  %v944 = vlaneseq
  %v945 = vshrl.u32 %v944, 7
  %v946 = vsub.s32 0, %v945
  %v947 = vrot.slane %v943, %v946
  %vm948 = vcmp.eq.s32.totalorder %v890, %v947
  %vm949 = vcmp.eq.s32.totalorder %v891, %v947
  %vm950 = vcmp.eq.s32.totalorder %v892, %v947
  %vm951 = vcmp.eq.s32.totalorder %v893, %v947
  %v952 = vsel %vm922, 1, 0
  %v953 = vlaneseq
  %v954 = vshrl.u32 %v953, 7
  %v955 = vsub.s32 0, %v954
  %v956 = vrot.slane %v952, %v955
  %vm957 = vcmp.eq.s32.totalorder %v956, 1
  %vm958 = vmand %vm948, %vm957
  %vm959 = vmand %vm949, %vm957
  %vm960 = vmand %vm950, %vm957
  %vm961 = vmand %vm951, %vm957
  %v962 = vlaneseq
  %v963 = vshrl.u32 %v962, 7
  %v964 = vsub.s32 0, %v963
  %v965 = vrot.slane %v904, %v964
  %v966 = vsel %vm958, %v965, 0.0
  %v967 = vsel %vm959, %v965, 0.0
  %v968 = vsel %vm960, %v965, 0.0
  %v969 = vsel %vm961, %v965, 0.0
  %v970 = vadd.f32 %v966, 0.0
  %v971 = vadd.f32 %v967, 0.0
  %v972 = vadd.f32 %v968, 0.0
  %v973 = vadd.f32 %v969, 0.0
  %vm974 = vcmp.ge.f32.partialorder %v899, 0.0
  %vm975 = vcmp.le.f32.partialorder %v899, 3.0
  %vm976 = vmand %vm974, %vm975
  %vm977 = vmand %vm976, %vm917
  %vm978 = vmand %vm977, %vm921
  %v979 = vmax.f32 %v899, 0.0
  %v980 = vmin.f32 %v979, 3.0
  %v981 = vcvt.f32.s32.to.zero.pseudo %v980
  %v982 = vadd.s32 %v942, %v981
  %v983 = vlaneseq
  %v984 = vshrl.u32 %v983, 7
  %v985 = vsub.s32 0, %v984
  %v986 = vrot.slane %v982, %v985
  %vm987 = vcmp.eq.s32.totalorder %v890, %v986
  %vm988 = vcmp.eq.s32.totalorder %v891, %v986
  %vm989 = vcmp.eq.s32.totalorder %v892, %v986
  %vm990 = vcmp.eq.s32.totalorder %v893, %v986
  %v991 = vsel %vm978, 1, 0
  %v992 = vlaneseq
  %v993 = vshrl.u32 %v992, 7
  %v994 = vsub.s32 0, %v993
  %v995 = vrot.slane %v991, %v994
  %vm996 = vcmp.eq.s32.totalorder %v995, 1
  %vm997 = vmand %vm987, %vm996
  %vm998 = vmand %vm988, %vm996
  %vm999 = vmand %vm989, %vm996
  %vm1000 = vmand %vm990, %vm996
  %v1001 = vlaneseq
  %v1002 = vshrl.u32 %v1001, 7
  %v1003 = vsub.s32 0, %v1002
  %v1004 = vrot.slane %v906, %v1003
  %v1005 = vsel %vm997, %v1004, 0.0
  %v1006 = vsel %vm998, %v1004, 0.0
  %v1007 = vsel %vm999, %v1004, 0.0
  %v1008 = vsel %vm1000, %v1004, 0.0
  %v1009 = vadd.f32 %v970, %v1005
  %v1010 = vadd.f32 %v971, %v1006
  %v1011 = vadd.f32 %v972, %v1007
  %v1012 = vadd.f32 %v973, %v1008
  %v1013 = vsel %vm974, 1, 0
  %v1014 = vrot.slane %v1013, 1
  %vm1015 = vcmp.ne.s32.totalorder %v1014, 0
  %vm1016 = vmand %vm914, %vm1015
  %v1017 = vsel %vm975, 1, 0
  %v1018 = vrot.slane %v1017, 1
  %vm1019 = vcmp.ne.s32.totalorder %v1018, 0
  %vm1020 = vmand %vm1016, %vm1019
  %v1021 = vmul.u32 %v981, 4
  %v1023 = vunpack.c.l.s4 1966171168
  %v1024 = vunpack.c.0.s8 %v1023
  %v1025 = vlaneseq
  %v1026 = vshrl.u32 %v1025, 7
  %v1027 = vsub.s32 %v1024, %v1026
  %v1028 = vrot.slane %v1021, %v1027
  %v1029 = vcombine.high %v1028, %v1028
  %v1031 = vunpack.c.l.s4 1966171168
  %v1032 = vunpack.c.0.s8 %v1031
  %v1033 = vlaneseq
  %v1034 = vshrl.u32 %v1033, 7
  %v1035 = vsub.s32 %v1032, %v1034
  %v1036 = vrot.slane %v1029, %v1035
  %v1037 = vadd.s32 %v888, %v1036
  %v1038 = vadd.s32 %v1037, %v925
  %v1039 = vlaneseq
  %v1040 = vshrl.u32 %v1039, 7
  %v1041 = vsub.s32 0, %v1040
  %v1042 = vrot.slane %v1038, %v1041
  %vm1043 = vcmp.eq.s32.totalorder %v890, %v1042
  %vm1044 = vcmp.eq.s32.totalorder %v891, %v1042
  %vm1045 = vcmp.eq.s32.totalorder %v892, %v1042
  %vm1046 = vcmp.eq.s32.totalorder %v893, %v1042
  %v1047 = vsel %vm1020, 1, 0
  %v1048 = vlaneseq
  %v1049 = vshrl.u32 %v1048, 7
  %v1050 = vsub.s32 0, %v1049
  %v1051 = vrot.slane %v1047, %v1050
  %vm1052 = vcmp.eq.s32.totalorder %v1051, 1
  %vm1053 = vmand %vm1043, %vm1052
  %vm1054 = vmand %vm1044, %vm1052
  %vm1055 = vmand %vm1045, %vm1052
  %vm1056 = vmand %vm1046, %vm1052
  %v1057 = vlaneseq
  %v1058 = vshrl.u32 %v1057, 7
  %v1059 = vsub.s32 0, %v1058
  %v1060 = vrot.slane %v910, %v1059
  %v1061 = vsel %vm1053, %v1060, 0.0
  %v1062 = vsel %vm1054, %v1060, 0.0
  %v1063 = vsel %vm1055, %v1060, 0.0
  %v1064 = vsel %vm1056, %v1060, 0.0
  %v1065 = vadd.f32 %v1009, %v1061
  %v1066 = vadd.f32 %v1010, %v1062
  %v1067 = vadd.f32 %v1011, %v1063
  %v1068 = vadd.f32 %v1012, %v1064
  %vm1069 = vmand %vm976, %vm1015
  %vm1070 = vmand %vm1069, %vm1019
  %v1071 = vadd.s32 %v1037, %v981
  %v1072 = vlaneseq
  %v1073 = vshrl.u32 %v1072, 7
  %v1074 = vsub.s32 0, %v1073
  %v1075 = vrot.slane %v1071, %v1074
  %vm1076 = vcmp.eq.s32.totalorder %v890, %v1075
  %vm1077 = vcmp.eq.s32.totalorder %v891, %v1075
  %vm1078 = vcmp.eq.s32.totalorder %v892, %v1075
  %vm1079 = vcmp.eq.s32.totalorder %v893, %v1075
  %v1080 = vsel %vm1070, 1, 0
  %v1081 = vlaneseq
  %v1082 = vshrl.u32 %v1081, 7
  %v1083 = vsub.s32 0, %v1082
  %v1084 = vrot.slane %v1080, %v1083
  %vm1085 = vcmp.eq.s32.totalorder %v1084, 1
  %vm1086 = vmand %vm1076, %vm1085
  %vm1087 = vmand %vm1077, %vm1085
  %vm1088 = vmand %vm1078, %vm1085
  %vm1089 = vmand %vm1079, %vm1085
  %v1090 = vlaneseq
  %v1091 = vshrl.u32 %v1090, 7
  %v1092 = vsub.s32 0, %v1091
  %v1093 = vrot.slane %v911, %v1092
  %v1094 = vsel %vm1086, %v1093, 0.0
  %v1095 = vsel %vm1087, %v1093, 0.0
  %v1096 = vsel %vm1088, %v1093, 0.0
  %v1097 = vsel %vm1089, %v1093, 0.0
  %v1098 = vadd.f32 %v1065, %v1094
  %v1099 = vadd.f32 %v1066, %v1095
  %v1100 = vadd.f32 %v1067, %v1096
  %v1101 = vadd.f32 %v1068, %v1097
  %v1103 = vsel %vm695, %v36, 0
  %v1106 = vsel %vm695, %v37, 0
  %1108 = vmatprep.subr.mxu0 0.0
  %1109 = vmatpush1.msra.mxu0 0.0
  %1110 = vmatprep.subr.mxu0 0.0
  %1111 = vmatpush1.msra.mxu0 0.0
  %1112 = vmatprep.subr.mxu0 0.0
  %1113 = vmatpush1.msra.mxu0 0.0
  %1114 = vmatprep.subr.mxu0 0.0
  %1115 = vmatpush1.msra.mxu0 0.0
  %1116 = vmatprep.subr.mxu0 0.0
  %1117 = vmatpush1.msra.mxu0 0.0
  %1118 = vmatprep.subr.mxu0 0.0
  %1119 = vmatpush1.msra.mxu0 0.0
  %1120 = vmatprep.subr.mxu0 0.0
  %1121 = vmatpush1.msra.mxu0 0.0
  %1122 = vmatprep.subr.mxu0 0.0
  %1123 = vmatpush1.msra.mxu0 0.0
  %1124 = vmatprep.subr.mxu0 0.0
  %1125 = vmatpush1.msra.mxu0 0.0
  %1126 = vmatprep.subr.mxu0 0.0
  %1127 = vmatpush1.msra.mxu0 0.0
  %1128 = vmatprep.subr.mxu0 0.0
  %1129 = vmatpush1.msra.mxu0 0.0
  %1130 = vmatprep.subr.mxu0 0.0
  %1131 = vmatpush1.msra.mxu0 0.0
  %1132 = vmatprep.subr.mxu0 0.0
  %1133 = vmatpush1.msra.mxu0 %v1101
  %1134 = vmatprep.subr.mxu0 0.0
  %1135 = vmatpush1.msra.mxu0 %v1100
  %1136 = vmatprep.subr.mxu0 0.0
  %1137 = vmatpush1.msra.mxu0 %v1099
  %1138 = vmatprep.subr.mxu0 0.0
  %1139 = vmatpush1.msra.mxu0 %v1098
  %1140 = vmatprep.subr.mxu0 0.0
  %1141 = vmatpush2.msra.mxu0 0.0
  %1142 = vmatprep.subr.mxu0 0.0
  %1143 = vmatpush2.msra.mxu0 0.0
  %1144 = vmatprep.subr.mxu0 0.0
  %1145 = vmatpush2.msra.mxu0 0.0
  %1146 = vmatprep.subr.mxu0 0.0
  %1147 = vmatpush2.msra.mxu0 0.0
  %1148 = vmatprep.subr.mxu0 0.0
  %1149 = vmatpush2.msra.mxu0 0.0
  %1150 = vmatprep.subr.mxu0 0.0
  %1151 = vmatpush2.msra.mxu0 0.0
  %1152 = vmatprep.subr.mxu0 0.0
  %1153 = vmatpush2.msra.mxu0 0.0
  %1154 = vmatprep.subr.mxu0 0.0
  %1155 = vmatpush2.msra.mxu0 0.0
  %1156 = vmatprep.subr.mxu0 0.0
  %1157 = vmatpush2.msra.mxu0 0.0
  %1158 = vmatprep.subr.mxu0 0.0
  %1159 = vmatpush2.msra.mxu0 0.0
  %1160 = vmatprep.subr.mxu0 0.0
  %1161 = vmatpush2.msra.mxu0 0.0
  %1162 = vmatprep.subr.mxu0 0.0
  %1163 = vmatpush2.msra.mxu0 0.0
  %1164 = vmatprep.subr.mxu0 0.0
  %1165 = vmatpush2.msra.mxu0 0.0
  %1166 = vmatprep.subr.mxu0 0.0
  %1167 = vmatpush2.msra.mxu0 0.0
  %1168 = vmatprep.subr.mxu0 0.0
  %1169 = vmatpush2.msra.mxu0 0.0
  %1170 = vmatprep.subr.mxu0 0.0
  %1171 = vmatpush2.msra.mxu0 0.0
  %1172 = vmatprep.mubr.f32.mxu0 0.0
  %1173 = vmatmul.mubr.f32.gmra.mxu0 %v1103
  %v1174 = vpop.f32.mrf.mxu0
  %v1175 = vadd.f32 0.0, %v1174
  %v1176 = vpop.f32.mrf.mxu0
  %1177 = vmatprep.mubr.f32.mxu0 0.0
  %1178 = vmatmul.mubr.f32.gmra.mxu0 %v1106
  %v1179 = vpop.f32.mrf.mxu0
  %v1180 = vadd.f32 0.0, %v1179
  %v1181 = vpop.f32.mrf.mxu0
  %1182 = vdwg.mxu0
  %v1183 = vld [vmem:[%s6] sm:$0xff]
  %v1184 = vld [vmem:[%s6 + $0x8] sm:$0xff]
  %v1185 = vld [vmem:[%s6 + $0x10] sm:$0xff]
  %v1186 = vld [vmem:[%s6 + $0x18] sm:$0xff]
  %v1187 = vld [vmem:[%s6 + $0x20] sm:$0xff]
  %v1188 = vld [vmem:[%s6 + $0x28] sm:$0xff]
  %v1189 = vld [vmem:[%s7] sm:$0xff]
  %v1190 = vld [vmem:[%s7 + $0x8] sm:$0xff]
  %v1191 = vld [vmem:[%s7 + $0x10] sm:$0xff]
  %v1192 = vld [vmem:[%s7 + $0x18] sm:$0xff]
  %v1193 = vld [vmem:[%s7 + $0x20] sm:$0xff]
  %v1194 = vld [vmem:[%s7 + $0x28] sm:$0xff]
  %1196 = vset.pattern.permute.xlu0 0
  %1197 = vperm.xlu0 %1196, %v1189
  %v1198 = vpop.permute.xlu0 %1197
  %1201 = vset.pattern.permute.xlu0 0
  %1202 = vperm.xlu0 %1201, %v1190
  %v1203 = vpop.permute.xlu0 %1202
  %1206 = vset.pattern.permute.xlu0 0
  %1207 = vperm.xlu0 %1206, %v1191
  %v1208 = vpop.permute.xlu0 %1207
  %1211 = vset.pattern.permute.xlu0 0
  %1212 = vperm.xlu0 %1211, %v1192
  %v1213 = vpop.permute.xlu0 %1212
  %1216 = vset.pattern.permute.xlu0 0
  %1217 = vperm.xlu0 %1216, %v1193
  %v1218 = vpop.permute.xlu0 %1217
  %1221 = vset.pattern.permute.xlu0 0
  %1222 = vperm.xlu0 %1221, %v1194
  %v1223 = vpop.permute.xlu0 %1222
  %v1226 = vsel %vm179, %v1183, 0
  %v1229 = vsel %vm179, %v1184, 0
  %v1232 = vsel %vm179, %v1185, 0
  %v1235 = vsel %vm179, %v1186, 0
  %v1238 = vsel %vm179, %v1187, 0
  %v1241 = vsel %vm179, %v1188, 0
  %1243 = vmatprep.subr.mxu0 0.0
  %1244 = vmatpush1.msra.mxu0 0.0
  %1245 = vmatprep.subr.mxu0 0.0
  %1246 = vmatpush1.msra.mxu0 0.0
  %1247 = vmatprep.subr.mxu0 0.0
  %1248 = vmatpush1.msra.mxu0 0.0
  %1249 = vmatprep.subr.mxu0 0.0
  %1250 = vmatpush1.msra.mxu0 0.0
  %1251 = vmatprep.subr.mxu0 0.0
  %1252 = vmatpush1.msra.mxu0 0.0
  %1253 = vmatprep.subr.mxu0 0.0
  %1254 = vmatpush1.msra.mxu0 0.0
  %1255 = vmatprep.subr.mxu0 0.0
  %1256 = vmatpush1.msra.mxu0 0.0
  %1257 = vmatprep.subr.mxu0 0.0
  %1258 = vmatpush1.msra.mxu0 0.0
  %1259 = vmatprep.subr.mxu0 0.0
  %1260 = vmatpush1.msra.mxu0 0.0
  %1261 = vmatprep.subr.mxu0 0.0
  %1262 = vmatpush1.msra.mxu0 0.0
  %1263 = vmatprep.subr.mxu0 0.0
  %1264 = vmatpush1.msra.mxu0 0.0
  %1265 = vmatprep.subr.mxu0 0.0
  %1266 = vmatpush1.msra.mxu0 0.0
  %1267 = vmatprep.subr.mxu0 0.0
  %1268 = vmatpush1.msra.mxu0 0.0
  %1269 = vmatprep.subr.mxu0 0.0
  %1270 = vmatpush1.msra.mxu0 0.0
  %1271 = vmatprep.subr.mxu0 0.0
  %1272 = vmatpush1.msra.mxu0 %v1180
  %1273 = vmatprep.subr.mxu0 0.0
  %1274 = vmatpush1.msra.mxu0 %v1175
  %1275 = vmatprep.subr.mxu0 0.0
  %1276 = vmatpush2.msra.mxu0 0.0
  %1277 = vmatprep.subr.mxu0 0.0
  %1278 = vmatpush2.msra.mxu0 0.0
  %1279 = vmatprep.subr.mxu0 0.0
  %1280 = vmatpush2.msra.mxu0 0.0
  %1281 = vmatprep.subr.mxu0 0.0
  %1282 = vmatpush2.msra.mxu0 0.0
  %1283 = vmatprep.subr.mxu0 0.0
  %1284 = vmatpush2.msra.mxu0 0.0
  %1285 = vmatprep.subr.mxu0 0.0
  %1286 = vmatpush2.msra.mxu0 0.0
  %1287 = vmatprep.subr.mxu0 0.0
  %1288 = vmatpush2.msra.mxu0 0.0
  %1289 = vmatprep.subr.mxu0 0.0
  %1290 = vmatpush2.msra.mxu0 0.0
  %1291 = vmatprep.subr.mxu0 0.0
  %1292 = vmatpush2.msra.mxu0 0.0
  %1293 = vmatprep.subr.mxu0 0.0
  %1294 = vmatpush2.msra.mxu0 0.0
  %1295 = vmatprep.subr.mxu0 0.0
  %1296 = vmatpush2.msra.mxu0 0.0
  %1297 = vmatprep.subr.mxu0 0.0
  %1298 = vmatpush2.msra.mxu0 0.0
  %1299 = vmatprep.subr.mxu0 0.0
  %1300 = vmatpush2.msra.mxu0 0.0
  %1301 = vmatprep.subr.mxu0 0.0
  %1302 = vmatpush2.msra.mxu0 0.0
  %1303 = vmatprep.subr.mxu0 0.0
  %1304 = vmatpush2.msra.mxu0 0.0
  %1305 = vmatprep.subr.mxu0 0.0
  %1306 = vmatpush2.msra.mxu0 0.0
  %1307 = vmatprep.mubr.f32.mxu0 0.0
  %1308 = vmatmul.mubr.f32.gmra.mxu0 %v1226
  %v1309 = vpop.f32.mrf.mxu0
  %v1310 = vadd.f32 %v1198, %v1309
  %v1311 = vpop.f32.mrf.mxu0
  %1312 = vmatprep.mubr.f32.mxu0 0.0
  %1313 = vmatmul.mubr.f32.gmra.mxu0 %v1229
  %v1314 = vpop.f32.mrf.mxu0
  %v1315 = vadd.f32 %v1203, %v1314
  %v1316 = vpop.f32.mrf.mxu0
  %1317 = vmatprep.mubr.f32.mxu0 0.0
  %1318 = vmatmul.mubr.f32.gmra.mxu0 %v1232
  %v1319 = vpop.f32.mrf.mxu0
  %v1320 = vadd.f32 %v1208, %v1319
  %v1321 = vpop.f32.mrf.mxu0
  %1322 = vmatprep.mubr.f32.mxu0 0.0
  %1323 = vmatmul.mubr.f32.gmra.mxu0 %v1235
  %v1324 = vpop.f32.mrf.mxu0
  %v1325 = vadd.f32 %v1213, %v1324
  %v1326 = vpop.f32.mrf.mxu0
  %1327 = vmatprep.mubr.f32.mxu0 0.0
  %1328 = vmatmul.mubr.f32.gmra.mxu0 %v1238
  %v1329 = vpop.f32.mrf.mxu0
  %v1330 = vadd.f32 %v1218, %v1329
  %v1331 = vpop.f32.mrf.mxu0
  %1332 = vmatprep.mubr.f32.mxu0 0.0
  %1333 = vmatmul.mubr.f32.gmra.mxu0 %v1241
  %v1334 = vpop.f32.mrf.mxu0
  %v1335 = vadd.f32 %v1223, %v1334
  %v1336 = vpop.f32.mrf.mxu0
  %1337 = vdwg.mxu0
  %v1338 = vadd.f32 %v224, %v1310
  %v1339 = vadd.f32 %v227, %v1315
  %v1340 = vsub.f32 0.0, %v1338
  %v1341 = vsub.f32 0.0, %v1339
  %v1342 = vmul.f32 %v1340, 1.442695
  %v1343 = vpow.pop %v1342
  %v1344 = vmul.f32 %v1341, 1.442695
  %v1345 = vpow.pop %v1344
  %v1346 = vadd.f32 %v1343, 1.0
  %v1347 = vadd.f32 %v1345, 1.0
  %v1348 = vrcp.pop %v1346
  %v1349 = vrcp.pop %v1347
  %v1350 = vadd.f32 %v232, %v1320
  %v1351 = vadd.f32 %v235, %v1325
  %v1352 = vsub.f32 0.0, %v1350
  %v1353 = vsub.f32 0.0, %v1351
  %v1354 = vmul.f32 %v1352, 1.442695
  %v1355 = vpow.pop %v1354
  %v1356 = vmul.f32 %v1353, 1.442695
  %v1357 = vpow.pop %v1356
  %v1358 = vadd.f32 %v1355, 1.0
  %v1359 = vadd.f32 %v1357, 1.0
  %v1360 = vrcp.pop %v1358
  %v1361 = vrcp.pop %v1359
  %v1362 = vmul.f32 %v1360, %v1330
  %v1363 = vmul.f32 %v1361, %v1335
  %v1364 = vadd.f32 %v240, %v1362
  %v1365 = vadd.f32 %v243, %v1363
  %vm1366 = vcmp.ge.f32.partialorder %v1364, 0.0
  %vm1367 = vcmp.ge.f32.partialorder %v1365, 0.0
  %v1368 = vmul.f32 %v1364, 0.2
  %v1369 = vmul.f32 %v1365, 0.2
  %v1370 = vsel %vm1366, %v1364, %v1368
  %v1371 = vsel %vm1367, %v1365, %v1369
  %v1372 = vsub.f32 1.0, %v1348
  %v1373 = vsub.f32 1.0, %v1349
  %v1374 = vmul.f32 %v1372, %v1370
  %v1375 = vmul.f32 %v1373, %v1371
  %v1376 = vmul.f32 %v1348, %v36
  %v1377 = vmul.f32 %v1349, %v37
  %v1378 = vadd.f32 %v1374, %v1376
  %v1379 = vadd.f32 %v1375, %v1377
  %1380 = vst.msk [vmem:[%s10] sm:$0xff] %vm695, %v1378
  %1381 = vst.msk [vmem:[%s10 + $0x8] sm:$0xff] %vm695, %v1379
  // Predicated region
  $region42: #{_lambda_.21} parent=0 // pred_check
    _
  $region43: #{_lambda_.21} parent=0 // pred_check_branch
    %1383 = sbr.rel (0) target = $region45
  $region44: #{_lambda_.21} parent=0 // pred_region
    _
  $region45: #{_lambda_.21} parent=0 // pred_fallthru
    _
  // Predicated region
  $region46: #{_lambda_.21} parent=0 // pred_check
    _
  $region47: #{_lambda_.21} parent=0 // pred_check_branch
    %1385 = sbr.rel (0) target = $region49
  $region48: #{_lambda_.21} parent=0 // pred_region
    _
  $region49: #{_lambda_.21} parent=0 // pred_fallthru
    _

// kernel: _lambda_.27
$region0: #{_lambda_.27}
  #allocation0 [shape = 'u32[]', space=smem, size = 0x4, offset = 0x4, fixed_abs, tag = 'smem constant byte address 0x4 - core index']
  #allocation1 [shape = 'u32[144,128]{1,0:T(1,128)}', space=vmem, size = 0x12000, scoped, tag = 'internal scratch']
  %s0 = inlined_call_operand.vmem [shape: bf16[8,144], index: 0, kind: input, shape index: {}]
  %s1 = inlined_call_operand.vmem [shape: bf16[144,128], index: 1, kind: input, shape index: {}]
  %s2 = inlined_call_operand.vmem [shape: f32[8,1], index: 2, kind: input, shape index: {}]
  %s3 = inlined_call_operand.vmem [shape: f32[8,128], index: 3, kind: output, shape index: {}]
  %s4 = sld [smem:[#allocation0]]
  $region22: #{_lambda_.27} parent=0
    _
  %s6 = ssub.s32 1, %s4
  %s7 = scalar_select 0, %s6, %s4
  // Predicated region
  $region2: #{_lambda_.27} parent=0 // pred_check
    _
  $region3: #{_lambda_.27} parent=0 // pred_check_branch
    %9 = sbr.rel (0) target = $region5
  $region4: #{_lambda_.27} parent=0 // pred_region
    _
  $region5: #{_lambda_.27} parent=0 // pred_fallthru
    _
  // Predicated region
  $region6: #{_lambda_.27} parent=0 // pred_check
    _
  $region7: #{_lambda_.27} parent=0 // pred_check_branch
    %11 = sbr.rel (0) target = $region9
  $region8: #{_lambda_.27} parent=0 // pred_region
    _
  $region9: #{_lambda_.27} parent=0 // pred_fallthru
    _
  // Predicated region
  $region10: #{_lambda_.27} parent=0 // pred_check
    _
  $region11: #{_lambda_.27} parent=0 // pred_check_branch
    %13 = sbr.rel (0) target = $region13
  $region12: #{_lambda_.27} parent=0 // pred_region
    _
  $region13: #{_lambda_.27} parent=0 // pred_fallthru
    _
  %v15 = vld [vmem:[%s0] sm:$0xff]
  %v16 = vld [vmem:[%s1] sm:$0xf]
  %v17 = vld [vmem:[%s1 + $0x4] sm:$0xf]
  %v18 = vld [vmem:[%s1 + $0x8] sm:$0xf]
  %v19 = vld [vmem:[%s1 + $0xc] sm:$0xf]
  %v20 = vld [vmem:[%s1 + $0x10] sm:$0xf]
  %v21 = vld [vmem:[%s1 + $0x14] sm:$0xf]
  %v22 = vld [vmem:[%s1 + $0x18] sm:$0xf]
  %v23 = vld [vmem:[%s1 + $0x1c] sm:$0xf]
  %v24 = vld [vmem:[%s1 + $0x20] sm:$0xf]
  %v25 = vld [vmem:[%s1 + $0x24] sm:$0xf]
  %v26 = vld [vmem:[%s1 + $0x28] sm:$0xf]
  %v27 = vld [vmem:[%s1 + $0x2c] sm:$0xf]
  %v28 = vld [vmem:[%s1 + $0x30] sm:$0xf]
  %v29 = vld [vmem:[%s1 + $0x34] sm:$0xf]
  %v30 = vld [vmem:[%s1 + $0x38] sm:$0xf]
  %v31 = vld [vmem:[%s1 + $0x3c] sm:$0xf]
  %v32 = vld [vmem:[%s1 + $0x40] sm:$0xf]
  %v33 = vld [vmem:[%s1 + $0x44] sm:$0xf]
  %v34 = vld [vmem:[%s2] sm:$0xff]
  %36 = vset.pattern.permute.xlu0 0
  %37 = vperm.xlu0 %36, %v34
  %v38 = vpop.permute.xlu0 %37
  %v41 = vunpack.c.l.b16 %v15
  %v42 = vunpack.c.h.b16 %v15
  %v43 = vpack.c.b16 %v41, %v41
  %v44 = vpack.c.b16 %v42, %v42
  %v64 = vunpack.c.l.b16 %v16
  %v65 = vunpack.c.l.b16 %v17
  %v66 = vunpack.c.l.b16 %v18
  %v67 = vunpack.c.l.b16 %v19
  %v68 = vunpack.c.l.b16 %v20
  %v69 = vunpack.c.l.b16 %v21
  %v70 = vunpack.c.l.b16 %v22
  %v71 = vunpack.c.l.b16 %v23
  %v72 = vunpack.c.l.b16 %v24
  %v73 = vunpack.c.l.b16 %v25
  %v74 = vunpack.c.l.b16 %v26
  %v75 = vunpack.c.l.b16 %v27
  %v76 = vunpack.c.l.b16 %v28
  %v77 = vunpack.c.l.b16 %v29
  %v78 = vunpack.c.l.b16 %v30
  %v79 = vunpack.c.l.b16 %v31
  %v80 = vunpack.c.l.b16 %v32
  %v81 = vunpack.c.l.b16 %v33
  %v82 = vpack.c.b16 %v65, %v64
  %v83 = vpack.c.b16 %v67, %v66
  %v84 = vpack.c.b16 %v69, %v68
  %v85 = vpack.c.b16 %v71, %v70
  %v86 = vpack.c.b16 %v73, %v72
  %v87 = vpack.c.b16 %v75, %v74
  %v88 = vpack.c.b16 %v77, %v76
  %v89 = vpack.c.b16 %v79, %v78
  %v90 = vpack.c.b16 %v81, %v80
  %vm100 = vcmask 130048
  %v102 = vsel %vm100, %v44, 0
  %104 = vmatprep.subr.bf16.mxu0 0
  %105 = vmatpush1.bf16.msra.mxu0 %v89
  %106 = vmatprep.subr.bf16.mxu0 0
  %107 = vmatpush1.bf16.msra.mxu0 %v88
  %108 = vmatprep.subr.bf16.mxu0 0
  %109 = vmatpush1.bf16.msra.mxu0 %v87
  %110 = vmatprep.subr.bf16.mxu0 0
  %111 = vmatpush1.bf16.msra.mxu0 %v86
  %112 = vmatprep.subr.bf16.mxu0 0
  %113 = vmatpush1.bf16.msra.mxu0 %v85
  %114 = vmatprep.subr.bf16.mxu0 0
  %115 = vmatpush1.bf16.msra.mxu0 %v84
  %116 = vmatprep.subr.bf16.mxu0 0
  %117 = vmatpush1.bf16.msra.mxu0 %v83
  %118 = vmatprep.subr.bf16.mxu0 0
  %119 = vmatpush1.bf16.msra.mxu0 %v82
  %120 = vmatprep.subr.bf16.mxu0 0
  %121 = vmatpush2.bf16.msra.mxu0 0
  %122 = vmatprep.subr.bf16.mxu0 0
  %123 = vmatpush2.bf16.msra.mxu0 0
  %124 = vmatprep.subr.bf16.mxu0 0
  %125 = vmatpush2.bf16.msra.mxu0 0
  %126 = vmatprep.subr.bf16.mxu0 0
  %127 = vmatpush2.bf16.msra.mxu0 0
  %128 = vmatprep.subr.bf16.mxu0 0
  %129 = vmatpush2.bf16.msra.mxu0 0
  %130 = vmatprep.subr.bf16.mxu0 0
  %131 = vmatpush2.bf16.msra.mxu0 0
  %132 = vmatprep.subr.bf16.mxu0 0
  %133 = vmatpush2.bf16.msra.mxu0 0
  %134 = vmatprep.subr.bf16.mxu0 0
  %135 = vmatpush2.bf16.msra.mxu0 %v90
  %136 = vmatprep.mubr.bf16.mxu0 %v102
  %137 = vmatmul.mubr.bf16.gmra.mxu0 %v43
  %v138 = vpop.f32.mrf.mxu0
  %v139 = vadd.f32 %v38, %v138
  %v140 = vpop.f32.mrf.mxu0
  %v141 = vpop.f32.mrf.mxu0
  %v142 = vpop.f32.mrf.mxu0
  %143 = vdwg.mxu0
  %144 = vst [vmem:[%s3] sm:$0xff] %v139
  // Predicated region
  $region14: #{_lambda_.27} parent=0 // pred_check
    _
  $region15: #{_lambda_.27} parent=0 // pred_check_branch
    %146 = sbr.rel (0) target = $region17
  $region16: #{_lambda_.27} parent=0 // pred_region
    _
  $region17: #{_lambda_.27} parent=0 // pred_fallthru
    _
  // Predicated region
  $region18: #{_lambda_.27} parent=0 // pred_check
    _
  $region19: #{_lambda_.27} parent=0 // pred_check_branch
    %148 = sbr.rel (0) target = $region21
  $region20: #{_lambda_.27} parent=0 // pred_region
    _
  $region21: #{_lambda_.27} parent=0 // pred_fallthru
    _

// kernel: _lambda_.29
$region0: #{_lambda_.29}
  #allocation0 [shape = 'u32[]', space=smem, size = 0x4, offset = 0x4, fixed_abs, tag = 'smem constant byte address 0x4 - core index']
  #allocation1 [shape = 'u32[144,128]{1,0:T(1,128)}', space=vmem, size = 0x12000, scoped, tag = 'internal scratch']
  %s0 = inlined_call_operand.vmem [shape: bf16[8,72], index: 0, kind: input, shape index: {}]
  %s1 = inlined_call_operand.vmem [shape: bf16[72,512], index: 1, kind: input, shape index: {}]
  %s2 = inlined_call_operand.vmem [shape: f32[8,1], index: 2, kind: input, shape index: {}]
  %s3 = inlined_call_operand.vmem [shape: f32[8,512], index: 3, kind: output, shape index: {}]
  %s4 = sld [smem:[#allocation0]]
  $region83: #{_lambda_.29} parent=0
    _
  %s6 = ssub.s32 1, %s4
  %s7 = scalar_select 0, %s6, %s4
  $region1: #{_lambda_.29} parent=0
    #allocation2 [shape = 'u8[73728]{0}', space=vmem, size = 0x12000, scoped, tag = 'input window, operand 1']
    loop: start=0, step=1, limit=4
    $region2: #{_lambda_.29} parent=1 // loop_pre_header
      _
    $region3: #{_lambda_.29} parent=1 // loop_header
      %s9 = sphi 0, %s13
      %p10 = scmp.ge.s32.totalorder %s9, 4
      %s17 = sphi 0, %s17
      %s19 = sphi 0, %s17
      %s20 = sphi 0, %s19
      %s34 = sphi 0, %s20
      %s40 = sphi 0, %s42
      %s43 = sphi 0, %s40
      %s44 = sphi 0, %s43
      %s60 = sphi 0, %s44
      %s64 = sphi 0, %s64
      %s66 = sphi 0, %s64
      %s67 = sphi 0, %s66
      %s81 = sphi 0, %s67
      %s87 = sphi 0, %s89
      %s90 = sphi 0, %s87
      %s91 = sphi 0, %s90
      %s107 = sphi 0, %s91
    $region4: #{_lambda_.29} parent=1 // loop_header_branch
      %12 = sbr.rel (%p10) target = $region8
    $region5: #{_lambda_.29} parent=1 // loop_body
      %s14 = ssub.s32 %s9, 1
      %s15 = ssub.s32 %s9, 2
      %s16 = sadd.s32 %s9, 1
      %s18 = sadd.s32 %s17, 1
      %p21 = scmp.eq.s32.totalorder %s9, 1
      %p22 = scmp.ne.s32.totalorder %s17, %s19
      %p23 = scmp.eq.s32.totalorder %s9, 0
      %p24 = por %p22, %p23
      %p25 = scmp.ne.s32.totalorder %s17, %s19
      %p26 = scmp.eq.s32.totalorder %s14, 1
      %p27 = por %p25, %p26
      %p28 = scmp.ne.s32.totalorder %s19, %s20
      %p29 = scmp.eq.s32.totalorder %s14, 0
      %p30 = por %p28, %p29
      %p31 = scmp.ne.s32.totalorder %s19, %s20
      %p32 = scmp.eq.s32.totalorder %s15, 1
      %p33 = por %p31, %p32
      %p35 = scmp.ne.s32.totalorder %s20, %s34
      %p36 = scmp.eq.s32.totalorder %s15, 0
      %p37 = por %p35, %p36
      %s38 = ssub.s32 %s9, %s16
      %p39 = scmp.eq.s32.totalorder %s38, 0
      %s41 = sadd.s32 %s40, 1
      %s42 = scalar_select %p39, %s40, %s41
      %p45 = pneg %p39
      %p46 = scmp.eq.s32.totalorder %s9, 1
      %p47 = por %p45, %p46
      %p48 = scmp.ne.s32.totalorder %s40, %s43
      %p49 = scmp.eq.s32.totalorder %s9, 0
      %p50 = por %p48, %p49
      %p51 = scmp.ne.s32.totalorder %s40, %s43
      %p52 = scmp.eq.s32.totalorder %s14, 1
      %p53 = por %p51, %p52
      %p54 = scmp.ne.s32.totalorder %s43, %s44
      %p55 = scmp.eq.s32.totalorder %s14, 0
      %p56 = por %p54, %p55
      %p57 = scmp.ne.s32.totalorder %s43, %s44
      %p58 = scmp.eq.s32.totalorder %s15, 1
      %p59 = por %p57, %p58
      %p61 = scmp.ne.s32.totalorder %s44, %s60
      %p62 = scmp.eq.s32.totalorder %s15, 0
      %p63 = por %p61, %p62
      %s65 = sadd.s32 %s64, 1
      %p68 = scmp.eq.s32.totalorder %s9, 1
      %p69 = scmp.ne.s32.totalorder %s64, %s66
      %p70 = scmp.eq.s32.totalorder %s9, 0
      %p71 = por %p69, %p70
      %p72 = scmp.ne.s32.totalorder %s64, %s66
      %p73 = scmp.eq.s32.totalorder %s14, 1
      %p74 = por %p72, %p73
      %p75 = scmp.ne.s32.totalorder %s66, %s67
      %p76 = scmp.eq.s32.totalorder %s14, 0
      %p77 = por %p75, %p76
      %p78 = scmp.ne.s32.totalorder %s66, %s67
      %p79 = scmp.eq.s32.totalorder %s15, 1
      %p80 = por %p78, %p79
      %p82 = scmp.ne.s32.totalorder %s67, %s81
      %p83 = scmp.eq.s32.totalorder %s15, 0
      %p84 = por %p82, %p83
      %s85 = ssub.s32 %s9, %s16
      %p86 = scmp.eq.s32.totalorder %s85, 0
      %s88 = sadd.s32 %s87, 1
      %s89 = scalar_select %p86, %s87, %s88
      %p92 = pneg %p86
      %p93 = scmp.eq.s32.totalorder %s9, 1
      %p94 = por %p92, %p93
      %p95 = scmp.ne.s32.totalorder %s87, %s90
      %p96 = scmp.eq.s32.totalorder %s9, 0
      %p97 = por %p95, %p96
      %p98 = scmp.ne.s32.totalorder %s87, %s90
      %p99 = scmp.eq.s32.totalorder %s14, 1
      %p100 = por %p98, %p99
      %p101 = scmp.ne.s32.totalorder %s90, %s91
      %p102 = scmp.eq.s32.totalorder %s14, 0
      %p103 = por %p101, %p102
      %p104 = scmp.ne.s32.totalorder %s90, %s91
      %p105 = scmp.eq.s32.totalorder %s15, 1
      %p106 = por %p104, %p105
      %p108 = scmp.ne.s32.totalorder %s91, %s107
      %p109 = scmp.eq.s32.totalorder %s15, 0
      %p110 = por %p108, %p109
      %p111 = scmp.le.s32.totalorder 1, %s9
      %p112 = scmp.lt.s32.totalorder %s9, 3
      %p113 = pnand %p111, %p112
      %p114 = pneg %p113
      // Predicated region
      $region9: #{_lambda_.29} parent=5 // pred_check
        _
      $region10: #{_lambda_.29} parent=5 // pred_check_branch
        %116 = sbr.rel (%p113) target = $region12
      $region11: #{_lambda_.29} parent=5 // pred_region
        %s117 = ssub.s32 %s9, 1
        // Predicated region
        $region13: #{_lambda_.29} parent=11 // pred_check
          %p118 = pneg %p30
        $region14: #{_lambda_.29} parent=11 // pred_check_branch
          %120 = sbr.rel (%p118) target = $region16
        $region15: #{_lambda_.29} parent=11 // pred_region
          _
        $region16: #{_lambda_.29} parent=11 // pred_fallthru
          _
        // Predicated region
        $region17: #{_lambda_.29} parent=11 // pred_check
          %p121 = pneg %p77
        $region18: #{_lambda_.29} parent=11 // pred_check_branch
          %123 = sbr.rel (%p121) target = $region20
        $region19: #{_lambda_.29} parent=11 // pred_region
          _
        $region20: #{_lambda_.29} parent=11 // pred_fallthru
          _
      $region12: #{_lambda_.29} parent=5 // pred_fallthru
        _
      %p124 = scmp.lt.s32.totalorder %s9, 2
      // Predicated region
      $region21: #{_lambda_.29} parent=5 // pred_check
        %p125 = pneg %p124
      $region22: #{_lambda_.29} parent=5 // pred_check_branch
        %127 = sbr.rel (%p125) target = $region24
      $region23: #{_lambda_.29} parent=5 // pred_region
        // Predicated region
        $region25: #{_lambda_.29} parent=23 // pred_check
          %p128 = pneg %p50
        $region26: #{_lambda_.29} parent=23 // pred_check_branch
          %130 = sbr.rel (%p128) target = $region28
        $region27: #{_lambda_.29} parent=23 // pred_region
          %s131 = sand.u32 %s40, 1
          %s132 = sand.u32 %s40, 1
          %s133 = smul.addr %s132, 72
          %s134 = scalar_lea.vmem [#allocation2], %s133
          %s135 = smul.u32 2, %s9
          %s136 = smul.addr %s135, 4
          %s137 = scalar_lea.vmem %s1, %s136
          // Predicated region
          $region29: #{_lambda_.29} parent=27 // pred_check
            _
          $region30: #{_lambda_.29} parent=27 // pred_check_branch
            %139 = sbr.rel (0) target = $region32
          $region31: #{_lambda_.29} parent=27 // pred_region
            // Predicated region
            $region33: #{_lambda_.29} parent=31 // pred_check
              _
            $region34: #{_lambda_.29} parent=31 // pred_check_branch
              %141 = sbr.rel (0) target = $region36
            $region35: #{_lambda_.29} parent=31 // pred_region
              // Predicated region
              $region48: #{_lambda_.29} parent=35 // pred_check
                _
              $region49: #{_lambda_.29} parent=35 // pred_check_branch
                %173 = sbr.rel (0) target = $region51
              $region50: #{_lambda_.29} parent=35 // pred_region
                loop: start=0, step=1, limit=1
                $region52: #{_lambda_.29} parent=50 // loop_pre_header
                  _
                $region53: #{_lambda_.29} parent=50 // loop_header
                  %s175 = sphi 0, %s179
                  %p176 = scmp.ge.s32.totalorder %s175, 1
                  %s180 = sphi %s137, %s137
                  %s181 = sphi %s134, %s134
                $region54: #{_lambda_.29} parent=50 // loop_header_branch
                  %178 = sbr.rel (%p176) target = $region58
                $region55: #{_lambda_.29} parent=50 // loop_body
                  %v182 = vld [vmem:[%s180] sm:$0xff]
                  %183 = vst [vmem:[%s181] sm:$0xff] %v182
                  %v184 = vld [vmem:[%s180 + $0x10] sm:$0xff]
                  %185 = vst [vmem:[%s181 + $0x8] sm:$0xff] %v184
                  %v186 = vld [vmem:[%s180 + $0x20] sm:$0xff]
                  %187 = vst [vmem:[%s181 + $0x10] sm:$0xff] %v186
                  %v188 = vld [vmem:[%s180 + $0x30] sm:$0xff]
                  %189 = vst [vmem:[%s181 + $0x18] sm:$0xff] %v188
                  %v190 = vld [vmem:[%s180 + $0x40] sm:$0xff]
                  %191 = vst [vmem:[%s181 + $0x20] sm:$0xff] %v190
                  %v192 = vld [vmem:[%s180 + $0x50] sm:$0xff]
                  %193 = vst [vmem:[%s181 + $0x28] sm:$0xff] %v192
                  %v194 = vld [vmem:[%s180 + $0x60] sm:$0xff]
                  %195 = vst [vmem:[%s181 + $0x30] sm:$0xff] %v194
                  %v196 = vld [vmem:[%s180 + $0x70] sm:$0xff]
                  %197 = vst [vmem:[%s181 + $0x38] sm:$0xff] %v196
                  %v198 = vld [vmem:[%s180 + $0x80] sm:$0xff]
                  %199 = vst [vmem:[%s181 + $0x40] sm:$0xff] %v198
                $region56: #{_lambda_.29} parent=50 // loop_footer
                  %s179 = sadd.s32 1, %s175
                $region57: #{_lambda_.29} parent=50 // loop_footer_branch
                  %174 = sbr.rel target = $region53
                $region58: #{_lambda_.29} parent=50 // loop_exit
                  _
              $region51: #{_lambda_.29} parent=35 // pred_fallthru
                _
              // Predicated region
              $region59: #{_lambda_.29} parent=35 // pred_check
                _
              $region60: #{_lambda_.29} parent=35 // pred_check_branch
                %201 = sbr.rel target = $region62
              $region61: #{_lambda_.29} parent=35 // pred_region
                _
              $region62: #{_lambda_.29} parent=35 // pred_fallthru
                _
            $region36: #{_lambda_.29} parent=31 // pred_fallthru
              _
            // Predicated region
            $region37: #{_lambda_.29} parent=31 // pred_check
              _
            $region38: #{_lambda_.29} parent=31 // pred_check_branch
              %143 = sbr.rel target = $region40
            $region39: #{_lambda_.29} parent=31 // pred_region
              %s145 = ssub.s32 256, 1
              loop: start=0, step=1, limit=1
              $region41: #{_lambda_.29} parent=39 // loop_pre_header
                _
              $region42: #{_lambda_.29} parent=39 // loop_header
                %s147 = sphi 0, %s151
                %p148 = scmp.ge.s32.totalorder %s147, 1
                %s152 = sphi %s137, %s137
                %s153 = sphi %s134, %s134
              $region43: #{_lambda_.29} parent=39 // loop_header_branch
                %150 = sbr.rel (%p148) target = $region47
              $region44: #{_lambda_.29} parent=39 // loop_body
                %v154 = vld [vmem:[%s152] sm:%s145]
                %155 = vst [vmem:[%s153] sm:%s145] %v154
                %v156 = vld [vmem:[%s152 + $0x10] sm:%s145]
                %157 = vst [vmem:[%s153 + $0x8] sm:%s145] %v156
                %v158 = vld [vmem:[%s152 + $0x20] sm:%s145]
                %159 = vst [vmem:[%s153 + $0x10] sm:%s145] %v158
                %v160 = vld [vmem:[%s152 + $0x30] sm:%s145]
                %161 = vst [vmem:[%s153 + $0x18] sm:%s145] %v160
                %v162 = vld [vmem:[%s152 + $0x40] sm:%s145]
                %163 = vst [vmem:[%s153 + $0x20] sm:%s145] %v162
                %v164 = vld [vmem:[%s152 + $0x50] sm:%s145]
                %165 = vst [vmem:[%s153 + $0x28] sm:%s145] %v164
                %v166 = vld [vmem:[%s152 + $0x60] sm:%s145]
                %167 = vst [vmem:[%s153 + $0x30] sm:%s145] %v166
                %v168 = vld [vmem:[%s152 + $0x70] sm:%s145]
                %169 = vst [vmem:[%s153 + $0x38] sm:%s145] %v168
                %v170 = vld [vmem:[%s152 + $0x80] sm:%s145]
                %171 = vst [vmem:[%s153 + $0x40] sm:%s145] %v170
              $region45: #{_lambda_.29} parent=39 // loop_footer
                %s151 = sadd.s32 1, %s147
              $region46: #{_lambda_.29} parent=39 // loop_footer_branch
                %146 = sbr.rel target = $region42
              $region47: #{_lambda_.29} parent=39 // loop_exit
                _
            $region40: #{_lambda_.29} parent=31 // pred_fallthru
              _
          $region32: #{_lambda_.29} parent=27 // pred_fallthru
            _
          %202 = vnop
        $region28: #{_lambda_.29} parent=23 // pred_fallthru
          _
      $region24: #{_lambda_.29} parent=5 // pred_fallthru
        _
      %p203 = scmp.le.s32.totalorder 1, %s9
      %p204 = scmp.lt.s32.totalorder %s9, 3
      %p205 = pnand %p203, %p204
      %p206 = pneg %p205
      // Predicated region
      $region63: #{_lambda_.29} parent=5 // pred_check
        _
      $region64: #{_lambda_.29} parent=5 // pred_check_branch
        %208 = sbr.rel (%p205) target = $region66
      $region65: #{_lambda_.29} parent=5 // pred_region
        %s209 = ssub.s32 %s9, 1
        %s210 = sand.u32 %s43, 1
        %s211 = sand.u32 %s43, 1
        %s212 = smul.addr %s211, 72
        %s213 = scalar_lea.vmem [#allocation2], %s212
        // Predicated region
        $region67: #{_lambda_.29} parent=65 // pred_check
          %p214 = pneg %p56
        $region68: #{_lambda_.29} parent=65 // pred_check_branch
          %216 = sbr.rel (%p214) target = $region70
        $region69: #{_lambda_.29} parent=65 // pred_region
          _
        $region70: #{_lambda_.29} parent=65 // pred_fallthru
          _
        %p217 = pneg %p30
        %p218 = pneg %p27
        %s219 = sand.u32 %s43, 1
        %s220 = sand.u32 %s43, 1
        %s221 = smul.addr %s220, 72
        %s222 = scalar_lea.vmem [#allocation2], %s221
        %p223 = pneg %p56
        %p224 = pneg %p53
        %p225 = pneg %p77
        %p226 = pneg %p74
        %p227 = pneg %p103
        %p228 = pneg %p100
        %s229 = smul.u32 2, %s14
        %p230 = scmp.lt.s32.totalorder %s229, 3
        %s231 = scalar_select %p230, %s229, 3
        %s232 = smul.addr %s231, 8
        %s233 = scalar_lea.vmem %s3, %s232
        %s234 = smul.u32 2, %s14
        %s235 = smul.u32 2, %s14
        %p236 = scmp.lt.s32.totalorder %s235, 3
        %s237 = scalar_select %p236, %s235, 3
        %s238 = smul.addr %s237, 8
        %s239 = scalar_lea.vmem %s3, %s238
        %s240 = smul.u32 2, %s14
        %v242 = vld [vmem:[%s0] sm:$0xf]
        %v243 = vld [vmem:[%s213] sm:$0xff]
        %v244 = vld [vmem:[%s213 + $0x8] sm:$0xff]
        %v245 = vld [vmem:[%s213 + $0x10] sm:$0xff]
        %v246 = vld [vmem:[%s213 + $0x18] sm:$0xff]
        %v247 = vld [vmem:[%s213 + $0x20] sm:$0xff]
        %v248 = vld [vmem:[%s213 + $0x28] sm:$0xff]
        %v249 = vld [vmem:[%s213 + $0x30] sm:$0xff]
        %v250 = vld [vmem:[%s213 + $0x38] sm:$0xff]
        %v251 = vld [vmem:[%s213 + $0x40] sm:$0xff]
        %v252 = vld [vmem:[%s2] sm:$0xff]
        %254 = vset.pattern.permute.xlu0 0
        %255 = vperm.xlu0 %254, %v252
        %v256 = vpop.permute.xlu0 %255
        %v267 = vunpack.c.l.b16 %v243
        %v268 = vunpack.c.h.b16 %v243
        %v269 = vunpack.c.l.b16 %v244
        %v270 = vunpack.c.h.b16 %v244
        %v271 = vunpack.c.l.b16 %v245
        %v272 = vunpack.c.h.b16 %v245
        %v273 = vunpack.c.l.b16 %v246
        %v274 = vunpack.c.h.b16 %v246
        %v275 = vunpack.c.l.b16 %v247
        %v276 = vunpack.c.h.b16 %v247
        %v277 = vunpack.c.l.b16 %v248
        %v278 = vunpack.c.h.b16 %v248
        %v279 = vunpack.c.l.b16 %v249
        %v280 = vunpack.c.h.b16 %v249
        %v281 = vunpack.c.l.b16 %v250
        %v282 = vunpack.c.h.b16 %v250
        %v283 = vunpack.c.l.b16 %v251
        %v284 = vunpack.c.h.b16 %v251
        %v285 = vpack.c.b16 %v269, %v267
        %v286 = vpack.c.b16 %v270, %v268
        %v287 = vpack.c.b16 %v273, %v271
        %v288 = vpack.c.b16 %v274, %v272
        %v289 = vpack.c.b16 %v277, %v275
        %v290 = vpack.c.b16 %v278, %v276
        %v291 = vpack.c.b16 %v281, %v279
        %v292 = vpack.c.b16 %v282, %v280
        %v293 = vpack.c.b16 %v283, %v283
        %v294 = vpack.c.b16 %v284, %v284
        %vm303 = vcmask 588800
        %v305 = vsel %vm303, %v242, 0
        %vm307 = vcmask 1043456
        %v309 = vsel %vm307, %v293, 0
        %v312 = vsel %vm307, %v294, 0
        %314 = vmatprep.subr.bf16.mxu0 0
        %315 = vmatpush1.bf16.msra.mxu0 0
        %316 = vmatprep.subr.bf16.mxu0 0
        %317 = vmatpush1.bf16.msra.mxu0 0
        %318 = vmatprep.subr.bf16.mxu0 0
        %319 = vmatpush1.bf16.msra.mxu0 0
        %320 = vmatprep.subr.bf16.mxu0 %v312
        %321 = vmatpush1.bf16.msra.mxu0 %v309
        %322 = vmatprep.subr.bf16.mxu0 %v292
        %323 = vmatpush1.bf16.msra.mxu0 %v291
        %324 = vmatprep.subr.bf16.mxu0 %v290
        %325 = vmatpush1.bf16.msra.mxu0 %v289
        %326 = vmatprep.subr.bf16.mxu0 %v288
        %327 = vmatpush1.bf16.msra.mxu0 %v287
        %328 = vmatprep.subr.bf16.mxu0 %v286
        %329 = vmatpush1.bf16.msra.mxu0 %v285
        %330 = vmatprep.subr.bf16.mxu0 0
        %331 = vmatpush2.bf16.msra.mxu0 0
        %332 = vmatprep.subr.bf16.mxu0 0
        %333 = vmatpush2.bf16.msra.mxu0 0
        %334 = vmatprep.subr.bf16.mxu0 0
        %335 = vmatpush2.bf16.msra.mxu0 0
        %336 = vmatprep.subr.bf16.mxu0 0
        %337 = vmatpush2.bf16.msra.mxu0 0
        %338 = vmatprep.subr.bf16.mxu0 0
        %339 = vmatpush2.bf16.msra.mxu0 0
        %340 = vmatprep.subr.bf16.mxu0 0
        %341 = vmatpush2.bf16.msra.mxu0 0
        %342 = vmatprep.subr.bf16.mxu0 0
        %343 = vmatpush2.bf16.msra.mxu0 0
        %344 = vmatprep.subr.bf16.mxu0 0
        %345 = vmatpush2.bf16.msra.mxu0 0
        %346 = vmatprep.mubr.bf16.mxu0 0
        %347 = vmatmul.mubr.bf16.gmra.mxu0 %v305
        %v348 = vpop.f32.mrf.mxu0
        %v349 = vadd.f32 %v256, %v348
        %v350 = vpop.f32.mrf.mxu0
        %v351 = vadd.f32 %v256, %v350
        %v352 = vpop.f32.mrf.mxu0
        %v353 = vpop.f32.mrf.mxu0
        %354 = vdwg.mxu0
        %355 = vst [vmem:[%s239] sm:$0xff] %v349
        %356 = vst [vmem:[%s239 + $0x8] sm:$0xff] %v351
        %s357 = smul.u32 2, %s14
        %p358 = scmp.lt.s32.totalorder %s357, 3
        %s359 = scalar_select %p358, %s357, 3
        %s360 = smul.addr %s359, 8
        %s361 = scalar_lea.vmem %s3, %s360
        // Predicated region
        $region71: #{_lambda_.29} parent=65 // pred_check
          %p362 = pneg %p100
        $region72: #{_lambda_.29} parent=65 // pred_check_branch
          %364 = sbr.rel (%p362) target = $region74
        $region73: #{_lambda_.29} parent=65 // pred_region
          %s365 = smul.u32 2, %s14
        $region74: #{_lambda_.29} parent=65 // pred_fallthru
          _
      $region66: #{_lambda_.29} parent=5 // pred_fallthru
        _
      %p366 = scmp.le.s32.totalorder 2, %s9
      // Predicated region
      $region75: #{_lambda_.29} parent=5 // pred_check
        %p367 = pneg %p366
      $region76: #{_lambda_.29} parent=5 // pred_check_branch
        %369 = sbr.rel (%p367) target = $region78
      $region77: #{_lambda_.29} parent=5 // pred_region
        %s370 = ssub.s32 %s9, 2
        // Predicated region
        $region79: #{_lambda_.29} parent=77 // pred_check
          %p371 = pneg %p106
        $region80: #{_lambda_.29} parent=77 // pred_check_branch
          %373 = sbr.rel (%p371) target = $region82
        $region81: #{_lambda_.29} parent=77 // pred_region
          %s374 = smul.u32 2, %s15
          %p375 = scmp.lt.s32.totalorder %s374, 3
          %s376 = scalar_select %p375, %s374, 3
          %s377 = smul.addr %s376, 8
          %s378 = scalar_lea.vmem %s3, %s377
        $region82: #{_lambda_.29} parent=77 // pred_fallthru
          _
      $region78: #{_lambda_.29} parent=5 // pred_fallthru
        _
    $region6: #{_lambda_.29} parent=1 // loop_footer
      %s13 = sadd.s32 1, %s9
    $region7: #{_lambda_.29} parent=1 // loop_footer_branch
      %8 = sbr.rel target = $region3
    $region8: #{_lambda_.29} parent=1 // loop_exit
      _

// kernel: _lambda_.30
$region0: #{_lambda_.30}
  #allocation0 [shape = 'u32[]', space=smem, size = 0x4, offset = 0x4, fixed_abs, tag = 'smem constant byte address 0x4 - core index']
  #allocation1 [shape = 'u32[144,128]{1,0:T(1,128)}', space=vmem, size = 0x12000, scoped, tag = 'internal scratch']
  #allocation2 [shape = 'f32[1,1]{1,0:T(1,128)S(1)}', space=vmem, size = 0x200, scoped, tag = 'scoped memory for _lambda_.30']
  %s0 = inlined_call_operand.vmem [shape: bf16[8,72], index: 0, kind: input, shape index: {}]
  %s1 = inlined_call_operand.vmem [shape: bf16[72,512], index: 1, kind: input, shape index: {}]
  %s2 = inlined_call_operand.vmem [shape: f32[8,1], index: 2, kind: input, shape index: {}]
  %s3 = inlined_call_operand.vmem [shape: f32[1,8], index: 3, kind: input, shape index: {}]
  %s4 = inlined_call_operand.<no memory space> [shape: f32[1,1], index: 4, kind: input, shape index: {}]
  %s5 = inlined_call_operand.vmem [shape: f32[1,512], index: 5, kind: output, shape index: {}]
  %s6 = sld [smem:[#allocation0]]
  $region91: #{_lambda_.30} parent=0
    _
  %s8 = ssub.s32 1, %s6
  %s9 = scalar_select 0, %s8, %s6
  %v10 = vstv %s4
  %11 = vst [vmem:[#allocation2] sm:$0x1] %v10
  $region1: #{_lambda_.30} parent=0
    #allocation3 [shape = 'u8[73728]{0}', space=vmem, size = 0x12000, scoped, tag = 'input window, operand 1']
    loop: start=0, step=1, limit=4
    $region2: #{_lambda_.30} parent=1 // loop_pre_header
      _
    $region3: #{_lambda_.30} parent=1 // loop_header
      %s13 = sphi 0, %s17
      %p14 = scmp.ge.s32.totalorder %s13, 4
      %s21 = sphi 0, %s21
      %s23 = sphi 0, %s21
      %s24 = sphi 0, %s23
      %s38 = sphi 0, %s24
      %s44 = sphi 0, %s46
      %s47 = sphi 0, %s44
      %s48 = sphi 0, %s47
      %s64 = sphi 0, %s48
      %s68 = sphi 0, %s68
      %s70 = sphi 0, %s68
      %s71 = sphi 0, %s70
      %s85 = sphi 0, %s71
      %s89 = sphi 0, %s89
      %s91 = sphi 0, %s89
      %s92 = sphi 0, %s91
      %s106 = sphi 0, %s92
      %s110 = sphi 0, %s110
      %s112 = sphi 0, %s110
      %s113 = sphi 0, %s112
      %s127 = sphi 0, %s113
      %s133 = sphi 0, %s135
      %s136 = sphi 0, %s133
      %s137 = sphi 0, %s136
      %s153 = sphi 0, %s137
    $region4: #{_lambda_.30} parent=1 // loop_header_branch
      %16 = sbr.rel (%p14) target = $region8
    $region5: #{_lambda_.30} parent=1 // loop_body
      %s18 = ssub.s32 %s13, 1
      %s19 = ssub.s32 %s13, 2
      %s20 = sadd.s32 %s13, 1
      %s22 = sadd.s32 %s21, 1
      %p25 = scmp.eq.s32.totalorder %s13, 1
      %p26 = scmp.ne.s32.totalorder %s21, %s23
      %p27 = scmp.eq.s32.totalorder %s13, 0
      %p28 = por %p26, %p27
      %p29 = scmp.ne.s32.totalorder %s21, %s23
      %p30 = scmp.eq.s32.totalorder %s18, 1
      %p31 = por %p29, %p30
      %p32 = scmp.ne.s32.totalorder %s23, %s24
      %p33 = scmp.eq.s32.totalorder %s18, 0
      %p34 = por %p32, %p33
      %p35 = scmp.ne.s32.totalorder %s23, %s24
      %p36 = scmp.eq.s32.totalorder %s19, 1
      %p37 = por %p35, %p36
      %p39 = scmp.ne.s32.totalorder %s24, %s38
      %p40 = scmp.eq.s32.totalorder %s19, 0
      %p41 = por %p39, %p40
      %s42 = ssub.s32 %s13, %s20
      %p43 = scmp.eq.s32.totalorder %s42, 0
      %s45 = sadd.s32 %s44, 1
      %s46 = scalar_select %p43, %s44, %s45
      %p49 = pneg %p43
      %p50 = scmp.eq.s32.totalorder %s13, 1
      %p51 = por %p49, %p50
      %p52 = scmp.ne.s32.totalorder %s44, %s47
      %p53 = scmp.eq.s32.totalorder %s13, 0
      %p54 = por %p52, %p53
      %p55 = scmp.ne.s32.totalorder %s44, %s47
      %p56 = scmp.eq.s32.totalorder %s18, 1
      %p57 = por %p55, %p56
      %p58 = scmp.ne.s32.totalorder %s47, %s48
      %p59 = scmp.eq.s32.totalorder %s18, 0
      %p60 = por %p58, %p59
      %p61 = scmp.ne.s32.totalorder %s47, %s48
      %p62 = scmp.eq.s32.totalorder %s19, 1
      %p63 = por %p61, %p62
      %p65 = scmp.ne.s32.totalorder %s48, %s64
      %p66 = scmp.eq.s32.totalorder %s19, 0
      %p67 = por %p65, %p66
      %s69 = sadd.s32 %s68, 1
      %p72 = scmp.eq.s32.totalorder %s13, 1
      %p73 = scmp.ne.s32.totalorder %s68, %s70
      %p74 = scmp.eq.s32.totalorder %s13, 0
      %p75 = por %p73, %p74
      %p76 = scmp.ne.s32.totalorder %s68, %s70
      %p77 = scmp.eq.s32.totalorder %s18, 1
      %p78 = por %p76, %p77
      %p79 = scmp.ne.s32.totalorder %s70, %s71
      %p80 = scmp.eq.s32.totalorder %s18, 0
      %p81 = por %p79, %p80
      %p82 = scmp.ne.s32.totalorder %s70, %s71
      %p83 = scmp.eq.s32.totalorder %s19, 1
      %p84 = por %p82, %p83
      %p86 = scmp.ne.s32.totalorder %s71, %s85
      %p87 = scmp.eq.s32.totalorder %s19, 0
      %p88 = por %p86, %p87
      %s90 = sadd.s32 %s89, 1
      %p93 = scmp.eq.s32.totalorder %s13, 1
      %p94 = scmp.ne.s32.totalorder %s89, %s91
      %p95 = scmp.eq.s32.totalorder %s13, 0
      %p96 = por %p94, %p95
      %p97 = scmp.ne.s32.totalorder %s89, %s91
      %p98 = scmp.eq.s32.totalorder %s18, 1
      %p99 = por %p97, %p98
      %p100 = scmp.ne.s32.totalorder %s91, %s92
      %p101 = scmp.eq.s32.totalorder %s18, 0
      %p102 = por %p100, %p101
      %p103 = scmp.ne.s32.totalorder %s91, %s92
      %p104 = scmp.eq.s32.totalorder %s19, 1
      %p105 = por %p103, %p104
      %p107 = scmp.ne.s32.totalorder %s92, %s106
      %p108 = scmp.eq.s32.totalorder %s19, 0
      %p109 = por %p107, %p108
      %s111 = sadd.s32 %s110, 1
      %p114 = scmp.eq.s32.totalorder %s13, 1
      %p115 = scmp.ne.s32.totalorder %s110, %s112
      %p116 = scmp.eq.s32.totalorder %s13, 0
      %p117 = por %p115, %p116
      %p118 = scmp.ne.s32.totalorder %s110, %s112
      %p119 = scmp.eq.s32.totalorder %s18, 1
      %p120 = por %p118, %p119
      %p121 = scmp.ne.s32.totalorder %s112, %s113
      %p122 = scmp.eq.s32.totalorder %s18, 0
      %p123 = por %p121, %p122
      %p124 = scmp.ne.s32.totalorder %s112, %s113
      %p125 = scmp.eq.s32.totalorder %s19, 1
      %p126 = por %p124, %p125
      %p128 = scmp.ne.s32.totalorder %s113, %s127
      %p129 = scmp.eq.s32.totalorder %s19, 0
      %p130 = por %p128, %p129
      %s131 = ssub.s32 %s13, %s20
      %p132 = scmp.eq.s32.totalorder %s131, 0
      %s134 = sadd.s32 %s133, 1
      %s135 = scalar_select %p132, %s133, %s134
      %p138 = pneg %p132
      %p139 = scmp.eq.s32.totalorder %s13, 1
      %p140 = por %p138, %p139
      %p141 = scmp.ne.s32.totalorder %s133, %s136
      %p142 = scmp.eq.s32.totalorder %s13, 0
      %p143 = por %p141, %p142
      %p144 = scmp.ne.s32.totalorder %s133, %s136
      %p145 = scmp.eq.s32.totalorder %s18, 1
      %p146 = por %p144, %p145
      %p147 = scmp.ne.s32.totalorder %s136, %s137
      %p148 = scmp.eq.s32.totalorder %s18, 0
      %p149 = por %p147, %p148
      %p150 = scmp.ne.s32.totalorder %s136, %s137
      %p151 = scmp.eq.s32.totalorder %s19, 1
      %p152 = por %p150, %p151
      %p154 = scmp.ne.s32.totalorder %s137, %s153
      %p155 = scmp.eq.s32.totalorder %s19, 0
      %p156 = por %p154, %p155
      %p157 = scmp.le.s32.totalorder 1, %s13
      %p158 = scmp.lt.s32.totalorder %s13, 3
      %p159 = pnand %p157, %p158
      %p160 = pneg %p159
      // Predicated region
      $region9: #{_lambda_.30} parent=5 // pred_check
        _
      $region10: #{_lambda_.30} parent=5 // pred_check_branch
        %162 = sbr.rel (%p159) target = $region12
      $region11: #{_lambda_.30} parent=5 // pred_region
        %s163 = ssub.s32 %s13, 1
        // Predicated region
        $region13: #{_lambda_.30} parent=11 // pred_check
          %p164 = pneg %p34
        $region14: #{_lambda_.30} parent=11 // pred_check_branch
          %166 = sbr.rel (%p164) target = $region16
        $region15: #{_lambda_.30} parent=11 // pred_region
          _
        $region16: #{_lambda_.30} parent=11 // pred_fallthru
          _
        // Predicated region
        $region17: #{_lambda_.30} parent=11 // pred_check
          %p167 = pneg %p81
        $region18: #{_lambda_.30} parent=11 // pred_check_branch
          %169 = sbr.rel (%p167) target = $region20
        $region19: #{_lambda_.30} parent=11 // pred_region
          _
        $region20: #{_lambda_.30} parent=11 // pred_fallthru
          _
        // Predicated region
        $region21: #{_lambda_.30} parent=11 // pred_check
          %p170 = pneg %p102
        $region22: #{_lambda_.30} parent=11 // pred_check_branch
          %172 = sbr.rel (%p170) target = $region24
        $region23: #{_lambda_.30} parent=11 // pred_region
          _
        $region24: #{_lambda_.30} parent=11 // pred_fallthru
          _
        // Predicated region
        $region25: #{_lambda_.30} parent=11 // pred_check
          %p173 = pneg %p123
        $region26: #{_lambda_.30} parent=11 // pred_check_branch
          %175 = sbr.rel (%p173) target = $region28
        $region27: #{_lambda_.30} parent=11 // pred_region
          _
        $region28: #{_lambda_.30} parent=11 // pred_fallthru
          _
      $region12: #{_lambda_.30} parent=5 // pred_fallthru
        _
      %p176 = scmp.lt.s32.totalorder %s13, 2
      // Predicated region
      $region29: #{_lambda_.30} parent=5 // pred_check
        %p177 = pneg %p176
      $region30: #{_lambda_.30} parent=5 // pred_check_branch
        %179 = sbr.rel (%p177) target = $region32
      $region31: #{_lambda_.30} parent=5 // pred_region
        // Predicated region
        $region33: #{_lambda_.30} parent=31 // pred_check
          %p180 = pneg %p54
        $region34: #{_lambda_.30} parent=31 // pred_check_branch
          %182 = sbr.rel (%p180) target = $region36
        $region35: #{_lambda_.30} parent=31 // pred_region
          %s183 = sand.u32 %s44, 1
          %s184 = sand.u32 %s44, 1
          %s185 = smul.addr %s184, 72
          %s186 = scalar_lea.vmem [#allocation3], %s185
          %s187 = smul.u32 2, %s13
          %s188 = smul.addr %s187, 4
          %s189 = scalar_lea.vmem %s1, %s188
          // Predicated region
          $region37: #{_lambda_.30} parent=35 // pred_check
            _
          $region38: #{_lambda_.30} parent=35 // pred_check_branch
            %191 = sbr.rel (0) target = $region40
          $region39: #{_lambda_.30} parent=35 // pred_region
            // Predicated region
            $region41: #{_lambda_.30} parent=39 // pred_check
              _
            $region42: #{_lambda_.30} parent=39 // pred_check_branch
              %193 = sbr.rel (0) target = $region44
            $region43: #{_lambda_.30} parent=39 // pred_region
              // Predicated region
              $region56: #{_lambda_.30} parent=43 // pred_check
                _
              $region57: #{_lambda_.30} parent=43 // pred_check_branch
                %225 = sbr.rel (0) target = $region59
              $region58: #{_lambda_.30} parent=43 // pred_region
                loop: start=0, step=1, limit=1
                $region60: #{_lambda_.30} parent=58 // loop_pre_header
                  _
                $region61: #{_lambda_.30} parent=58 // loop_header
                  %s227 = sphi 0, %s231
                  %p228 = scmp.ge.s32.totalorder %s227, 1
                  %s232 = sphi %s189, %s189
                  %s233 = sphi %s186, %s186
                $region62: #{_lambda_.30} parent=58 // loop_header_branch
                  %230 = sbr.rel (%p228) target = $region66
                $region63: #{_lambda_.30} parent=58 // loop_body
                  %v234 = vld [vmem:[%s232] sm:$0xff]
                  %235 = vst [vmem:[%s233] sm:$0xff] %v234
                  %v236 = vld [vmem:[%s232 + $0x10] sm:$0xff]
                  %237 = vst [vmem:[%s233 + $0x8] sm:$0xff] %v236
                  %v238 = vld [vmem:[%s232 + $0x20] sm:$0xff]
                  %239 = vst [vmem:[%s233 + $0x10] sm:$0xff] %v238
                  %v240 = vld [vmem:[%s232 + $0x30] sm:$0xff]
                  %241 = vst [vmem:[%s233 + $0x18] sm:$0xff] %v240
                  %v242 = vld [vmem:[%s232 + $0x40] sm:$0xff]
                  %243 = vst [vmem:[%s233 + $0x20] sm:$0xff] %v242
                  %v244 = vld [vmem:[%s232 + $0x50] sm:$0xff]
                  %245 = vst [vmem:[%s233 + $0x28] sm:$0xff] %v244
                  %v246 = vld [vmem:[%s232 + $0x60] sm:$0xff]
                  %247 = vst [vmem:[%s233 + $0x30] sm:$0xff] %v246
                  %v248 = vld [vmem:[%s232 + $0x70] sm:$0xff]
                  %249 = vst [vmem:[%s233 + $0x38] sm:$0xff] %v248
                  %v250 = vld [vmem:[%s232 + $0x80] sm:$0xff]
                  %251 = vst [vmem:[%s233 + $0x40] sm:$0xff] %v250
                $region64: #{_lambda_.30} parent=58 // loop_footer
                  %s231 = sadd.s32 1, %s227
                $region65: #{_lambda_.30} parent=58 // loop_footer_branch
                  %226 = sbr.rel target = $region61
                $region66: #{_lambda_.30} parent=58 // loop_exit
                  _
              $region59: #{_lambda_.30} parent=43 // pred_fallthru
                _
              // Predicated region
              $region67: #{_lambda_.30} parent=43 // pred_check
                _
              $region68: #{_lambda_.30} parent=43 // pred_check_branch
                %253 = sbr.rel target = $region70
              $region69: #{_lambda_.30} parent=43 // pred_region
                _
              $region70: #{_lambda_.30} parent=43 // pred_fallthru
                _
            $region44: #{_lambda_.30} parent=39 // pred_fallthru
              _
            // Predicated region
            $region45: #{_lambda_.30} parent=39 // pred_check
              _
            $region46: #{_lambda_.30} parent=39 // pred_check_branch
              %195 = sbr.rel target = $region48
            $region47: #{_lambda_.30} parent=39 // pred_region
              %s197 = ssub.s32 256, 1
              loop: start=0, step=1, limit=1
              $region49: #{_lambda_.30} parent=47 // loop_pre_header
                _
              $region50: #{_lambda_.30} parent=47 // loop_header
                %s199 = sphi 0, %s203
                %p200 = scmp.ge.s32.totalorder %s199, 1
                %s204 = sphi %s189, %s189
                %s205 = sphi %s186, %s186
              $region51: #{_lambda_.30} parent=47 // loop_header_branch
                %202 = sbr.rel (%p200) target = $region55
              $region52: #{_lambda_.30} parent=47 // loop_body
                %v206 = vld [vmem:[%s204] sm:%s197]
                %207 = vst [vmem:[%s205] sm:%s197] %v206
                %v208 = vld [vmem:[%s204 + $0x10] sm:%s197]
                %209 = vst [vmem:[%s205 + $0x8] sm:%s197] %v208
                %v210 = vld [vmem:[%s204 + $0x20] sm:%s197]
                %211 = vst [vmem:[%s205 + $0x10] sm:%s197] %v210
                %v212 = vld [vmem:[%s204 + $0x30] sm:%s197]
                %213 = vst [vmem:[%s205 + $0x18] sm:%s197] %v212
                %v214 = vld [vmem:[%s204 + $0x40] sm:%s197]
                %215 = vst [vmem:[%s205 + $0x20] sm:%s197] %v214
                %v216 = vld [vmem:[%s204 + $0x50] sm:%s197]
                %217 = vst [vmem:[%s205 + $0x28] sm:%s197] %v216
                %v218 = vld [vmem:[%s204 + $0x60] sm:%s197]
                %219 = vst [vmem:[%s205 + $0x30] sm:%s197] %v218
                %v220 = vld [vmem:[%s204 + $0x70] sm:%s197]
                %221 = vst [vmem:[%s205 + $0x38] sm:%s197] %v220
                %v222 = vld [vmem:[%s204 + $0x80] sm:%s197]
                %223 = vst [vmem:[%s205 + $0x40] sm:%s197] %v222
              $region53: #{_lambda_.30} parent=47 // loop_footer
                %s203 = sadd.s32 1, %s199
              $region54: #{_lambda_.30} parent=47 // loop_footer_branch
                %198 = sbr.rel target = $region50
              $region55: #{_lambda_.30} parent=47 // loop_exit
                _
            $region48: #{_lambda_.30} parent=39 // pred_fallthru
              _
          $region40: #{_lambda_.30} parent=35 // pred_fallthru
            _
          %254 = vnop
        $region36: #{_lambda_.30} parent=31 // pred_fallthru
          _
      $region32: #{_lambda_.30} parent=5 // pred_fallthru
        _
      %p255 = scmp.le.s32.totalorder 1, %s13
      %p256 = scmp.lt.s32.totalorder %s13, 3
      %p257 = pnand %p255, %p256
      %p258 = pneg %p257
      // Predicated region
      $region71: #{_lambda_.30} parent=5 // pred_check
        _
      $region72: #{_lambda_.30} parent=5 // pred_check_branch
        %260 = sbr.rel (%p257) target = $region74
      $region73: #{_lambda_.30} parent=5 // pred_region
        %s261 = ssub.s32 %s13, 1
        %s262 = sand.u32 %s47, 1
        %s263 = sand.u32 %s47, 1
        %s264 = smul.addr %s263, 72
        %s265 = scalar_lea.vmem [#allocation3], %s264
        // Predicated region
        $region75: #{_lambda_.30} parent=73 // pred_check
          %p266 = pneg %p60
        $region76: #{_lambda_.30} parent=73 // pred_check_branch
          %268 = sbr.rel (%p266) target = $region78
        $region77: #{_lambda_.30} parent=73 // pred_region
          _
        $region78: #{_lambda_.30} parent=73 // pred_fallthru
          _
        %p269 = pneg %p34
        %p270 = pneg %p31
        %s271 = sand.u32 %s47, 1
        %s272 = sand.u32 %s47, 1
        %s273 = smul.addr %s272, 72
        %s274 = scalar_lea.vmem [#allocation3], %s273
        %p275 = pneg %p60
        %p276 = pneg %p57
        %p277 = pneg %p81
        %p278 = pneg %p78
        %p279 = pneg %p102
        %p280 = pneg %p99
        %p281 = pneg %p123
        %p282 = pneg %p120
        %p283 = pneg %p149
        %p284 = pneg %p146
        %s285 = smul.u32 2, %s18
        %p286 = scmp.lt.s32.totalorder %s285, 3
        %s287 = scalar_select %p286, %s285, 3
        %s288 = scalar_lea.vmem %s5, %s287
        %s289 = smul.u32 2, %s18
        %s290 = smul.u32 2, %s18
        %p291 = scmp.lt.s32.totalorder %s290, 3
        %s292 = scalar_select %p291, %s290, 3
        %s293 = scalar_lea.vmem %s5, %s292
        %s294 = smul.u32 2, %s18
        %v296 = vld [vmem:[%s0] sm:$0xf]
        %v297 = vld [vmem:[%s265] sm:$0xff]
        %v298 = vld [vmem:[%s265 + $0x8] sm:$0xff]
        %v299 = vld [vmem:[%s265 + $0x10] sm:$0xff]
        %v300 = vld [vmem:[%s265 + $0x18] sm:$0xff]
        %v301 = vld [vmem:[%s265 + $0x20] sm:$0xff]
        %v302 = vld [vmem:[%s265 + $0x28] sm:$0xff]
        %v303 = vld [vmem:[%s265 + $0x30] sm:$0xff]
        %v304 = vld [vmem:[%s265 + $0x38] sm:$0xff]
        %v305 = vld [vmem:[%s265 + $0x40] sm:$0xff]
        %v306 = vld [vmem:[%s2] sm:$0xff]
        %308 = vset.pattern.permute.xlu0 0
        %309 = vperm.xlu0 %308, %v306
        %v310 = vpop.permute.xlu0 %309
        %v321 = vunpack.c.l.b16 %v297
        %v322 = vunpack.c.h.b16 %v297
        %v323 = vunpack.c.l.b16 %v298
        %v324 = vunpack.c.h.b16 %v298
        %v325 = vunpack.c.l.b16 %v299
        %v326 = vunpack.c.h.b16 %v299
        %v327 = vunpack.c.l.b16 %v300
        %v328 = vunpack.c.h.b16 %v300
        %v329 = vunpack.c.l.b16 %v301
        %v330 = vunpack.c.h.b16 %v301
        %v331 = vunpack.c.l.b16 %v302
        %v332 = vunpack.c.h.b16 %v302
        %v333 = vunpack.c.l.b16 %v303
        %v334 = vunpack.c.h.b16 %v303
        %v335 = vunpack.c.l.b16 %v304
        %v336 = vunpack.c.h.b16 %v304
        %v337 = vunpack.c.l.b16 %v305
        %v338 = vunpack.c.h.b16 %v305
        %v339 = vpack.c.b16 %v323, %v321
        %v340 = vpack.c.b16 %v324, %v322
        %v341 = vpack.c.b16 %v327, %v325
        %v342 = vpack.c.b16 %v328, %v326
        %v343 = vpack.c.b16 %v331, %v329
        %v344 = vpack.c.b16 %v332, %v330
        %v345 = vpack.c.b16 %v335, %v333
        %v346 = vpack.c.b16 %v336, %v334
        %v347 = vpack.c.b16 %v337, %v337
        %v348 = vpack.c.b16 %v338, %v338
        %vm357 = vcmask 588800
        %v359 = vsel %vm357, %v296, 0
        %vm361 = vcmask 1043456
        %v363 = vsel %vm361, %v347, 0
        %v366 = vsel %vm361, %v348, 0
        %368 = vmatprep.subr.bf16.mxu0 0
        %369 = vmatpush1.bf16.msra.mxu0 0
        %370 = vmatprep.subr.bf16.mxu0 0
        %371 = vmatpush1.bf16.msra.mxu0 0
        %372 = vmatprep.subr.bf16.mxu0 0
        %373 = vmatpush1.bf16.msra.mxu0 0
        %374 = vmatprep.subr.bf16.mxu0 %v366
        %375 = vmatpush1.bf16.msra.mxu0 %v363
        %376 = vmatprep.subr.bf16.mxu0 %v346
        %377 = vmatpush1.bf16.msra.mxu0 %v345
        %378 = vmatprep.subr.bf16.mxu0 %v344
        %379 = vmatpush1.bf16.msra.mxu0 %v343
        %380 = vmatprep.subr.bf16.mxu0 %v342
        %381 = vmatpush1.bf16.msra.mxu0 %v341
        %382 = vmatprep.subr.bf16.mxu0 %v340
        %383 = vmatpush1.bf16.msra.mxu0 %v339
        %384 = vmatprep.subr.bf16.mxu0 0
        %385 = vmatpush2.bf16.msra.mxu0 0
        %386 = vmatprep.subr.bf16.mxu0 0
        %387 = vmatpush2.bf16.msra.mxu0 0
        %388 = vmatprep.subr.bf16.mxu0 0
        %389 = vmatpush2.bf16.msra.mxu0 0
        %390 = vmatprep.subr.bf16.mxu0 0
        %391 = vmatpush2.bf16.msra.mxu0 0
        %392 = vmatprep.subr.bf16.mxu0 0
        %393 = vmatpush2.bf16.msra.mxu0 0
        %394 = vmatprep.subr.bf16.mxu0 0
        %395 = vmatpush2.bf16.msra.mxu0 0
        %396 = vmatprep.subr.bf16.mxu0 0
        %397 = vmatpush2.bf16.msra.mxu0 0
        %398 = vmatprep.subr.bf16.mxu0 0
        %399 = vmatpush2.bf16.msra.mxu0 0
        %400 = vmatprep.mubr.bf16.mxu0 0
        %401 = vmatmul.mubr.bf16.gmra.mxu0 %v359
        %v402 = vpop.f32.mrf.mxu0
        %v403 = vadd.f32 %v310, %v402
        %v404 = vpop.f32.mrf.mxu0
        %v405 = vadd.f32 %v310, %v404
        %v406 = vpop.f32.mrf.mxu0
        %v407 = vpop.f32.mrf.mxu0
        %408 = vdwg.mxu0
        %v409 = vld [vmem:[%s3] sm:$0x1]
        %v410 = vld [vmem:[#allocation2] sm:$0x1]
        %412 = vset.pattern.permute.xlu0 0
        %413 = vperm.xlu0 %412, %v410
        %v414 = vpop.permute.xlu0 %413
        %v416 = vlaneseq
        %v417 = vshrl.u32 %v416, 7
        %v418 = vsub.s32 0, %v417
        %v419 = vrot.slane %v414, %v418
        %vm420 = vcmask 64512
        %v422 = vsel %vm420, %v409, 0
        %424 = vmatprep.subr.mxu0 0.0
        %425 = vmatpush1.msra.mxu0 0.0
        %426 = vmatprep.subr.mxu0 0.0
        %427 = vmatpush1.msra.mxu0 0.0
        %428 = vmatprep.subr.mxu0 0.0
        %429 = vmatpush1.msra.mxu0 0.0
        %430 = vmatprep.subr.mxu0 0.0
        %431 = vmatpush1.msra.mxu0 0.0
        %432 = vmatprep.subr.mxu0 0.0
        %433 = vmatpush1.msra.mxu0 0.0
        %434 = vmatprep.subr.mxu0 0.0
        %435 = vmatpush1.msra.mxu0 0.0
        %436 = vmatprep.subr.mxu0 0.0
        %437 = vmatpush1.msra.mxu0 0.0
        %438 = vmatprep.subr.mxu0 0.0
        %439 = vmatpush1.msra.mxu0 0.0
        %440 = vmatprep.subr.mxu0 0.0
        %441 = vmatpush1.msra.mxu0 0.0
        %442 = vmatprep.subr.mxu0 0.0
        %443 = vmatpush1.msra.mxu0 0.0
        %444 = vmatprep.subr.mxu0 0.0
        %445 = vmatpush1.msra.mxu0 0.0
        %446 = vmatprep.subr.mxu0 0.0
        %447 = vmatpush1.msra.mxu0 0.0
        %448 = vmatprep.subr.mxu0 0.0
        %449 = vmatpush1.msra.mxu0 0.0
        %450 = vmatprep.subr.mxu0 0.0
        %451 = vmatpush1.msra.mxu0 0.0
        %452 = vmatprep.subr.mxu0 0.0
        %453 = vmatpush1.msra.mxu0 0.0
        %454 = vmatprep.subr.mxu0 %v405
        %455 = vmatpush1.msra.mxu0 %v403
        %456 = vmatprep.subr.mxu0 0.0
        %457 = vmatpush2.msra.mxu0 0.0
        %458 = vmatprep.subr.mxu0 0.0
        %459 = vmatpush2.msra.mxu0 0.0
        %460 = vmatprep.subr.mxu0 0.0
        %461 = vmatpush2.msra.mxu0 0.0
        %462 = vmatprep.subr.mxu0 0.0
        %463 = vmatpush2.msra.mxu0 0.0
        %464 = vmatprep.subr.mxu0 0.0
        %465 = vmatpush2.msra.mxu0 0.0
        %466 = vmatprep.subr.mxu0 0.0
        %467 = vmatpush2.msra.mxu0 0.0
        %468 = vmatprep.subr.mxu0 0.0
        %469 = vmatpush2.msra.mxu0 0.0
        %470 = vmatprep.subr.mxu0 0.0
        %471 = vmatpush2.msra.mxu0 0.0
        %472 = vmatprep.subr.mxu0 0.0
        %473 = vmatpush2.msra.mxu0 0.0
        %474 = vmatprep.subr.mxu0 0.0
        %475 = vmatpush2.msra.mxu0 0.0
        %476 = vmatprep.subr.mxu0 0.0
        %477 = vmatpush2.msra.mxu0 0.0
        %478 = vmatprep.subr.mxu0 0.0
        %479 = vmatpush2.msra.mxu0 0.0
        %480 = vmatprep.subr.mxu0 0.0
        %481 = vmatpush2.msra.mxu0 0.0
        %482 = vmatprep.subr.mxu0 0.0
        %483 = vmatpush2.msra.mxu0 0.0
        %484 = vmatprep.subr.mxu0 0.0
        %485 = vmatpush2.msra.mxu0 0.0
        %486 = vmatprep.subr.mxu0 0.0
        %487 = vmatpush2.msra.mxu0 0.0
        %488 = vmatprep.mubr.f32.mxu0 0.0
        %489 = vmatmul.mubr.f32.gmra.mxu0 %v422
        %v490 = vpop.f32.mrf.mxu0
        %v491 = vadd.f32 %v419, %v490
        %v492 = vpop.f32.mrf.mxu0
        %v493 = vadd.f32 %v419, %v492
        %494 = vdwg.mxu0
        %v497 = vcombine.low %v491, %v493
        %v499 = vunpack.c.l.s4 1966171168
        %v500 = vunpack.c.0.s8 %v499
        %v501 = vlaneseq
        %v502 = vshrl.u32 %v501, 7
        %v503 = vsub.s32 %v500, %v502
        %v504 = vrot.slane %v497, %v503
        %v506 = vunpack.c.l.s4 1966171168
        %v507 = vunpack.c.0.s8 %v506
        %v508 = vlaneseq
        %v509 = vshrl.u32 %v508, 7
        %v510 = vsub.s32 %v507, %v509
        %v511 = vrot.slane %v504, %v510
        %v513 = vlaneseq
        %vm514 = vcmp.ge.s32.totalorder %v513, 0
        %vm515 = vcmp.lt.s32.totalorder %v513, 256
        %vm516 = vmand %vm514, %vm515
        %517 = vst.msk [vmem:[%s293] sm:$0x3] %vm516, %v511
        %s518 = smul.u32 2, %s18
        %p519 = scmp.lt.s32.totalorder %s518, 3
        %s520 = scalar_select %p519, %s518, 3
        %s521 = scalar_lea.vmem %s5, %s520
        // Predicated region
        $region79: #{_lambda_.30} parent=73 // pred_check
          %p522 = pneg %p146
        $region80: #{_lambda_.30} parent=73 // pred_check_branch
          %524 = sbr.rel (%p522) target = $region82
        $region81: #{_lambda_.30} parent=73 // pred_region
          %s525 = smul.u32 2, %s18
        $region82: #{_lambda_.30} parent=73 // pred_fallthru
          _
      $region74: #{_lambda_.30} parent=5 // pred_fallthru
        _
      %p526 = scmp.le.s32.totalorder 2, %s13
      // Predicated region
      $region83: #{_lambda_.30} parent=5 // pred_check
        %p527 = pneg %p526
      $region84: #{_lambda_.30} parent=5 // pred_check_branch
        %529 = sbr.rel (%p527) target = $region86
      $region85: #{_lambda_.30} parent=5 // pred_region
        %s530 = ssub.s32 %s13, 2
        // Predicated region
        $region87: #{_lambda_.30} parent=85 // pred_check
          %p531 = pneg %p152
        $region88: #{_lambda_.30} parent=85 // pred_check_branch
          %533 = sbr.rel (%p531) target = $region90
        $region89: #{_lambda_.30} parent=85 // pred_region
          %s534 = smul.u32 2, %s19
          %p535 = scmp.lt.s32.totalorder %s534, 3
          %s536 = scalar_select %p535, %s534, 3
          %s537 = scalar_lea.vmem %s5, %s536
        $region90: #{_lambda_.30} parent=85 // pred_fallthru
          _
      $region86: #{_lambda_.30} parent=5 // pred_fallthru
        _
    $region6: #{_lambda_.30} parent=1 // loop_footer
      %s17 = sadd.s32 1, %s13
    $region7: #{_lambda_.30} parent=1 // loop_footer_branch
      %12 = sbr.rel target = $region3
    $region8: #{_lambda_.30} parent=1 // loop_exit
      _

</llo_original>
